<compile_context>
chip_gen: v5e
topology: v5e:2x2
jax: 0.10.0
libtpu: 0.0.40
codegen_flags: <defaults>
</compile_context>

<pallas_src>
import jax
import jax.numpy as jnp
from jax import lax
from jax.experimental import pallas as pl
from jax.experimental.pallas import tpu as pltpu

KSIZE = 7
PAD = 3
OFF = 16          # sublane-aligned column offset of the tile interior in scratch
EPS = 1e-6


def _round_up(x, m):
    return (x + m - 1) // m * m


def _default_conv_dtype():
    """bf16 depthwise conv on chips with bf16 VALUs (v6e/v7x); f32 on v5e."""
    try:
        kind = jax.devices()[0].device_kind.lower()
    except Exception:
        kind = ""
    if "v5 lite" in kind or "v5lite" in kind or "v5e" in kind:
        return jnp.float32
    return jnp.bfloat16


def _pick_mlp_rows(tile_h, w, target_rows=512):
    """Largest divisor of tile_h whose row-block has <= target_rows pixels."""
    best = 1
    for d in range(1, tile_h + 1):
        if tile_h % d == 0 and d * w <= target_rows:
            best = d
    return best


def _auto_tile_h(h, w, cp, c4p, conv_bytes, mm_bytes, budget_bytes):
    """Largest tile_h (multiple of PAD) whose working set fits the budget."""
    def est(th):
        tile_f32 = th * w * cp * 4
        io = 2 * 2 * tile_f32                                  # dbl-buffered in/out
        halo = 2 * 2 * PAD * w * cp * 4
        scratch = (th + 2 * PAD) * (OFF + w + PAD) * cp * conv_bytes
        weights = 2 * 2 * cp * c4p * mm_bytes + 4 * (cp + c4p) * 4
        tmps = 4 * tile_f32                                    # conv partials / d / xn
        mlp = 2 * 512 * c4p * (4 + mm_bytes)                   # chunked intermediates
        return io + halo + scratch + weights + tmps + mlp

    th = _round_up(h, PAD)
    while th > PAD and est(th) > budget_bytes:
        th -= PAD
    return max(th, PAD)


# ----------------------------------------------------------------------------
# Kernel body
# ----------------------------------------------------------------------------
def _kernel_body(xc_ref, xhp_ref, xhn_ref, dww_ref, dwb_ref,
                 w1_ref, b1_ref, w2_ref, b2_ref, o_ref, pad_ref, xn_ref,
                 *, c_real, mm_dtype, mlp_rows, n_chunks, has_halo):
    f32 = jnp.float32
    _, th, w, cp = o_ref.shape
    conv_dtype = pad_ref.dtype
    h_idx = pl.program_id(1)
    nt = pl.num_programs(1)

    # ---- 1) zero-padded (halo'd) input tile in VMEM scratch -----------------
    # Zero only the border strips the conv actually reads (interior is
    # overwritten right away -> no full-tile zero store).
    zcol = jnp.zeros((th + 2 * PAD, PAD, cp), conv_dtype)
    pad_ref[:, OFF - PAD:OFF, :] = zcol                     # left zero columns
    pad_ref[:, OFF + w:OFF + w + PAD, :] = zcol             # right zero columns
    # Interior copy: column offset OFF is sublane-aligned for f32 and bf16.
    pad_ref[PAD:PAD + th, OFF:OFF + w, :] = xc_ref[0].astype(conv_dtype)

    zrow = jnp.zeros((PAD, w, cp), conv_dtype)
    if has_halo:
        @pl.when(h_idx == 0)
        def _():
            pad_ref[0:PAD, OFF:OFF + w, :] = zrow

        @pl.when(h_idx > 0)
        def _():
            pad_ref[0:PAD, OFF:OFF + w, :] = xhp_ref[0].astype(conv_dtype)

        @pl.when(h_idx + 1 == nt)
        def _():
            pad_ref[PAD + th:PAD + th + PAD, OFF:OFF + w, :] = zrow

        @pl.when(h_idx + 1 < nt)
        def _():
            pad_ref[PAD + th:PAD + th + PAD, OFF:OFF + w, :] = \
                xhn_ref[0].astype(conv_dtype)
    else:
        pad_ref[0:PAD, OFF:OFF + w, :] = zrow
        pad_ref[PAD + th:PAD + th + PAD, OFF:OFF + w, :] = zrow

    # ---- 2) depthwise 7x7 conv ----------------------------------------------
    # 7 sublane-shifted column slices (one per kw); row offsets are free
    # leading-dim slices.  Per-kw 7-term sum in conv dtype (bf16 on v6e/v7x),
    # cross-kw accumulation in f32 using 2 partial accumulators.
    dww = dww_ref[...]                                      # (7, 7, cp) conv_dtype
    base = OFF - PAD
    acc0 = None
    acc1 = None
    for kw in range(KSIZE):
        xw = pad_ref[:, base + kw:base + kw + w, :]         # (th+6, w, cp)
        p = xw[0:th] * dww[0, kw]
        for kh in range(1, KSIZE):
            p = p + xw[kh:kh + th] * dww[kh, kw]
        pf = p.astype(f32)
        if kw % 2 == 0:
            acc0 = pf if acc0 is None else acc0 + pf
        else:
            acc1 = pf if acc1 is None else acc1 + pf
    acc = acc0 + acc1 + dwb_ref[0]                          # (th, w, cp) f32

    # ---- 3) LayerNorm over real channels (affine folded into w1/b1) ---------
    # Padded channel lanes of acc are exactly 0, so no mask is needed:
    # subtract the (cp - c_real) * u^2 contribution of the padded lanes.
    inv_c = 1.0 / c_real
    u = jnp.sum(acc, axis=-1, keepdims=True) * inv_c
    d = acc - u
    ss = jnp.sum(d * d, axis=-1, keepdims=True)
    if cp > c_real:
        ss = ss - (cp - c_real) * (u * u)
    xn = d * jax.lax.rsqrt(ss * inv_c + EPS)                # padded lanes -> killed by w1

    # ---- 4) pointwise MLP (chunked over rows) + residual ---------------------
    # NOTE: tanh-GELU (EUP) per perf review; differs from erf-GELU by <~3e-3.
    def mlp_chunk(xnc, r0, rc):
        xf = xnc.reshape(rc * w, cp).astype(mm_dtype)
        h1 = jnp.dot(xf, w1_ref[...], preferred_element_type=f32) + b1_ref[0]
        h1 = jax.nn.gelu(h1, approximate=True)
        h2 = jnp.dot(h1.astype(mm_dtype), w2_ref[...],
                     preferred_element_type=f32) + b2_ref[0]
        res = xc_ref[0, pl.ds(r0, rc)]                      # (rc, w, cp) f32
        o_ref[0, pl.ds(r0, rc)] = (res + h2.reshape(rc, w, cp)).astype(o_ref.dtype)

    if n_chunks <= 1:
        mlp_chunk(xn, 0, th)
    else:
        xn_ref[...] = xn                                    # bound xn's live range

        def body(i, carry):
            r0 = i * mlp_rows
            mlp_chunk(xn_ref[pl.ds(r0, mlp_rows)], r0, mlp_rows)
            return carry

        lax.fori_loop(0, n_chunks, body, 0)


def _make_kernel(has_halo, has_chunks, **const):
    def kern(*refs):
        refs = list(refs)
        xc = refs.pop(0)
        xhp = refs.pop(0) if has_halo else None
        xhn = refs.pop(0) if has_halo else None
        dww, dwb, w1, b1, w2, b2, o, pad = refs[:8]
        xn_scr = refs[8] if has_chunks else None
        _kernel_body(xc, xhp, xhn, dww, dwb, w1, b1, w2, b2, o, pad, xn_scr,
                     has_halo=has_halo, **const)
    return kern


# ----------------------------------------------------------------------------
# Wrapper
# ----------------------------------------------------------------------------
def cxblock_pallas(x, params, *, tile_h=None, mlp_rows=None,
                   mm_dtype=jnp.bfloat16, conv_dtype=None,
                   vmem_limit_bytes=48 * 1024 * 1024, channels_last=False):
    dw_w, dw_b, ln_w, ln_b, w1, b1, w2, b2, gate = params
    f32 = jnp.float32
    if conv_dtype is None:
        conv_dtype = _default_conv_dtype()

    if channels_last:
        B, H, W, C = x.shape
    else:
        B, C, H, W = x.shape
    C4 = 4 * C
    Cp = _round_up(C, 128)
    C4p = _round_up(C4, 128)

    # ---- spatial tile height (multiple of PAD); whole-H tile when it fits ---
    if tile_h is None:
        tile_h = _auto_tile_h(H, W, Cp, C4p,
                              jnp.dtype(conv_dtype).itemsize,
                              jnp.dtype(mm_dtype).itemsize,
                              int(0.6 * vmem_limit_bytes))
    assert tile_h % PAD == 0 and tile_h > 0
    Hp = _round_up(H, tile_h)
    nt = Hp // tile_h
    has_halo = nt > 1

    # ---- rows per MLP chunk (bounds the 4C-wide intermediate) ---------------
    if mlp_rows is None:
        mlp_rows = _pick_mlp_rows(tile_h, W)
    else:
        mlp_rows = max(d for d in range(1, mlp_rows + 1) if tile_h % d == 0)
    n_chunks = tile_h // mlp_rows

    # ---- fold LayerNorm affine + layer-scale gate into the MLP weights ------
    w1f = (ln_w[:, None] * w1).astype(f32)                  # (C, 4C)
    b1f = (ln_b @ w1 + b1).astype(f32)                      # (4C,)
    w2f = (w2 * gate[None, :]).astype(f32)                  # (4C, C)
    b2f = (b2 * gate).astype(f32)                           # (C,)

    def padc(a, axis, n):
        if n == a.shape[axis]:
            return a
        pads = [(0, 0)] * a.ndim
        pads[axis] = (0, n - a.shape[axis])
        return jnp.pad(a, pads)

    dww_p = padc(dw_w.astype(conv_dtype), 2, Cp)                     # (7,7,Cp)
    dwb_p = padc(dw_b.astype(f32), 0, Cp).reshape(1, Cp)
    w1_p = padc(padc(w1f, 0, Cp), 1, C4p).astype(mm_dtype)           # (Cp,C4p)
    b1_p = padc(b1f, 0, C4p).reshape(1, C4p)
    w2_p = padc(padc(w2f, 0, C4p), 1, Cp).astype(mm_dtype)           # (C4p,Cp)
    b2_p = padc(b2f, 0, Cp).reshape(1, Cp)

    # ---- activations: NHWC f32; pad H / C in HBM only when actually needed --
    xa = x if channels_last else jnp.transpose(x, (0, 2, 3, 1))
    xa = xa.astype(f32)
    if Hp != H or Cp != C:
        xa = jnp.pad(xa, ((0, 0), (0, Hp - H), (0, 0), (0, Cp - C)))

    hblk = tile_h // PAD
    n_hblk = Hp // PAD

    in_specs = [pl.BlockSpec((1, tile_h, W, Cp), lambda b, h: (b, h, 0, 0))]
    args = [xa]
    if has_halo:
        in_specs += [
            # 3-row halo above (clamped at top border; gated in kernel)
            pl.BlockSpec((1, PAD, W, Cp),
                         lambda b, h: (b, jnp.maximum(h * hblk - 1, 0), 0, 0)),
            # 3-row halo below (clamped at bottom border; gated in kernel)
            pl.BlockSpec((1, PAD, W, Cp),
                         lambda b, h: (b, jnp.minimum((h + 1) * hblk,
                                                      n_hblk - 1), 0, 0)),
        ]
        args += [xa, xa]
    in_specs += [
        pl.BlockSpec((KSIZE, KSIZE, Cp), lambda b, h: (0, 0, 0)),
        pl.BlockSpec((1, Cp), lambda b, h: (0, 0)),
        pl.BlockSpec((Cp, C4p), lambda b, h: (0, 0)),
        pl.BlockSpec((1, C4p), lambda b, h: (0, 0)),
        pl.BlockSpec((C4p, Cp), lambda b, h: (0, 0)),
        pl.BlockSpec((1, Cp), lambda b, h: (0, 0)),
    ]
    args += [dww_p, dwb_p, w1_p, b1_p, w2_p, b2_p]

    scratch = [pltpu.VMEM((tile_h + 2 * PAD, OFF + W + PAD, Cp), conv_dtype)]
    if n_chunks > 1:
        scratch.append(pltpu.VMEM((tile_h, W, Cp), f32))

    kernel = _make_kernel(
        has_halo, n_chunks > 1,
        c_real=C, mm_dtype=mm_dtype, mlp_rows=mlp_rows, n_chunks=n_chunks)

    out = pl.pallas_call(
        kernel,
        out_shape=jax.ShapeDtypeStruct((B, Hp, W, Cp), f32),
        grid_spec=pltpu.PrefetchScalarGridSpec(
            num_scalar_prefetch=0,
            grid=(B, nt),
            in_specs=in_specs,
            out_specs=pl.BlockSpec((1, tile_h, W, Cp), lambda b, h: (b, h, 0, 0)),
            scratch_shapes=scratch),
        compiler_params=pltpu.CompilerParams(
            dimension_semantics=("parallel", "parallel"),
            vmem_limit_bytes=vmem_limit_bytes),
    )(*args)

    out = out[:, :H, :, :C]
    return out if channels_last else jnp.transpose(out, (0, 3, 1, 2))


# ----------------------------------------------------------------------------
# Pure-JAX reference (original unfused math, f32), for verification.
# ----------------------------------------------------------------------------
def cxblock_ref(x_nchw, params, *, approx_gelu=False):
    dw_w, dw_b, ln_w, ln_b, w1, b1, w2, b2, gate = params
    x = jnp.transpose(x_nchw, (0, 2, 3, 1)).astype(jnp.float32)
    B, H, W, C = x.shape
    xpad = jnp.pad(x, ((0, 0), (PAD, PAD), (PAD, PAD), (0, 0)))
    acc = jnp.zeros_like(x)
    for kh in range(KSIZE):
        for kw in range(KSIZE):
            acc = acc + xpad[:, kh:kh + H, kw:kw + W, :] * dw_w[kh, kw, :]
    acc = acc + dw_b
    u = acc.mean(-1, keepdims=True)
    d = acc - u
    s = (d * d).mean(-1, keepdims=True)
    xn = d / jnp.sqrt(s + EPS)
    xn = ln_w * xn + ln_b
    h1 = jax.nn.gelu(xn @ w1 + b1, approximate=approx_gelu)
    h2 = h1 @ w2 + b2
    y = x + gate * h2
    return jnp.transpose(y, (0, 3, 1, 2))


def make_params(key, dim):
    ks = jax.random.split(key, 9)
    dw_w = 0.1 * jax.random.normal(ks[0], (KSIZE, KSIZE, dim), jnp.float32)
    dw_b = 0.1 * jax.random.normal(ks[1], (dim,), jnp.float32)
    ln_w = 1.0 + 0.1 * jax.random.normal(ks[2], (dim,), jnp.float32)
    ln_b = 0.1 * jax.random.normal(ks[3], (dim,), jnp.float32)
    w1 = 0.1 * jax.random.normal(ks[4], (dim, 4 * dim), jnp.float32)   # (in, out)
    b1 = 0.1 * jax.random.normal(ks[5], (4 * dim,), jnp.float32)
    w2 = 0.1 * jax.random.normal(ks[6], (4 * dim, dim), jnp.float32)   # (in, out)
    b2 = 0.1 * jax.random.normal(ks[7], (dim,), jnp.float32)
    gate = 0.5 + 0.1 * jax.random.normal(ks[8], (dim,), jnp.float32)
    return (dw_w, dw_b, ln_w, ln_b, w1, b1, w2, b2, gate)


if __name__ == "__main__":
    B, C, H, W = 2, 8, 16, 16
    key = jax.random.PRNGKey(0)
    kx, kp = jax.random.split(key)
    x = jax.random.normal(kx, (B, C, H, W), jnp.float32)
    params = make_params(kp, C)

    ref_exact = jax.block_until_ready(cxblock_ref(x, params, approx_gelu=False))
    ref_tanh = jax.block_until_ready(cxblock_ref(x, params, approx_gelu=True))

    # (1) structural check: f32 conv + f32 matmuls, tile_h=6 -> 3 H-tiles
    #     (exercises both halo branches); compare vs tanh-GELU reference.
    out1 = jax.block_until_ready(
        cxblock_pallas(x, params, tile_h=6,
                       mm_dtype=jnp.float32, conv_dtype=jnp.float32))
    assert out1.shape == (B, C, H, W)
    err1 = float(jnp.max(jnp.abs(out1 - ref_tanh)))
    assert err1 < 2e-3, f"f32 structural check failed (max abs err {err1})"

    # (2) production defaults: bf16 matmuls (+ bf16 conv off-v5e), whole-H tile
    #     (nt=1, no halo inputs); compare vs exact-erf reference, loose tol.
    out2 = jax.block_until_ready(cxblock_pallas(x, params))
    err2 = float(jnp.max(jnp.abs(out2 - ref_exact)))
    assert err2 < 2e-2, f"default-dtype check failed (max abs err {err2})"

    # (3) chunked-MLP (fori_loop) + halo path with production dtypes.
    out3 = jax.block_until_ready(cxblock_pallas(x, params, tile_h=6, mlp_rows=2))
    err3 = float(jnp.max(jnp.abs(out3 - ref_exact)))
    assert err3 < 2e-2, f"chunked-MLP check failed (max abs err {err3})"

    print("KERNEL_OK")
</pallas_src>

<mosaic_0001>
module attributes {stable_mosaic.version = 11 : i64} {
  func.func @kern(%arg0: i32, %arg1: i32, %arg2: memref<1x6x16x128xf32, #tpu.memory_space<vmem>>, %arg3: memref<1x3x16x128xf32, #tpu.memory_space<vmem>>, %arg4: memref<1x3x16x128xf32, #tpu.memory_space<vmem>>, %arg5: memref<7x7x128xf32, #tpu.memory_space<vmem>>, %arg6: memref<1x128xf32, #tpu.memory_space<vmem>>, %arg7: memref<128x128xf32, #tpu.memory_space<vmem>>, %arg8: memref<1x128xf32, #tpu.memory_space<vmem>>, %arg9: memref<128x128xf32, #tpu.memory_space<vmem>>, %arg10: memref<1x128xf32, #tpu.memory_space<vmem>>, %arg11: memref<1x6x16x128xf32, #tpu.memory_space<vmem>>, %arg12: memref<12x35x128xf32, #tpu.memory_space<vmem>>) attributes {dimension_semantics = [#tpu.dimension_semantics<parallel>, #tpu.dimension_semantics<parallel>], iteration_bounds = array<i64: 2, 3>, scalar_prefetch = 0 : i64, scratch_operands = 1 : i64, tpu.core_type = #tpu.core_type<tc>, window_params = [{transform_indices = @transform_0, window_bounds = array<i64: 1, 6, 16, 128>}, {transform_indices = @transform_1, window_bounds = array<i64: 1, 3, 16, 128>}, {transform_indices = @transform_2, window_bounds = array<i64: 1, 3, 16, 128>}, {pipeline_mode = #tpu.pipeline_mode<synchronous>, transform_indices = @transform_3, window_bounds = array<i64: 7, 7, 128>}, {pipeline_mode = #tpu.pipeline_mode<synchronous>, transform_indices = @transform_4, window_bounds = array<i64: 1, 128>}, {pipeline_mode = #tpu.pipeline_mode<synchronous>, transform_indices = @transform_5, window_bounds = array<i64: 128, 128>}, {pipeline_mode = #tpu.pipeline_mode<synchronous>, transform_indices = @transform_6, window_bounds = array<i64: 1, 128>}, {pipeline_mode = #tpu.pipeline_mode<synchronous>, transform_indices = @transform_7, window_bounds = array<i64: 128, 128>}, {pipeline_mode = #tpu.pipeline_mode<synchronous>, transform_indices = @transform_8, window_bounds = array<i64: 1, 128>}, {transform_indices = @transform_9, window_bounds = array<i64: 1, 6, 16, 128>}]} {
    %cst = arith.constant 0.000000e+00 : f32
    %0 = vector.broadcast %cst : f32 to vector<12x3x128xf32>
    %c0 = arith.constant 0 : index
    %c13 = arith.constant 13 : index
    %c0_0 = arith.constant 0 : index
    %1 = vector.load %arg12[%c0, %c13, %c0_0] : memref<12x35x128xf32, #tpu.memory_space<vmem>>, vector<12x3x128xf32>
    tpu.vector_store %arg12[%c0, %c13, %c0_0], %0 {strides = array<i32>} : memref<12x35x128xf32, #tpu.memory_space<vmem>>, vector<12x3x128xf32>,
    %c0_1 = arith.constant 0 : index
    %c32 = arith.constant 32 : index
    %c0_2 = arith.constant 0 : index
    %2 = vector.load %arg12[%c0_1, %c32, %c0_2] : memref<12x35x128xf32, #tpu.memory_space<vmem>>, vector<12x3x128xf32>
    tpu.vector_store %arg12[%c0_1, %c32, %c0_2], %0 {strides = array<i32>} : memref<12x35x128xf32, #tpu.memory_space<vmem>>, vector<12x3x128xf32>,
    %c0_3 = arith.constant 0 : index
    %c0_4 = arith.constant 0 : index
    %c0_5 = arith.constant 0 : index
    %c0_6 = arith.constant 0 : index
    %3 = vector.load %arg2[%c0_3, %c0_4, %c0_5, %c0_6] : memref<1x6x16x128xf32, #tpu.memory_space<vmem>>, vector<1x6x16x128xf32>
    %4 = vector.shape_cast %3 : vector<1x6x16x128xf32> to vector<6x16x128xf32>
    %c3 = arith.constant 3 : index
    %c16 = arith.constant 16 : index
    %c0_7 = arith.constant 0 : index
    %5 = vector.load %arg12[%c3, %c16, %c0_7] : memref<12x35x128xf32, #tpu.memory_space<vmem>>, vector<6x16x128xf32>
    tpu.vector_store %arg12[%c3, %c16, %c0_7], %4 {strides = array<i32>} : memref<12x35x128xf32, #tpu.memory_space<vmem>>, vector<6x16x128xf32>,
    %cst_8 = arith.constant 0.000000e+00 : f32
    %6 = vector.broadcast %cst_8 : f32 to vector<3x16x128xf32>
    %c0_i32 = arith.constant 0 : i32
    %7 = arith.cmpi eq, %arg1, %c0_i32 : i32
    %8 = arith.extui %7 : i1 to i32
    %c0_i32_9 = arith.constant 0 : i32
    %9 = arith.cmpi ne, %8, %c0_i32_9 : i32
    scf.if %9 {
      %c0_65 = arith.constant 0 : index
      %c16_66 = arith.constant 16 : index
      %c0_67 = arith.constant 0 : index
      %431 = vector.load %arg12[%c0_65, %c16_66, %c0_67] : memref<12x35x128xf32, #tpu.memory_space<vmem>>, vector<3x16x128xf32>
      tpu.vector_store %arg12[%c0_65, %c16_66, %c0_67], %6 {strides = array<i32>} : memref<12x35x128xf32, #tpu.memory_space<vmem>>, vector<3x16x128xf32>,
    } else {
    }
    %c0_i32_10 = arith.constant 0 : i32
    %10 = arith.cmpi sgt, %arg1, %c0_i32_10 : i32
    %11 = arith.extui %10 : i1 to i32
    %c0_i32_11 = arith.constant 0 : i32
    %12 = arith.cmpi ne, %11, %c0_i32_11 : i32
    scf.if %12 {
      %c0_65 = arith.constant 0 : index
      %c0_66 = arith.constant 0 : index
      %c0_67 = arith.constant 0 : index
      %c0_68 = arith.constant 0 : index
      %431 = vector.load %arg3[%c0_65, %c0_66, %c0_67, %c0_68] : memref<1x3x16x128xf32, #tpu.memory_space<vmem>>, vector<1x3x16x128xf32>
      %432 = vector.shape_cast %431 : vector<1x3x16x128xf32> to vector<3x16x128xf32>
      %c0_69 = arith.constant 0 : index
      %c16_70 = arith.constant 16 : index
      %c0_71 = arith.constant 0 : index
      %433 = vector.load %arg12[%c0_69, %c16_70, %c0_71] : memref<12x35x128xf32, #tpu.memory_space<vmem>>, vector<3x16x128xf32>
      tpu.vector_store %arg12[%c0_69, %c16_70, %c0_71], %432 {strides = array<i32>} : memref<12x35x128xf32, #tpu.memory_space<vmem>>, vector<3x16x128xf32>,
    } else {
    }
    %c1_i32 = arith.constant 1 : i32
    %13 = arith.addi %arg1, %c1_i32 : i32
    %c3_i32 = arith.constant 3 : i32
    %14 = arith.cmpi eq, %13, %c3_i32 : i32
    %15 = arith.extui %14 : i1 to i32
    %c0_i32_12 = arith.constant 0 : i32
    %16 = arith.cmpi ne, %15, %c0_i32_12 : i32
    scf.if %16 {
      %c9 = arith.constant 9 : index
      %c16_65 = arith.constant 16 : index
      %c0_66 = arith.constant 0 : index
      %431 = vector.load %arg12[%c9, %c16_65, %c0_66] : memref<12x35x128xf32, #tpu.memory_space<vmem>>, vector<3x16x128xf32>
      tpu.vector_store %arg12[%c9, %c16_65, %c0_66], %6 {strides = array<i32>} : memref<12x35x128xf32, #tpu.memory_space<vmem>>, vector<3x16x128xf32>,
    } else {
    }
    %c1_i32_13 = arith.constant 1 : i32
    %17 = arith.addi %arg1, %c1_i32_13 : i32
    %c3_i32_14 = arith.constant 3 : i32
    %18 = arith.cmpi slt, %17, %c3_i32_14 : i32
    %19 = arith.extui %18 : i1 to i32
    %c0_i32_15 = arith.constant 0 : i32
    %20 = arith.cmpi ne, %19, %c0_i32_15 : i32
    scf.if %20 {
      %c0_65 = arith.constant 0 : index
      %c0_66 = arith.constant 0 : index
      %c0_67 = arith.constant 0 : index
      %c0_68 = arith.constant 0 : index
      %431 = vector.load %arg4[%c0_65, %c0_66, %c0_67, %c0_68] : memref<1x3x16x128xf32, #tpu.memory_space<vmem>>, vector<1x3x16x128xf32>
      %432 = vector.shape_cast %431 : vector<1x3x16x128xf32> to vector<3x16x128xf32>
      %c9 = arith.constant 9 : index
      %c16_69 = arith.constant 16 : index
      %c0_70 = arith.constant 0 : index
      %433 = vector.load %arg12[%c9, %c16_69, %c0_70] : memref<12x35x128xf32, #tpu.memory_space<vmem>>, vector<3x16x128xf32>
      tpu.vector_store %arg12[%c9, %c16_69, %c0_70], %432 {strides = array<i32>} : memref<12x35x128xf32, #tpu.memory_space<vmem>>, vector<3x16x128xf32>,
    } else {
    }
    %c0_16 = arith.constant 0 : index
    %c0_17 = arith.constant 0 : index
    %c0_18 = arith.constant 0 : index
    %21 = vector.load %arg5[%c0_16, %c0_17, %c0_18] : memref<7x7x128xf32, #tpu.memory_space<vmem>>, vector<7x7x128xf32>
    %c0_19 = arith.constant 0 : index
    %c13_20 = arith.constant 13 : index
    %c0_21 = arith.constant 0 : index
    %22 = vector.load %arg12[%c0_19, %c13_20, %c0_21] : memref<12x35x128xf32, #tpu.memory_space<vmem>>, vector<12x16x128xf32>
    %23 = vector.extract_strided_slice %22 {offsets = [0, 0, 0], sizes = [6, 16, 128], strides = [1, 1, 1]} : vector<12x16x128xf32> to vector<6x16x128xf32>
    %24 = vector.extract_strided_slice %21 {offsets = [0, 0, 0], sizes = [1, 1, 128], strides = [1, 1, 1]} : vector<7x7x128xf32> to vector<1x1x128xf32>
    %25 = vector.shape_cast %24 : vector<1x1x128xf32> to vector<128xf32>
    %26 = vector.shape_cast %25 : vector<128xf32> to vector<1x1x128xf32>
    %27 = vector.broadcast %26 : vector<1x1x128xf32> to vector<6x16x128xf32>
    %28 = arith.mulf %23, %27 : vector<6x16x128xf32>
    %29 = vector.extract_strided_slice %22 {offsets = [1, 0, 0], sizes = [6, 16, 128], strides = [1, 1, 1]} : vector<12x16x128xf32> to vector<6x16x128xf32>
    %30 = vector.extract_strided_slice %21 {offsets = [1, 0, 0], sizes = [1, 1, 128], strides = [1, 1, 1]} : vector<7x7x128xf32> to vector<1x1x128xf32>
    %31 = vector.shape_cast %30 : vector<1x1x128xf32> to vector<128xf32>
    %32 = vector.shape_cast %31 : vector<128xf32> to vector<1x1x128xf32>
    %33 = vector.broadcast %32 : vector<1x1x128xf32> to vector<6x16x128xf32>
    %34 = arith.mulf %29, %33 : vector<6x16x128xf32>
    %35 = arith.addf %28, %34 : vector<6x16x128xf32>
    %36 = vector.extract_strided_slice %22 {offsets = [2, 0, 0], sizes = [6, 16, 128], strides = [1, 1, 1]} : vector<12x16x128xf32> to vector<6x16x128xf32>
    %37 = vector.extract_strided_slice %21 {offsets = [2, 0, 0], sizes = [1, 1, 128], strides = [1, 1, 1]} : vector<7x7x128xf32> to vector<1x1x128xf32>
    %38 = vector.shape_cast %37 : vector<1x1x128xf32> to vector<128xf32>
    %39 = vector.shape_cast %38 : vector<128xf32> to vector<1x1x128xf32>
    %40 = vector.broadcast %39 : vector<1x1x128xf32> to vector<6x16x128xf32>
    %41 = arith.mulf %36, %40 : vector<6x16x128xf32>
    %42 = arith.addf %35, %41 : vector<6x16x128xf32>
    %43 = vector.extract_strided_slice %22 {offsets = [3, 0, 0], sizes = [6, 16, 128], strides = [1, 1, 1]} : vector<12x16x128xf32> to vector<6x16x128xf32>
    %44 = vector.extract_strided_slice %21 {offsets = [3, 0, 0], sizes = [1, 1, 128], strides = [1, 1, 1]} : vector<7x7x128xf32> to vector<1x1x128xf32>
    %45 = vector.shape_cast %44 : vector<1x1x128xf32> to vector<128xf32>
    %46 = vector.shape_cast %45 : vector<128xf32> to vector<1x1x128xf32>
    %47 = vector.broadcast %46 : vector<1x1x128xf32> to vector<6x16x128xf32>
    %48 = arith.mulf %43, %47 : vector<6x16x128xf32>
    %49 = arith.addf %42, %48 : vector<6x16x128xf32>
    %50 = vector.extract_strided_slice %22 {offsets = [4, 0, 0], sizes = [6, 16, 128], strides = [1, 1, 1]} : vector<12x16x128xf32> to vector<6x16x128xf32>
    %51 = vector.extract_strided_slice %21 {offsets = [4, 0, 0], sizes = [1, 1, 128], strides = [1, 1, 1]} : vector<7x7x128xf32> to vector<1x1x128xf32>
    %52 = vector.shape_cast %51 : vector<1x1x128xf32> to vector<128xf32>
    %53 = vector.shape_cast %52 : vector<128xf32> to vector<1x1x128xf32>
    %54 = vector.broadcast %53 : vector<1x1x128xf32> to vector<6x16x128xf32>
    %55 = arith.mulf %50, %54 : vector<6x16x128xf32>
    %56 = arith.addf %49, %55 : vector<6x16x128xf32>
    %57 = vector.extract_strided_slice %22 {offsets = [5, 0, 0], sizes = [6, 16, 128], strides = [1, 1, 1]} : vector<12x16x128xf32> to vector<6x16x128xf32>
    %58 = vector.extract_strided_slice %21 {offsets = [5, 0, 0], sizes = [1, 1, 128], strides = [1, 1, 1]} : vector<7x7x128xf32> to vector<1x1x128xf32>
    %59 = vector.shape_cast %58 : vector<1x1x128xf32> to vector<128xf32>
    %60 = vector.shape_cast %59 : vector<128xf32> to vector<1x1x128xf32>
    %61 = vector.broadcast %60 : vector<1x1x128xf32> to vector<6x16x128xf32>
    %62 = arith.mulf %57, %61 : vector<6x16x128xf32>
    %63 = arith.addf %56, %62 : vector<6x16x128xf32>
    %64 = vector.extract_strided_slice %22 {offsets = [6, 0, 0], sizes = [6, 16, 128], strides = [1, 1, 1]} : vector<12x16x128xf32> to vector<6x16x128xf32>
    %65 = vector.extract_strided_slice %21 {offsets = [6, 0, 0], sizes = [1, 1, 128], strides = [1, 1, 1]} : vector<7x7x128xf32> to vector<1x1x128xf32>
    %66 = vector.shape_cast %65 : vector<1x1x128xf32> to vector<128xf32>
    %67 = vector.shape_cast %66 : vector<128xf32> to vector<1x1x128xf32>
    %68 = vector.broadcast %67 : vector<1x1x128xf32> to vector<6x16x128xf32>
    %69 = arith.mulf %64, %68 : vector<6x16x128xf32>
    %70 = arith.addf %63, %69 : vector<6x16x128xf32>
    %c0_22 = arith.constant 0 : index
    %c14 = arith.constant 14 : index
    %c0_23 = arith.constant 0 : index
    %71 = vector.load %arg12[%c0_22, %c14, %c0_23] : memref<12x35x128xf32, #tpu.memory_space<vmem>>, vector<12x16x128xf32>
    %72 = vector.extract_strided_slice %71 {offsets = [0, 0, 0], sizes = [6, 16, 128], strides = [1, 1, 1]} : vector<12x16x128xf32> to vector<6x16x128xf32>
    %73 = vector.extract_strided_slice %21 {offsets = [0, 1, 0], sizes = [1, 1, 128], strides = [1, 1, 1]} : vector<7x7x128xf32> to vector<1x1x128xf32>
    %74 = vector.shape_cast %73 : vector<1x1x128xf32> to vector<128xf32>
    %75 = vector.shape_cast %74 : vector<128xf32> to vector<1x1x128xf32>
    %76 = vector.broadcast %75 : vector<1x1x128xf32> to vector<6x16x128xf32>
    %77 = arith.mulf %72, %76 : vector<6x16x128xf32>
    %78 = vector.extract_strided_slice %71 {offsets = [1, 0, 0], sizes = [6, 16, 128], strides = [1, 1, 1]} : vector<12x16x128xf32> to vector<6x16x128xf32>
    %79 = vector.extract_strided_slice %21 {offsets = [1, 1, 0], sizes = [1, 1, 128], strides = [1, 1, 1]} : vector<7x7x128xf32> to vector<1x1x128xf32>
    %80 = vector.shape_cast %79 : vector<1x1x128xf32> to vector<128xf32>
    %81 = vector.shape_cast %80 : vector<128xf32> to vector<1x1x128xf32>
    %82 = vector.broadcast %81 : vector<1x1x128xf32> to vector<6x16x128xf32>
    %83 = arith.mulf %78, %82 : vector<6x16x128xf32>
    %84 = arith.addf %77, %83 : vector<6x16x128xf32>
    %85 = vector.extract_strided_slice %71 {offsets = [2, 0, 0], sizes = [6, 16, 128], strides = [1, 1, 1]} : vector<12x16x128xf32> to vector<6x16x128xf32>
    %86 = vector.extract_strided_slice %21 {offsets = [2, 1, 0], sizes = [1, 1, 128], strides = [1, 1, 1]} : vector<7x7x128xf32> to vector<1x1x128xf32>
    %87 = vector.shape_cast %86 : vector<1x1x128xf32> to vector<128xf32>
    %88 = vector.shape_cast %87 : vector<128xf32> to vector<1x1x128xf32>
    %89 = vector.broadcast %88 : vector<1x1x128xf32> to vector<6x16x128xf32>
    %90 = arith.mulf %85, %89 : vector<6x16x128xf32>
    %91 = arith.addf %84, %90 : vector<6x16x128xf32>
    %92 = vector.extract_strided_slice %71 {offsets = [3, 0, 0], sizes = [6, 16, 128], strides = [1, 1, 1]} : vector<12x16x128xf32> to vector<6x16x128xf32>
    %93 = vector.extract_strided_slice %21 {offsets = [3, 1, 0], sizes = [1, 1, 128], strides = [1, 1, 1]} : vector<7x7x128xf32> to vector<1x1x128xf32>
    %94 = vector.shape_cast %93 : vector<1x1x128xf32> to vector<128xf32>
    %95 = vector.shape_cast %94 : vector<128xf32> to vector<1x1x128xf32>
    %96 = vector.broadcast %95 : vector<1x1x128xf32> to vector<6x16x128xf32>
    %97 = arith.mulf %92, %96 : vector<6x16x128xf32>
    %98 = arith.addf %91, %97 : vector<6x16x128xf32>
    %99 = vector.extract_strided_slice %71 {offsets = [4, 0, 0], sizes = [6, 16, 128], strides = [1, 1, 1]} : vector<12x16x128xf32> to vector<6x16x128xf32>
    %100 = vector.extract_strided_slice %21 {offsets = [4, 1, 0], sizes = [1, 1, 128], strides = [1, 1, 1]} : vector<7x7x128xf32> to vector<1x1x128xf32>
    %101 = vector.shape_cast %100 : vector<1x1x128xf32> to vector<128xf32>
    %102 = vector.shape_cast %101 : vector<128xf32> to vector<1x1x128xf32>
    %103 = vector.broadcast %102 : vector<1x1x128xf32> to vector<6x16x128xf32>
    %104 = arith.mulf %99, %103 : vector<6x16x128xf32>
    %105 = arith.addf %98, %104 : vector<6x16x128xf32>
    %106 = vector.extract_strided_slice %71 {offsets = [5, 0, 0], sizes = [6, 16, 128], strides = [1, 1, 1]} : vector<12x16x128xf32> to vector<6x16x128xf32>
    %107 = vector.extract_strided_slice %21 {offsets = [5, 1, 0], sizes = [1, 1, 128], strides = [1, 1, 1]} : vector<7x7x128xf32> to vector<1x1x128xf32>
    %108 = vector.shape_cast %107 : vector<1x1x128xf32> to vector<128xf32>
    %109 = vector.shape_cast %108 : vector<128xf32> to vector<1x1x128xf32>
    %110 = vector.broadcast %109 : vector<1x1x128xf32> to vector<6x16x128xf32>
    %111 = arith.mulf %106, %110 : vector<6x16x128xf32>
    %112 = arith.addf %105, %111 : vector<6x16x128xf32>
    %113 = vector.extract_strided_slice %71 {offsets = [6, 0, 0], sizes = [6, 16, 128], strides = [1, 1, 1]} : vector<12x16x128xf32> to vector<6x16x128xf32>
    %114 = vector.extract_strided_slice %21 {offsets = [6, 1, 0], sizes = [1, 1, 128], strides = [1, 1, 1]} : vector<7x7x128xf32> to vector<1x1x128xf32>
    %115 = vector.shape_cast %114 : vector<1x1x128xf32> to vector<128xf32>
    %116 = vector.shape_cast %115 : vector<128xf32> to vector<1x1x128xf32>
    %117 = vector.broadcast %116 : vector<1x1x128xf32> to vector<6x16x128xf32>
    %118 = arith.mulf %113, %117 : vector<6x16x128xf32>
    %119 = arith.addf %112, %118 : vector<6x16x128xf32>
    %c0_24 = arith.constant 0 : index
    %c15 = arith.constant 15 : index
    %c0_25 = arith.constant 0 : index
    %120 = vector.load %arg12[%c0_24, %c15, %c0_25] : memref<12x35x128xf32, #tpu.memory_space<vmem>>, vector<12x16x128xf32>
    %121 = vector.extract_strided_slice %120 {offsets = [0, 0, 0], sizes = [6, 16, 128], strides = [1, 1, 1]} : vector<12x16x128xf32> to vector<6x16x128xf32>
    %122 = vector.extract_strided_slice %21 {offsets = [0, 2, 0], sizes = [1, 1, 128], strides = [1, 1, 1]} : vector<7x7x128xf32> to vector<1x1x128xf32>
    %123 = vector.shape_cast %122 : vector<1x1x128xf32> to vector<128xf32>
    %124 = vector.shape_cast %123 : vector<128xf32> to vector<1x1x128xf32>
    %125 = vector.broadcast %124 : vector<1x1x128xf32> to vector<6x16x128xf32>
    %126 = arith.mulf %121, %125 : vector<6x16x128xf32>
    %127 = vector.extract_strided_slice %120 {offsets = [1, 0, 0], sizes = [6, 16, 128], strides = [1, 1, 1]} : vector<12x16x128xf32> to vector<6x16x128xf32>
    %128 = vector.extract_strided_slice %21 {offsets = [1, 2, 0], sizes = [1, 1, 128], strides = [1, 1, 1]} : vector<7x7x128xf32> to vector<1x1x128xf32>
    %129 = vector.shape_cast %128 : vector<1x1x128xf32> to vector<128xf32>
    %130 = vector.shape_cast %129 : vector<128xf32> to vector<1x1x128xf32>
    %131 = vector.broadcast %130 : vector<1x1x128xf32> to vector<6x16x128xf32>
    %132 = arith.mulf %127, %131 : vector<6x16x128xf32>
    %133 = arith.addf %126, %132 : vector<6x16x128xf32>
    %134 = vector.extract_strided_slice %120 {offsets = [2, 0, 0], sizes = [6, 16, 128], strides = [1, 1, 1]} : vector<12x16x128xf32> to vector<6x16x128xf32>
    %135 = vector.extract_strided_slice %21 {offsets = [2, 2, 0], sizes = [1, 1, 128], strides = [1, 1, 1]} : vector<7x7x128xf32> to vector<1x1x128xf32>
    %136 = vector.shape_cast %135 : vector<1x1x128xf32> to vector<128xf32>
    %137 = vector.shape_cast %136 : vector<128xf32> to vector<1x1x128xf32>
    %138 = vector.broadcast %137 : vector<1x1x128xf32> to vector<6x16x128xf32>
    %139 = arith.mulf %134, %138 : vector<6x16x128xf32>
    %140 = arith.addf %133, %139 : vector<6x16x128xf32>
    %141 = vector.extract_strided_slice %120 {offsets = [3, 0, 0], sizes = [6, 16, 128], strides = [1, 1, 1]} : vector<12x16x128xf32> to vector<6x16x128xf32>
    %142 = vector.extract_strided_slice %21 {offsets = [3, 2, 0], sizes = [1, 1, 128], strides = [1, 1, 1]} : vector<7x7x128xf32> to vector<1x1x128xf32>
    %143 = vector.shape_cast %142 : vector<1x1x128xf32> to vector<128xf32>
    %144 = vector.shape_cast %143 : vector<128xf32> to vector<1x1x128xf32>
    %145 = vector.broadcast %144 : vector<1x1x128xf32> to vector<6x16x128xf32>
    %146 = arith.mulf %141, %145 : vector<6x16x128xf32>
    %147 = arith.addf %140, %146 : vector<6x16x128xf32>
    %148 = vector.extract_strided_slice %120 {offsets = [4, 0, 0], sizes = [6, 16, 128], strides = [1, 1, 1]} : vector<12x16x128xf32> to vector<6x16x128xf32>
    %149 = vector.extract_strided_slice %21 {offsets = [4, 2, 0], sizes = [1, 1, 128], strides = [1, 1, 1]} : vector<7x7x128xf32> to vector<1x1x128xf32>
    %150 = vector.shape_cast %149 : vector<1x1x128xf32> to vector<128xf32>
    %151 = vector.shape_cast %150 : vector<128xf32> to vector<1x1x128xf32>
    %152 = vector.broadcast %151 : vector<1x1x128xf32> to vector<6x16x128xf32>
    %153 = arith.mulf %148, %152 : vector<6x16x128xf32>
    %154 = arith.addf %147, %153 : vector<6x16x128xf32>
    %155 = vector.extract_strided_slice %120 {offsets = [5, 0, 0], sizes = [6, 16, 128], strides = [1, 1, 1]} : vector<12x16x128xf32> to vector<6x16x128xf32>
    %156 = vector.extract_strided_slice %21 {offsets = [5, 2, 0], sizes = [1, 1, 128], strides = [1, 1, 1]} : vector<7x7x128xf32> to vector<1x1x128xf32>
    %157 = vector.shape_cast %156 : vector<1x1x128xf32> to vector<128xf32>
    %158 = vector.shape_cast %157 : vector<128xf32> to vector<1x1x128xf32>
    %159 = vector.broadcast %158 : vector<1x1x128xf32> to vector<6x16x128xf32>
    %160 = arith.mulf %155, %159 : vector<6x16x128xf32>
    %161 = arith.addf %154, %160 : vector<6x16x128xf32>
    %162 = vector.extract_strided_slice %120 {offsets = [6, 0, 0], sizes = [6, 16, 128], strides = [1, 1, 1]} : vector<12x16x128xf32> to vector<6x16x128xf32>
    %163 = vector.extract_strided_slice %21 {offsets = [6, 2, 0], sizes = [1, 1, 128], strides = [1, 1, 1]} : vector<7x7x128xf32> to vector<1x1x128xf32>
    %164 = vector.shape_cast %163 : vector<1x1x128xf32> to vector<128xf32>
    %165 = vector.shape_cast %164 : vector<128xf32> to vector<1x1x128xf32>
    %166 = vector.broadcast %165 : vector<1x1x128xf32> to vector<6x16x128xf32>
    %167 = arith.mulf %162, %166 : vector<6x16x128xf32>
    %168 = arith.addf %161, %167 : vector<6x16x128xf32>
    %169 = arith.addf %70, %168 : vector<6x16x128xf32>
    %c0_26 = arith.constant 0 : index
    %c16_27 = arith.constant 16 : index
    %c0_28 = arith.constant 0 : index
    %170 = vector.load %arg12[%c0_26, %c16_27, %c0_28] : memref<12x35x128xf32, #tpu.memory_space<vmem>>, vector<12x16x128xf32>
    %171 = vector.extract_strided_slice %170 {offsets = [0, 0, 0], sizes = [6, 16, 128], strides = [1, 1, 1]} : vector<12x16x128xf32> to vector<6x16x128xf32>
    %172 = vector.extract_strided_slice %21 {offsets = [0, 3, 0], sizes = [1, 1, 128], strides = [1, 1, 1]} : vector<7x7x128xf32> to vector<1x1x128xf32>
    %173 = vector.shape_cast %172 : vector<1x1x128xf32> to vector<128xf32>
    %174 = vector.shape_cast %173 : vector<128xf32> to vector<1x1x128xf32>
    %175 = vector.broadcast %174 : vector<1x1x128xf32> to vector<6x16x128xf32>
    %176 = arith.mulf %171, %175 : vector<6x16x128xf32>
    %177 = vector.extract_strided_slice %170 {offsets = [1, 0, 0], sizes = [6, 16, 128], strides = [1, 1, 1]} : vector<12x16x128xf32> to vector<6x16x128xf32>
    %178 = vector.extract_strided_slice %21 {offsets = [1, 3, 0], sizes = [1, 1, 128], strides = [1, 1, 1]} : vector<7x7x128xf32> to vector<1x1x128xf32>
    %179 = vector.shape_cast %178 : vector<1x1x128xf32> to vector<128xf32>
    %180 = vector.shape_cast %179 : vector<128xf32> to vector<1x1x128xf32>
    %181 = vector.broadcast %180 : vector<1x1x128xf32> to vector<6x16x128xf32>
    %182 = arith.mulf %177, %181 : vector<6x16x128xf32>
    %183 = arith.addf %176, %182 : vector<6x16x128xf32>
    %184 = vector.extract_strided_slice %170 {offsets = [2, 0, 0], sizes = [6, 16, 128], strides = [1, 1, 1]} : vector<12x16x128xf32> to vector<6x16x128xf32>
    %185 = vector.extract_strided_slice %21 {offsets = [2, 3, 0], sizes = [1, 1, 128], strides = [1, 1, 1]} : vector<7x7x128xf32> to vector<1x1x128xf32>
    %186 = vector.shape_cast %185 : vector<1x1x128xf32> to vector<128xf32>
    %187 = vector.shape_cast %186 : vector<128xf32> to vector<1x1x128xf32>
    %188 = vector.broadcast %187 : vector<1x1x128xf32> to vector<6x16x128xf32>
    %189 = arith.mulf %184, %188 : vector<6x16x128xf32>
    %190 = arith.addf %183, %189 : vector<6x16x128xf32>
    %191 = vector.extract_strided_slice %170 {offsets = [3, 0, 0], sizes = [6, 16, 128], strides = [1, 1, 1]} : vector<12x16x128xf32> to vector<6x16x128xf32>
    %192 = vector.extract_strided_slice %21 {offsets = [3, 3, 0], sizes = [1, 1, 128], strides = [1, 1, 1]} : vector<7x7x128xf32> to vector<1x1x128xf32>
    %193 = vector.shape_cast %192 : vector<1x1x128xf32> to vector<128xf32>
    %194 = vector.shape_cast %193 : vector<128xf32> to vector<1x1x128xf32>
    %195 = vector.broadcast %194 : vector<1x1x128xf32> to vector<6x16x128xf32>
    %196 = arith.mulf %191, %195 : vector<6x16x128xf32>
    %197 = arith.addf %190, %196 : vector<6x16x128xf32>
    %198 = vector.extract_strided_slice %170 {offsets = [4, 0, 0], sizes = [6, 16, 128], strides = [1, 1, 1]} : vector<12x16x128xf32> to vector<6x16x128xf32>
    %199 = vector.extract_strided_slice %21 {offsets = [4, 3, 0], sizes = [1, 1, 128], strides = [1, 1, 1]} : vector<7x7x128xf32> to vector<1x1x128xf32>
    %200 = vector.shape_cast %199 : vector<1x1x128xf32> to vector<128xf32>
    %201 = vector.shape_cast %200 : vector<128xf32> to vector<1x1x128xf32>
    %202 = vector.broadcast %201 : vector<1x1x128xf32> to vector<6x16x128xf32>
    %203 = arith.mulf %198, %202 : vector<6x16x128xf32>
    %204 = arith.addf %197, %203 : vector<6x16x128xf32>
    %205 = vector.extract_strided_slice %170 {offsets = [5, 0, 0], sizes = [6, 16, 128], strides = [1, 1, 1]} : vector<12x16x128xf32> to vector<6x16x128xf32>
    %206 = vector.extract_strided_slice %21 {offsets = [5, 3, 0], sizes = [1, 1, 128], strides = [1, 1, 1]} : vector<7x7x128xf32> to vector<1x1x128xf32>
    %207 = vector.shape_cast %206 : vector<1x1x128xf32> to vector<128xf32>
    %208 = vector.shape_cast %207 : vector<128xf32> to vector<1x1x128xf32>
    %209 = vector.broadcast %208 : vector<1x1x128xf32> to vector<6x16x128xf32>
    %210 = arith.mulf %205, %209 : vector<6x16x128xf32>
    %211 = arith.addf %204, %210 : vector<6x16x128xf32>
    %212 = vector.extract_strided_slice %170 {offsets = [6, 0, 0], sizes = [6, 16, 128], strides = [1, 1, 1]} : vector<12x16x128xf32> to vector<6x16x128xf32>
    %213 = vector.extract_strided_slice %21 {offsets = [6, 3, 0], sizes = [1, 1, 128], strides = [1, 1, 1]} : vector<7x7x128xf32> to vector<1x1x128xf32>
    %214 = vector.shape_cast %213 : vector<1x1x128xf32> to vector<128xf32>
    %215 = vector.shape_cast %214 : vector<128xf32> to vector<1x1x128xf32>
    %216 = vector.broadcast %215 : vector<1x1x128xf32> to vector<6x16x128xf32>
    %217 = arith.mulf %212, %216 : vector<6x16x128xf32>
    %218 = arith.addf %211, %217 : vector<6x16x128xf32>
    %219 = arith.addf %119, %218 : vector<6x16x128xf32>
    %c0_29 = arith.constant 0 : index
    %c17 = arith.constant 17 : index
    %c0_30 = arith.constant 0 : index
    %220 = vector.load %arg12[%c0_29, %c17, %c0_30] : memref<12x35x128xf32, #tpu.memory_space<vmem>>, vector<12x16x128xf32>
    %221 = vector.extract_strided_slice %220 {offsets = [0, 0, 0], sizes = [6, 16, 128], strides = [1, 1, 1]} : vector<12x16x128xf32> to vector<6x16x128xf32>
    %222 = vector.extract_strided_slice %21 {offsets = [0, 4, 0], sizes = [1, 1, 128], strides = [1, 1, 1]} : vector<7x7x128xf32> to vector<1x1x128xf32>
    %223 = vector.shape_cast %222 : vector<1x1x128xf32> to vector<128xf32>
    %224 = vector.shape_cast %223 : vector<128xf32> to vector<1x1x128xf32>
    %225 = vector.broadcast %224 : vector<1x1x128xf32> to vector<6x16x128xf32>
    %226 = arith.mulf %221, %225 : vector<6x16x128xf32>
    %227 = vector.extract_strided_slice %220 {offsets = [1, 0, 0], sizes = [6, 16, 128], strides = [1, 1, 1]} : vector<12x16x128xf32> to vector<6x16x128xf32>
    %228 = vector.extract_strided_slice %21 {offsets = [1, 4, 0], sizes = [1, 1, 128], strides = [1, 1, 1]} : vector<7x7x128xf32> to vector<1x1x128xf32>
    %229 = vector.shape_cast %228 : vector<1x1x128xf32> to vector<128xf32>
    %230 = vector.shape_cast %229 : vector<128xf32> to vector<1x1x128xf32>
    %231 = vector.broadcast %230 : vector<1x1x128xf32> to vector<6x16x128xf32>
    %232 = arith.mulf %227, %231 : vector<6x16x128xf32>
    %233 = arith.addf %226, %232 : vector<6x16x128xf32>
    %234 = vector.extract_strided_slice %220 {offsets = [2, 0, 0], sizes = [6, 16, 128], strides = [1, 1, 1]} : vector<12x16x128xf32> to vector<6x16x128xf32>
    %235 = vector.extract_strided_slice %21 {offsets = [2, 4, 0], sizes = [1, 1, 128], strides = [1, 1, 1]} : vector<7x7x128xf32> to vector<1x1x128xf32>
    %236 = vector.shape_cast %235 : vector<1x1x128xf32> to vector<128xf32>
    %237 = vector.shape_cast %236 : vector<128xf32> to vector<1x1x128xf32>
    %238 = vector.broadcast %237 : vector<1x1x128xf32> to vector<6x16x128xf32>
    %239 = arith.mulf %234, %238 : vector<6x16x128xf32>
    %240 = arith.addf %233, %239 : vector<6x16x128xf32>
    %241 = vector.extract_strided_slice %220 {offsets = [3, 0, 0], sizes = [6, 16, 128], strides = [1, 1, 1]} : vector<12x16x128xf32> to vector<6x16x128xf32>
    %242 = vector.extract_strided_slice %21 {offsets = [3, 4, 0], sizes = [1, 1, 128], strides = [1, 1, 1]} : vector<7x7x128xf32> to vector<1x1x128xf32>
    %243 = vector.shape_cast %242 : vector<1x1x128xf32> to vector<128xf32>
    %244 = vector.shape_cast %243 : vector<128xf32> to vector<1x1x128xf32>
    %245 = vector.broadcast %244 : vector<1x1x128xf32> to vector<6x16x128xf32>
    %246 = arith.mulf %241, %245 : vector<6x16x128xf32>
    %247 = arith.addf %240, %246 : vector<6x16x128xf32>
    %248 = vector.extract_strided_slice %220 {offsets = [4, 0, 0], sizes = [6, 16, 128], strides = [1, 1, 1]} : vector<12x16x128xf32> to vector<6x16x128xf32>
    %249 = vector.extract_strided_slice %21 {offsets = [4, 4, 0], sizes = [1, 1, 128], strides = [1, 1, 1]} : vector<7x7x128xf32> to vector<1x1x128xf32>
    %250 = vector.shape_cast %249 : vector<1x1x128xf32> to vector<128xf32>
    %251 = vector.shape_cast %250 : vector<128xf32> to vector<1x1x128xf32>
    %252 = vector.broadcast %251 : vector<1x1x128xf32> to vector<6x16x128xf32>
    %253 = arith.mulf %248, %252 : vector<6x16x128xf32>
    %254 = arith.addf %247, %253 : vector<6x16x128xf32>
    %255 = vector.extract_strided_slice %220 {offsets = [5, 0, 0], sizes = [6, 16, 128], strides = [1, 1, 1]} : vector<12x16x128xf32> to vector<6x16x128xf32>
    %256 = vector.extract_strided_slice %21 {offsets = [5, 4, 0], sizes = [1, 1, 128], strides = [1, 1, 1]} : vector<7x7x128xf32> to vector<1x1x128xf32>
    %257 = vector.shape_cast %256 : vector<1x1x128xf32> to vector<128xf32>
    %258 = vector.shape_cast %257 : vector<128xf32> to vector<1x1x128xf32>
    %259 = vector.broadcast %258 : vector<1x1x128xf32> to vector<6x16x128xf32>
    %260 = arith.mulf %255, %259 : vector<6x16x128xf32>
    %261 = arith.addf %254, %260 : vector<6x16x128xf32>
    %262 = vector.extract_strided_slice %220 {offsets = [6, 0, 0], sizes = [6, 16, 128], strides = [1, 1, 1]} : vector<12x16x128xf32> to vector<6x16x128xf32>
    %263 = vector.extract_strided_slice %21 {offsets = [6, 4, 0], sizes = [1, 1, 128], strides = [1, 1, 1]} : vector<7x7x128xf32> to vector<1x1x128xf32>
    %264 = vector.shape_cast %263 : vector<1x1x128xf32> to vector<128xf32>
    %265 = vector.shape_cast %264 : vector<128xf32> to vector<1x1x128xf32>
    %266 = vector.broadcast %265 : vector<1x1x128xf32> to vector<6x16x128xf32>
    %267 = arith.mulf %262, %266 : vector<6x16x128xf32>
    %268 = arith.addf %261, %267 : vector<6x16x128xf32>
    %269 = arith.addf %169, %268 : vector<6x16x128xf32>
    %c0_31 = arith.constant 0 : index
    %c18 = arith.constant 18 : index
    %c0_32 = arith.constant 0 : index
    %270 = vector.load %arg12[%c0_31, %c18, %c0_32] : memref<12x35x128xf32, #tpu.memory_space<vmem>>, vector<12x16x128xf32>
    %271 = vector.extract_strided_slice %270 {offsets = [0, 0, 0], sizes = [6, 16, 128], strides = [1, 1, 1]} : vector<12x16x128xf32> to vector<6x16x128xf32>
    %272 = vector.extract_strided_slice %21 {offsets = [0, 5, 0], sizes = [1, 1, 128], strides = [1, 1, 1]} : vector<7x7x128xf32> to vector<1x1x128xf32>
    %273 = vector.shape_cast %272 : vector<1x1x128xf32> to vector<128xf32>
    %274 = vector.shape_cast %273 : vector<128xf32> to vector<1x1x128xf32>
    %275 = vector.broadcast %274 : vector<1x1x128xf32> to vector<6x16x128xf32>
    %276 = arith.mulf %271, %275 : vector<6x16x128xf32>
    %277 = vector.extract_strided_slice %270 {offsets = [1, 0, 0], sizes = [6, 16, 128], strides = [1, 1, 1]} : vector<12x16x128xf32> to vector<6x16x128xf32>
    %278 = vector.extract_strided_slice %21 {offsets = [1, 5, 0], sizes = [1, 1, 128], strides = [1, 1, 1]} : vector<7x7x128xf32> to vector<1x1x128xf32>
    %279 = vector.shape_cast %278 : vector<1x1x128xf32> to vector<128xf32>
    %280 = vector.shape_cast %279 : vector<128xf32> to vector<1x1x128xf32>
    %281 = vector.broadcast %280 : vector<1x1x128xf32> to vector<6x16x128xf32>
    %282 = arith.mulf %277, %281 : vector<6x16x128xf32>
    %283 = arith.addf %276, %282 : vector<6x16x128xf32>
    %284 = vector.extract_strided_slice %270 {offsets = [2, 0, 0], sizes = [6, 16, 128], strides = [1, 1, 1]} : vector<12x16x128xf32> to vector<6x16x128xf32>
    %285 = vector.extract_strided_slice %21 {offsets = [2, 5, 0], sizes = [1, 1, 128], strides = [1, 1, 1]} : vector<7x7x128xf32> to vector<1x1x128xf32>
    %286 = vector.shape_cast %285 : vector<1x1x128xf32> to vector<128xf32>
    %287 = vector.shape_cast %286 : vector<128xf32> to vector<1x1x128xf32>
    %288 = vector.broadcast %287 : vector<1x1x128xf32> to vector<6x16x128xf32>
    %289 = arith.mulf %284, %288 : vector<6x16x128xf32>
    %290 = arith.addf %283, %289 : vector<6x16x128xf32>
    %291 = vector.extract_strided_slice %270 {offsets = [3, 0, 0], sizes = [6, 16, 128], strides = [1, 1, 1]} : vector<12x16x128xf32> to vector<6x16x128xf32>
    %292 = vector.extract_strided_slice %21 {offsets = [3, 5, 0], sizes = [1, 1, 128], strides = [1, 1, 1]} : vector<7x7x128xf32> to vector<1x1x128xf32>
    %293 = vector.shape_cast %292 : vector<1x1x128xf32> to vector<128xf32>
    %294 = vector.shape_cast %293 : vector<128xf32> to vector<1x1x128xf32>
    %295 = vector.broadcast %294 : vector<1x1x128xf32> to vector<6x16x128xf32>
    %296 = arith.mulf %291, %295 : vector<6x16x128xf32>
    %297 = arith.addf %290, %296 : vector<6x16x128xf32>
    %298 = vector.extract_strided_slice %270 {offsets = [4, 0, 0], sizes = [6, 16, 128], strides = [1, 1, 1]} : vector<12x16x128xf32> to vector<6x16x128xf32>
    %299 = vector.extract_strided_slice %21 {offsets = [4, 5, 0], sizes = [1, 1, 128], strides = [1, 1, 1]} : vector<7x7x128xf32> to vector<1x1x128xf32>
    %300 = vector.shape_cast %299 : vector<1x1x128xf32> to vector<128xf32>
    %301 = vector.shape_cast %300 : vector<128xf32> to vector<1x1x128xf32>
    %302 = vector.broadcast %301 : vector<1x1x128xf32> to vector<6x16x128xf32>
    %303 = arith.mulf %298, %302 : vector<6x16x128xf32>
    %304 = arith.addf %297, %303 : vector<6x16x128xf32>
    %305 = vector.extract_strided_slice %270 {offsets = [5, 0, 0], sizes = [6, 16, 128], strides = [1, 1, 1]} : vector<12x16x128xf32> to vector<6x16x128xf32>
    %306 = vector.extract_strided_slice %21 {offsets = [5, 5, 0], sizes = [1, 1, 128], strides = [1, 1, 1]} : vector<7x7x128xf32> to vector<1x1x128xf32>
    %307 = vector.shape_cast %306 : vector<1x1x128xf32> to vector<128xf32>
    %308 = vector.shape_cast %307 : vector<128xf32> to vector<1x1x128xf32>
    %309 = vector.broadcast %308 : vector<1x1x128xf32> to vector<6x16x128xf32>
    %310 = arith.mulf %305, %309 : vector<6x16x128xf32>
    %311 = arith.addf %304, %310 : vector<6x16x128xf32>
    %312 = vector.extract_strided_slice %270 {offsets = [6, 0, 0], sizes = [6, 16, 128], strides = [1, 1, 1]} : vector<12x16x128xf32> to vector<6x16x128xf32>
    %313 = vector.extract_strided_slice %21 {offsets = [6, 5, 0], sizes = [1, 1, 128], strides = [1, 1, 1]} : vector<7x7x128xf32> to vector<1x1x128xf32>
    %314 = vector.shape_cast %313 : vector<1x1x128xf32> to vector<128xf32>
    %315 = vector.shape_cast %314 : vector<128xf32> to vector<1x1x128xf32>
    %316 = vector.broadcast %315 : vector<1x1x128xf32> to vector<6x16x128xf32>
    %317 = arith.mulf %312, %316 : vector<6x16x128xf32>
    %318 = arith.addf %311, %317 : vector<6x16x128xf32>
    %319 = arith.addf %219, %318 : vector<6x16x128xf32>
    %c0_33 = arith.constant 0 : index
    %c19 = arith.constant 19 : index
    %c0_34 = arith.constant 0 : index
    %320 = vector.load %arg12[%c0_33, %c19, %c0_34] : memref<12x35x128xf32, #tpu.memory_space<vmem>>, vector<12x16x128xf32>
    %321 = vector.extract_strided_slice %320 {offsets = [0, 0, 0], sizes = [6, 16, 128], strides = [1, 1, 1]} : vector<12x16x128xf32> to vector<6x16x128xf32>
    %322 = vector.extract_strided_slice %21 {offsets = [0, 6, 0], sizes = [1, 1, 128], strides = [1, 1, 1]} : vector<7x7x128xf32> to vector<1x1x128xf32>
    %323 = vector.shape_cast %322 : vector<1x1x128xf32> to vector<128xf32>
    %324 = vector.shape_cast %323 : vector<128xf32> to vector<1x1x128xf32>
    %325 = vector.broadcast %324 : vector<1x1x128xf32> to vector<6x16x128xf32>
    %326 = arith.mulf %321, %325 : vector<6x16x128xf32>
    %327 = vector.extract_strided_slice %320 {offsets = [1, 0, 0], sizes = [6, 16, 128], strides = [1, 1, 1]} : vector<12x16x128xf32> to vector<6x16x128xf32>
    %328 = vector.extract_strided_slice %21 {offsets = [1, 6, 0], sizes = [1, 1, 128], strides = [1, 1, 1]} : vector<7x7x128xf32> to vector<1x1x128xf32>
    %329 = vector.shape_cast %328 : vector<1x1x128xf32> to vector<128xf32>
    %330 = vector.shape_cast %329 : vector<128xf32> to vector<1x1x128xf32>
    %331 = vector.broadcast %330 : vector<1x1x128xf32> to vector<6x16x128xf32>
    %332 = arith.mulf %327, %331 : vector<6x16x128xf32>
    %333 = arith.addf %326, %332 : vector<6x16x128xf32>
    %334 = vector.extract_strided_slice %320 {offsets = [2, 0, 0], sizes = [6, 16, 128], strides = [1, 1, 1]} : vector<12x16x128xf32> to vector<6x16x128xf32>
    %335 = vector.extract_strided_slice %21 {offsets = [2, 6, 0], sizes = [1, 1, 128], strides = [1, 1, 1]} : vector<7x7x128xf32> to vector<1x1x128xf32>
    %336 = vector.shape_cast %335 : vector<1x1x128xf32> to vector<128xf32>
    %337 = vector.shape_cast %336 : vector<128xf32> to vector<1x1x128xf32>
    %338 = vector.broadcast %337 : vector<1x1x128xf32> to vector<6x16x128xf32>
    %339 = arith.mulf %334, %338 : vector<6x16x128xf32>
    %340 = arith.addf %333, %339 : vector<6x16x128xf32>
    %341 = vector.extract_strided_slice %320 {offsets = [3, 0, 0], sizes = [6, 16, 128], strides = [1, 1, 1]} : vector<12x16x128xf32> to vector<6x16x128xf32>
    %342 = vector.extract_strided_slice %21 {offsets = [3, 6, 0], sizes = [1, 1, 128], strides = [1, 1, 1]} : vector<7x7x128xf32> to vector<1x1x128xf32>
    %343 = vector.shape_cast %342 : vector<1x1x128xf32> to vector<128xf32>
    %344 = vector.shape_cast %343 : vector<128xf32> to vector<1x1x128xf32>
    %345 = vector.broadcast %344 : vector<1x1x128xf32> to vector<6x16x128xf32>
    %346 = arith.mulf %341, %345 : vector<6x16x128xf32>
    %347 = arith.addf %340, %346 : vector<6x16x128xf32>
    %348 = vector.extract_strided_slice %320 {offsets = [4, 0, 0], sizes = [6, 16, 128], strides = [1, 1, 1]} : vector<12x16x128xf32> to vector<6x16x128xf32>
    %349 = vector.extract_strided_slice %21 {offsets = [4, 6, 0], sizes = [1, 1, 128], strides = [1, 1, 1]} : vector<7x7x128xf32> to vector<1x1x128xf32>
    %350 = vector.shape_cast %349 : vector<1x1x128xf32> to vector<128xf32>
    %351 = vector.shape_cast %350 : vector<128xf32> to vector<1x1x128xf32>
    %352 = vector.broadcast %351 : vector<1x1x128xf32> to vector<6x16x128xf32>
    %353 = arith.mulf %348, %352 : vector<6x16x128xf32>
    %354 = arith.addf %347, %353 : vector<6x16x128xf32>
    %355 = vector.extract_strided_slice %320 {offsets = [5, 0, 0], sizes = [6, 16, 128], strides = [1, 1, 1]} : vector<12x16x128xf32> to vector<6x16x128xf32>
    %356 = vector.extract_strided_slice %21 {offsets = [5, 6, 0], sizes = [1, 1, 128], strides = [1, 1, 1]} : vector<7x7x128xf32> to vector<1x1x128xf32>
    %357 = vector.shape_cast %356 : vector<1x1x128xf32> to vector<128xf32>
    %358 = vector.shape_cast %357 : vector<128xf32> to vector<1x1x128xf32>
    %359 = vector.broadcast %358 : vector<1x1x128xf32> to vector<6x16x128xf32>
    %360 = arith.mulf %355, %359 : vector<6x16x128xf32>
    %361 = arith.addf %354, %360 : vector<6x16x128xf32>
    %362 = vector.extract_strided_slice %320 {offsets = [6, 0, 0], sizes = [6, 16, 128], strides = [1, 1, 1]} : vector<12x16x128xf32> to vector<6x16x128xf32>
    %363 = vector.extract_strided_slice %21 {offsets = [6, 6, 0], sizes = [1, 1, 128], strides = [1, 1, 1]} : vector<7x7x128xf32> to vector<1x1x128xf32>
    %364 = vector.shape_cast %363 : vector<1x1x128xf32> to vector<128xf32>
    %365 = vector.shape_cast %364 : vector<128xf32> to vector<1x1x128xf32>
    %366 = vector.broadcast %365 : vector<1x1x128xf32> to vector<6x16x128xf32>
    %367 = arith.mulf %362, %366 : vector<6x16x128xf32>
    %368 = arith.addf %361, %367 : vector<6x16x128xf32>
    %369 = arith.addf %269, %368 : vector<6x16x128xf32>
    %370 = arith.addf %369, %319 : vector<6x16x128xf32>
    %c0_35 = arith.constant 0 : index
    %c0_36 = arith.constant 0 : index
    %371 = vector.load %arg6[%c0_35, %c0_36] : memref<1x128xf32, #tpu.memory_space<vmem>>, vector<1x128xf32>
    %372 = vector.shape_cast %371 : vector<1x128xf32> to vector<128xf32>
    %373 = vector.shape_cast %372 : vector<128xf32> to vector<1x1x128xf32>
    %374 = vector.broadcast %373 : vector<1x1x128xf32> to vector<6x16x128xf32>
    %375 = arith.addf %370, %374 : vector<6x16x128xf32>
    %cst_37 = arith.constant dense<0.000000e+00> : vector<6x16xf32>
    %376 = vector.multi_reduction <add>, %375, %cst_37 [2] : vector<6x16x128xf32> to vector<6x16xf32>
    %377 = vector.shape_cast %376 : vector<6x16xf32> to vector<6x16x1xf32>
    %cst_38 = arith.constant 1.250000e-01 : f32
    %378 = vector.broadcast %cst_38 : f32 to vector<6x16x1xf32>
    %379 = arith.mulf %377, %378 : vector<6x16x1xf32>
    %380 = vector.broadcast %379 : vector<6x16x1xf32> to vector<6x16x128xf32>
    %381 = arith.subf %375, %380 : vector<6x16x128xf32>
    %382 = arith.mulf %381, %381 : vector<6x16x128xf32>
    %cst_39 = arith.constant dense<0.000000e+00> : vector<6x16xf32>
    %383 = vector.multi_reduction <add>, %382, %cst_39 [2] : vector<6x16x128xf32> to vector<6x16xf32>
    %384 = vector.shape_cast %383 : vector<6x16xf32> to vector<6x16x1xf32>
    %385 = arith.mulf %379, %379 : vector<6x16x1xf32>
    %cst_40 = arith.constant 1.200000e+02 : f32
    %386 = vector.broadcast %cst_40 : f32 to vector<6x16x1xf32>
    %387 = arith.mulf %386, %385 : vector<6x16x1xf32>
    %388 = arith.subf %384, %387 : vector<6x16x1xf32>
    %cst_41 = arith.constant 1.250000e-01 : f32
    %389 = vector.broadcast %cst_41 : f32 to vector<6x16x1xf32>
    %390 = arith.mulf %388, %389 : vector<6x16x1xf32>
    %cst_42 = arith.constant 9.99999997E-7 : f32
    %391 = vector.broadcast %cst_42 : f32 to vector<6x16x1xf32>
    %392 = arith.addf %390, %391 : vector<6x16x1xf32>
    %393 = math.rsqrt %392 : vector<6x16x1xf32>
    %394 = vector.broadcast %393 : vector<6x16x1xf32> to vector<6x16x128xf32>
    %395 = arith.mulf %381, %394 : vector<6x16x128xf32>
    %396 = vector.shape_cast %395 : vector<6x16x128xf32> to vector<96x128xf32>
    %c0_43 = arith.constant 0 : index
    %c0_44 = arith.constant 0 : index
    %397 = vector.load %arg7[%c0_43, %c0_44] : memref<128x128xf32, #tpu.memory_space<vmem>>, vector<128x128xf32>
    %cst_45 = arith.constant dense<0.000000e+00> : vector<96x128xf32>
    %398 = tpu.matmul %396, %397, %cst_45 {dimension_numbers = #tpu.dot_dimension_numbers<[1], [0], [0], [1], [0, 0, 1, 1], [], []>} : vector<96x128xf32>, vector<128x128xf32>, vector<96x128xf32> -> vector<96x128xf32>
    %c0_46 = arith.constant 0 : index
    %c0_47 = arith.constant 0 : index
    %399 = vector.load %arg8[%c0_46, %c0_47] : memref<1x128xf32, #tpu.memory_space<vmem>>, vector<1x128xf32>
    %400 = vector.shape_cast %399 : vector<1x128xf32> to vector<128xf32>
    %401 = vector.shape_cast %400 : vector<128xf32> to vector<1x128xf32>
    %402 = vector.broadcast %401 : vector<1x128xf32> to vector<96x128xf32>
    %403 = arith.addf %398, %402 : vector<96x128xf32>
    %404 = arith.mulf %403, %403 : vector<96x128xf32>
    %405 = arith.mulf %403, %404 : vector<96x128xf32>
    %cst_48 = arith.constant 4.471500e-02 : f32
    %406 = vector.broadcast %cst_48 : f32 to vector<96x128xf32>
    %407 = arith.mulf %406, %405 : vector<96x128xf32>
    %408 = arith.addf %403, %407 : vector<96x128xf32>
    %cst_49 = arith.constant 0.797884583 : f32
    %409 = vector.broadcast %cst_49 : f32 to vector<96x128xf32>
    %410 = arith.mulf %409, %408 : vector<96x128xf32>
    %411 = math.tanh %410 : vector<96x128xf32>
    %cst_50 = arith.constant 1.000000e+00 : f32
    %412 = vector.broadcast %cst_50 : f32 to vector<96x128xf32>
    %413 = arith.addf %412, %411 : vector<96x128xf32>
    %cst_51 = arith.constant 5.000000e-01 : f32
    %414 = vector.broadcast %cst_51 : f32 to vector<96x128xf32>
    %415 = arith.mulf %414, %413 : vector<96x128xf32>
    %416 = arith.mulf %403, %415 : vector<96x128xf32>
    %c0_52 = arith.constant 0 : index
    %c0_53 = arith.constant 0 : index
    %417 = vector.load %arg9[%c0_52, %c0_53] : memref<128x128xf32, #tpu.memory_space<vmem>>, vector<128x128xf32>
    %cst_54 = arith.constant dense<0.000000e+00> : vector<96x128xf32>
    %418 = tpu.matmul %416, %417, %cst_54 {dimension_numbers = #tpu.dot_dimension_numbers<[1], [0], [0], [1], [0, 0, 1, 1], [], []>} : vector<96x128xf32>, vector<128x128xf32>, vector<96x128xf32> -> vector<96x128xf32>
    %c0_55 = arith.constant 0 : index
    %c0_56 = arith.constant 0 : index
    %419 = vector.load %arg10[%c0_55, %c0_56] : memref<1x128xf32, #tpu.memory_space<vmem>>, vector<1x128xf32>
    %420 = vector.shape_cast %419 : vector<1x128xf32> to vector<128xf32>
    %421 = vector.shape_cast %420 : vector<128xf32> to vector<1x128xf32>
    %422 = vector.broadcast %421 : vector<1x128xf32> to vector<96x128xf32>
    %423 = arith.addf %418, %422 : vector<96x128xf32>
    %c0_57 = arith.constant 0 : index
    %c0_58 = arith.constant 0 : index
    %c0_59 = arith.constant 0 : index
    %c0_60 = arith.constant 0 : index
    %424 = vector.load %arg2[%c0_57, %c0_58, %c0_59, %c0_60] : memref<1x6x16x128xf32, #tpu.memory_space<vmem>>, vector<1x6x16x128xf32>
    %425 = vector.shape_cast %424 : vector<1x6x16x128xf32> to vector<6x16x128xf32>
    %426 = vector.shape_cast %423 : vector<96x128xf32> to vector<6x16x128xf32>
    %427 = arith.addf %425, %426 : vector<6x16x128xf32>
    %c0_61 = arith.constant 0 : index
    %c0_62 = arith.constant 0 : index
    %c0_63 = arith.constant 0 : index
    %c0_64 = arith.constant 0 : index
    %428 = vector.load %arg11[%c0_61, %c0_62, %c0_63, %c0_64] : memref<1x6x16x128xf32, #tpu.memory_space<vmem>>, vector<1x6x16x128xf32>
    %429 = vector.shape_cast %428 : vector<1x6x16x128xf32> to vector<6x16x128xf32>
    %430 = vector.shape_cast %427 : vector<6x16x128xf32> to vector<1x6x16x128xf32>
    tpu.vector_store %arg11[%c0_61, %c0_62, %c0_63, %c0_64], %430 {strides = array<i32>} : memref<1x6x16x128xf32, #tpu.memory_space<vmem>>, vector<1x6x16x128xf32>,
    return
  }
  func.func @transform_0(%arg0: i32, %arg1: i32) -> (i32, i32, i32, i32) {
    %c0_i32 = arith.constant 0 : i32
    %c0_i32_0 = arith.constant 0 : i32
    %c0_i32_1 = arith.constant 0 : i32
    return %arg0, %arg1, %c0_i32, %c0_i32_0 : i32, i32, i32, i32
  }
  func.func @transform_1(%arg0: i32, %arg1: i32) -> (i32, i32, i32, i32) {
    %c2_i32 = arith.constant 2 : i32
    %0 = arith.muli %arg1, %c2_i32 : i32
    %c1_i32 = arith.constant 1 : i32
    %1 = arith.subi %0, %c1_i32 : i32
    %c0_i32 = arith.constant 0 : i32
    %2 = arith.maxsi %1, %c0_i32 : i32
    %c0_i32_0 = arith.constant 0 : i32
    %c0_i32_1 = arith.constant 0 : i32
    %c0_i32_2 = arith.constant 0 : i32
    return %arg0, %2, %c0_i32_0, %c0_i32_1 : i32, i32, i32, i32
  }
  func.func @transform_2(%arg0: i32, %arg1: i32) -> (i32, i32, i32, i32) {
    %c1_i32 = arith.constant 1 : i32
    %0 = arith.addi %arg1, %c1_i32 : i32
    %c2_i32 = arith.constant 2 : i32
    %1 = arith.muli %0, %c2_i32 : i32
    %c5_i32 = arith.constant 5 : i32
    %2 = arith.minsi %1, %c5_i32 : i32
    %c0_i32 = arith.constant 0 : i32
    %c0_i32_0 = arith.constant 0 : i32
    %c0_i32_1 = arith.constant 0 : i32
    return %arg0, %2, %c0_i32, %c0_i32_0 : i32, i32, i32, i32
  }
  func.func @transform_3(%arg0: i32, %arg1: i32) -> (i32, i32, i32) {
    %c0_i32 = arith.constant 0 : i32
    %c0_i32_0 = arith.constant 0 : i32
    %c0_i32_1 = arith.constant 0 : i32
    %c0_i32_2 = arith.constant 0 : i32
    return %c0_i32, %c0_i32_0, %c0_i32_1 : i32, i32, i32
  }
  func.func @transform_4(%arg0: i32, %arg1: i32) -> (i32, i32) {
    %c0_i32 = arith.constant 0 : i32
    %c0_i32_0 = arith.constant 0 : i32
    %c0_i32_1 = arith.constant 0 : i32
    return %c0_i32, %c0_i32_0 : i32, i32
  }
  func.func @transform_5(%arg0: i32, %arg1: i32) -> (i32, i32) {
    %c0_i32 = arith.constant 0 : i32
    %c0_i32_0 = arith.constant 0 : i32
    %c0_i32_1 = arith.constant 0 : i32
    return %c0_i32, %c0_i32_0 : i32, i32
  }
  func.func @transform_6(%arg0: i32, %arg1: i32) -> (i32, i32) {
    %c0_i32 = arith.constant 0 : i32
    %c0_i32_0 = arith.constant 0 : i32
    %c0_i32_1 = arith.constant 0 : i32
    return %c0_i32, %c0_i32_0 : i32, i32
  }
  func.func @transform_7(%arg0: i32, %arg1: i32) -> (i32, i32) {
    %c0_i32 = arith.constant 0 : i32
    %c0_i32_0 = arith.constant 0 : i32
    %c0_i32_1 = arith.constant 0 : i32
    return %c0_i32, %c0_i32_0 : i32, i32
  }
  func.func @transform_8(%arg0: i32, %arg1: i32) -> (i32, i32) {
    %c0_i32 = arith.constant 0 : i32
    %c0_i32_0 = arith.constant 0 : i32
    %c0_i32_1 = arith.constant 0 : i32
    return %c0_i32, %c0_i32_0 : i32, i32
  }
  func.func @transform_9(%arg0: i32, %arg1: i32) -> (i32, i32, i32, i32) {
    %c0_i32 = arith.constant 0 : i32
    %c0_i32_0 = arith.constant 0 : i32
    %c0_i32_1 = arith.constant 0 : i32
    return %arg0, %arg1, %c0_i32, %c0_i32_0 : i32, i32, i32, i32
  }
}

</mosaic_0001>

<llo_original>
// kernel: tpu_custom_call.1
$region0: #{tpu_custom_call.1}
  #allocation0 [shape = 'u32[]', space=smem, size = 0x4, offset = 0x4, fixed_abs, tag = 'smem constant byte address 0x4 - core index']
  #allocation1 [shape = 'u32[72,128]{1,0:T(1,128)}', space=vmem, size = 0x9000, scoped, tag = 'internal scratch']
  #allocation2 [shape = 'f32[12,35,128]{2,1,0:T(8,128)}', space=vmem, size = 0x3c000, scoped, tag = 'scratch operand']
  %s0 = inlined_call_operand.hbm [shape: f32[2,18,16,128], index: 0, kind: input, shape index: {}]
  %s1 = inlined_call_operand.hbm [shape: f32[2,18,16,128], index: 1, kind: input, shape index: {}]
  %s2 = inlined_call_operand.hbm [shape: f32[2,18,16,128], index: 2, kind: input, shape index: {}]
  %s3 = inlined_call_operand.hbm [shape: f32[7,7,128], index: 3, kind: input, shape index: {}]
  %s4 = inlined_call_operand.vmem [shape: f32[1,128], index: 4, kind: input, shape index: {}]
  %s5 = inlined_call_operand.hbm [shape: f32[128,128], index: 5, kind: input, shape index: {}]
  %s6 = inlined_call_operand.vmem [shape: f32[1,128], index: 6, kind: input, shape index: {}]
  %s7 = inlined_call_operand.hbm [shape: f32[128,128], index: 7, kind: input, shape index: {}]
  %s8 = inlined_call_operand.vmem [shape: f32[1,128], index: 8, kind: input, shape index: {}]
  %s9 = inlined_call_operand.hbm [shape: f32[2,18,16,128], index: 9, kind: output, shape index: {}]
  %s10 = sld [smem:[#allocation0]]
  $region109: #{tpu_custom_call.1} parent=0
    _
  %s12 = ssub.s32 1, %s10
  %s13 = scalar_select 0, %s12, %s10
  $region1: #{tpu_custom_call.1} parent=0
    #allocation3 [shape = 'u8[98304]{0}', space=vmem, size = 0x18000, scoped, tag = 'input window, operand 0']
    #allocation4 [shape = 's32[2]{0}', space=sflag, size = 0x8, scoped, tag = 'scoped memory for tpu_custom_call.1']
    #allocation5 [shape = 's32[2]{0}', space=sflag, size = 0x8, scoped, tag = 'scoped memory for tpu_custom_call.1']
    #allocation6 [shape = 'u8[49152]{0}', space=vmem, size = 0xc000, scoped, tag = 'input window, operand 1']
    #allocation7 [shape = 's32[2]{0}', space=sflag, size = 0x8, scoped, tag = 'scoped memory for tpu_custom_call.1']
    #allocation8 [shape = 'u8[49152]{0}', space=vmem, size = 0xc000, scoped, tag = 'input window, operand 2']
    #allocation9 [shape = 'u8[28672]{0}', space=vmem, size = 0x7000, scoped, tag = 'input window, operand 3, single buffered']
    #allocation10 [shape = 's32[1]{0}', space=sflag, size = 0x4, scoped, tag = 'scoped memory for tpu_custom_call.1']
    #allocation11 [shape = 'u8[65536]{0}', space=vmem, size = 0x10000, scoped, tag = 'input window, operand 5, single buffered']
    #allocation12 [shape = 'u8[65536]{0}', space=vmem, size = 0x10000, scoped, tag = 'input window, operand 7, single buffered']
    #allocation13 [shape = 's32[1]{0}', space=sflag, size = 0x4, scoped, tag = 'scoped memory for tpu_custom_call.1']
    #allocation14 [shape = 'u8[98304]{0}', space=vmem, size = 0x18000, scoped, tag = 'output window, operand 0']
    %14 = vsyncpa [#allocation4], 0
    %s15 = scalar_lea.sflag [#allocation4], 1
    %16 = vsyncpa %s15, 0
    %17 = vsyncpa [#allocation7], 0
    %s18 = scalar_lea.sflag [#allocation7], 1
    %19 = vsyncpa %s18, 0
    %20 = vsyncpa [#allocation10], 0
    %21 = vsyncpa [#allocation13], 0
    %22 = vsyncpa [#allocation5], 0
    %s23 = scalar_lea.sflag [#allocation5], 1
    %24 = vsyncpa %s23, 0
    loop: start=0, step=1, limit=8
    $region2: #{tpu_custom_call.1} parent=1 // loop_pre_header
      _
    $region3: #{tpu_custom_call.1} parent=1 // loop_header
      %s26 = sphi 0, %s30
      %p27 = scmp.ge.s32.totalorder %s26, 8
      %s33 = sphi 0, %s45
      %s34 = sphi 0, %s41
      %s35 = sphi 0, %s33
      %s36 = sphi 0, %s34
      %s37 = sphi 0, %s35
      %s38 = sphi 0, %s36
      %s50 = sphi 0, %s52
      %s53 = sphi 0, %s50
      %s54 = sphi 0, %s53
      %s70 = sphi 0, %s54
      %s86 = sphi 0, %s88
      %s89 = sphi 0, %s86
      %s90 = sphi 0, %s89
      %s106 = sphi 0, %s90
      %s122 = sphi 0, %s124
      %s125 = sphi 0, %s122
      %s126 = sphi 0, %s125
      %s142 = sphi 0, %s126
      %s146 = sphi 0, %s146
      %s148 = sphi 0, %s146
      %s149 = sphi 0, %s148
      %s163 = sphi 0, %s149
      %s167 = sphi 0, %s167
      %s169 = sphi 0, %s167
      %s170 = sphi 0, %s169
      %s184 = sphi 0, %s170
      %s188 = sphi 0, %s188
      %s190 = sphi 0, %s188
      %s191 = sphi 0, %s190
      %s205 = sphi 0, %s191
      %s209 = sphi 0, %s209
      %s211 = sphi 0, %s209
      %s212 = sphi 0, %s211
      %s226 = sphi 0, %s212
      %s230 = sphi 0, %s230
      %s232 = sphi 0, %s230
      %s233 = sphi 0, %s232
      %s247 = sphi 0, %s233
      %s251 = sphi 0, %s251
      %s253 = sphi 0, %s251
      %s254 = sphi 0, %s253
      %s268 = sphi 0, %s254
      %s276 = sphi 0, %s278
      %s279 = sphi 0, %s276
      %s280 = sphi 0, %s279
      %s296 = sphi 0, %s280
    $region4: #{tpu_custom_call.1} parent=1 // loop_header_branch
      %29 = sbr.rel (%p27) target = $region8
    $region5: #{tpu_custom_call.1} parent=1 // loop_body
      %s31 = ssub.s32 %s26, 1
      %s32 = ssub.s32 %s26, 2
      %s39 = sadd.s32 1, %s34
      %p40 = scmp.ge.s32.totalorder %s39, 3
      %s41 = scalar_select %p40, 0, %s39
      %s42 = sadd.s32 1, %s33
      %s43 = scalar_select %p40, %s42, %s33
      %p44 = scmp.ge.s32.totalorder %s43, 2
      %s45 = scalar_select %p44, 0, %s43
      %s46 = ssub.s32 %s33, %s45
      %s47 = ssub.s32 %s34, %s41
      %s48 = sor.u32 %s46, %s47
      %p49 = scmp.eq.s32.totalorder %s48, 0
      %s51 = sadd.s32 %s50, 1
      %s52 = scalar_select %p49, %s50, %s51
      %p55 = pneg %p49
      %p56 = scmp.eq.s32.totalorder %s26, 5
      %p57 = por %p55, %p56
      %p58 = scmp.ne.s32.totalorder %s50, %s53
      %p59 = scmp.eq.s32.totalorder %s26, 0
      %p60 = por %p58, %p59
      %p61 = scmp.ne.s32.totalorder %s50, %s53
      %p62 = scmp.eq.s32.totalorder %s31, 5
      %p63 = por %p61, %p62
      %p64 = scmp.ne.s32.totalorder %s53, %s54
      %p65 = scmp.eq.s32.totalorder %s31, 0
      %p66 = por %p64, %p65
      %p67 = scmp.ne.s32.totalorder %s53, %s54
      %p68 = scmp.eq.s32.totalorder %s32, 5
      %p69 = por %p67, %p68
      %p71 = scmp.ne.s32.totalorder %s54, %s70
      %p72 = scmp.eq.s32.totalorder %s32, 0
      %p73 = por %p71, %p72
      %s74 = smul.u32 %s34, 2
      %s75 = ssub.s32 %s74, 1
      %p76 = scmp.gt.s32.totalorder %s75, 0
      %s77 = scalar_select %p76, %s75, 0
      %s78 = smul.u32 %s41, 2
      %s79 = ssub.s32 %s78, 1
      %p80 = scmp.gt.s32.totalorder %s79, 0
      %s81 = scalar_select %p80, %s79, 0
      %s82 = ssub.s32 %s33, %s45
      %s83 = ssub.s32 %s77, %s81
      %s84 = sor.u32 %s82, %s83
      %p85 = scmp.eq.s32.totalorder %s84, 0
      %s87 = sadd.s32 %s86, 1
      %s88 = scalar_select %p85, %s86, %s87
      %p91 = pneg %p85
      %p92 = scmp.eq.s32.totalorder %s26, 5
      %p93 = por %p91, %p92
      %p94 = scmp.ne.s32.totalorder %s86, %s89
      %p95 = scmp.eq.s32.totalorder %s26, 0
      %p96 = por %p94, %p95
      %p97 = scmp.ne.s32.totalorder %s86, %s89
      %p98 = scmp.eq.s32.totalorder %s31, 5
      %p99 = por %p97, %p98
      %p100 = scmp.ne.s32.totalorder %s89, %s90
      %p101 = scmp.eq.s32.totalorder %s31, 0
      %p102 = por %p100, %p101
      %p103 = scmp.ne.s32.totalorder %s89, %s90
      %p104 = scmp.eq.s32.totalorder %s32, 5
      %p105 = por %p103, %p104
      %p107 = scmp.ne.s32.totalorder %s90, %s106
      %p108 = scmp.eq.s32.totalorder %s32, 0
      %p109 = por %p107, %p108
      %s110 = sadd.s32 %s34, 1
      %s111 = smul.u32 %s110, 2
      %p112 = scmp.lt.s32.totalorder %s111, 5
      %s113 = scalar_select %p112, %s111, 5
      %s114 = sadd.s32 %s41, 1
      %s115 = smul.u32 %s114, 2
      %p116 = scmp.lt.s32.totalorder %s115, 5
      %s117 = scalar_select %p116, %s115, 5
      %s118 = ssub.s32 %s33, %s45
      %s119 = ssub.s32 %s113, %s117
      %s120 = sor.u32 %s118, %s119
      %p121 = scmp.eq.s32.totalorder %s120, 0
      %s123 = sadd.s32 %s122, 1
      %s124 = scalar_select %p121, %s122, %s123
      %p127 = pneg %p121
      %p128 = scmp.eq.s32.totalorder %s26, 5
      %p129 = por %p127, %p128
      %p130 = scmp.ne.s32.totalorder %s122, %s125
      %p131 = scmp.eq.s32.totalorder %s26, 0
      %p132 = por %p130, %p131
      %p133 = scmp.ne.s32.totalorder %s122, %s125
      %p134 = scmp.eq.s32.totalorder %s31, 5
      %p135 = por %p133, %p134
      %p136 = scmp.ne.s32.totalorder %s125, %s126
      %p137 = scmp.eq.s32.totalorder %s31, 0
      %p138 = por %p136, %p137
      %p139 = scmp.ne.s32.totalorder %s125, %s126
      %p140 = scmp.eq.s32.totalorder %s32, 5
      %p141 = por %p139, %p140
      %p143 = scmp.ne.s32.totalorder %s126, %s142
      %p144 = scmp.eq.s32.totalorder %s32, 0
      %p145 = por %p143, %p144
      %s147 = sadd.s32 %s146, 1
      %p150 = scmp.eq.s32.totalorder %s26, 5
      %p151 = scmp.ne.s32.totalorder %s146, %s148
      %p152 = scmp.eq.s32.totalorder %s26, 0
      %p153 = por %p151, %p152
      %p154 = scmp.ne.s32.totalorder %s146, %s148
      %p155 = scmp.eq.s32.totalorder %s31, 5
      %p156 = por %p154, %p155
      %p157 = scmp.ne.s32.totalorder %s148, %s149
      %p158 = scmp.eq.s32.totalorder %s31, 0
      %p159 = por %p157, %p158
      %p160 = scmp.ne.s32.totalorder %s148, %s149
      %p161 = scmp.eq.s32.totalorder %s32, 5
      %p162 = por %p160, %p161
      %p164 = scmp.ne.s32.totalorder %s149, %s163
      %p165 = scmp.eq.s32.totalorder %s32, 0
      %p166 = por %p164, %p165
      %s168 = sadd.s32 %s167, 1
      %p171 = scmp.eq.s32.totalorder %s26, 5
      %p172 = scmp.ne.s32.totalorder %s167, %s169
      %p173 = scmp.eq.s32.totalorder %s26, 0
      %p174 = por %p172, %p173
      %p175 = scmp.ne.s32.totalorder %s167, %s169
      %p176 = scmp.eq.s32.totalorder %s31, 5
      %p177 = por %p175, %p176
      %p178 = scmp.ne.s32.totalorder %s169, %s170
      %p179 = scmp.eq.s32.totalorder %s31, 0
      %p180 = por %p178, %p179
      %p181 = scmp.ne.s32.totalorder %s169, %s170
      %p182 = scmp.eq.s32.totalorder %s32, 5
      %p183 = por %p181, %p182
      %p185 = scmp.ne.s32.totalorder %s170, %s184
      %p186 = scmp.eq.s32.totalorder %s32, 0
      %p187 = por %p185, %p186
      %s189 = sadd.s32 %s188, 1
      %p192 = scmp.eq.s32.totalorder %s26, 5
      %p193 = scmp.ne.s32.totalorder %s188, %s190
      %p194 = scmp.eq.s32.totalorder %s26, 0
      %p195 = por %p193, %p194
      %p196 = scmp.ne.s32.totalorder %s188, %s190
      %p197 = scmp.eq.s32.totalorder %s31, 5
      %p198 = por %p196, %p197
      %p199 = scmp.ne.s32.totalorder %s190, %s191
      %p200 = scmp.eq.s32.totalorder %s31, 0
      %p201 = por %p199, %p200
      %p202 = scmp.ne.s32.totalorder %s190, %s191
      %p203 = scmp.eq.s32.totalorder %s32, 5
      %p204 = por %p202, %p203
      %p206 = scmp.ne.s32.totalorder %s191, %s205
      %p207 = scmp.eq.s32.totalorder %s32, 0
      %p208 = por %p206, %p207
      %s210 = sadd.s32 %s209, 1
      %p213 = scmp.eq.s32.totalorder %s26, 5
      %p214 = scmp.ne.s32.totalorder %s209, %s211
      %p215 = scmp.eq.s32.totalorder %s26, 0
      %p216 = por %p214, %p215
      %p217 = scmp.ne.s32.totalorder %s209, %s211
      %p218 = scmp.eq.s32.totalorder %s31, 5
      %p219 = por %p217, %p218
      %p220 = scmp.ne.s32.totalorder %s211, %s212
      %p221 = scmp.eq.s32.totalorder %s31, 0
      %p222 = por %p220, %p221
      %p223 = scmp.ne.s32.totalorder %s211, %s212
      %p224 = scmp.eq.s32.totalorder %s32, 5
      %p225 = por %p223, %p224
      %p227 = scmp.ne.s32.totalorder %s212, %s226
      %p228 = scmp.eq.s32.totalorder %s32, 0
      %p229 = por %p227, %p228
      %s231 = sadd.s32 %s230, 1
      %p234 = scmp.eq.s32.totalorder %s26, 5
      %p235 = scmp.ne.s32.totalorder %s230, %s232
      %p236 = scmp.eq.s32.totalorder %s26, 0
      %p237 = por %p235, %p236
      %p238 = scmp.ne.s32.totalorder %s230, %s232
      %p239 = scmp.eq.s32.totalorder %s31, 5
      %p240 = por %p238, %p239
      %p241 = scmp.ne.s32.totalorder %s232, %s233
      %p242 = scmp.eq.s32.totalorder %s31, 0
      %p243 = por %p241, %p242
      %p244 = scmp.ne.s32.totalorder %s232, %s233
      %p245 = scmp.eq.s32.totalorder %s32, 5
      %p246 = por %p244, %p245
      %p248 = scmp.ne.s32.totalorder %s233, %s247
      %p249 = scmp.eq.s32.totalorder %s32, 0
      %p250 = por %p248, %p249
      %s252 = sadd.s32 %s251, 1
      %p255 = scmp.eq.s32.totalorder %s26, 5
      %p256 = scmp.ne.s32.totalorder %s251, %s253
      %p257 = scmp.eq.s32.totalorder %s26, 0
      %p258 = por %p256, %p257
      %p259 = scmp.ne.s32.totalorder %s251, %s253
      %p260 = scmp.eq.s32.totalorder %s31, 5
      %p261 = por %p259, %p260
      %p262 = scmp.ne.s32.totalorder %s253, %s254
      %p263 = scmp.eq.s32.totalorder %s31, 0
      %p264 = por %p262, %p263
      %p265 = scmp.ne.s32.totalorder %s253, %s254
      %p266 = scmp.eq.s32.totalorder %s32, 5
      %p267 = por %p265, %p266
      %p269 = scmp.ne.s32.totalorder %s254, %s268
      %p270 = scmp.eq.s32.totalorder %s32, 0
      %p271 = por %p269, %p270
      %s272 = ssub.s32 %s33, %s45
      %s273 = ssub.s32 %s34, %s41
      %s274 = sor.u32 %s272, %s273
      %p275 = scmp.eq.s32.totalorder %s274, 0
      %s277 = sadd.s32 %s276, 1
      %s278 = scalar_select %p275, %s276, %s277
      %p281 = pneg %p275
      %p282 = scmp.eq.s32.totalorder %s26, 5
      %p283 = por %p281, %p282
      %p284 = scmp.ne.s32.totalorder %s276, %s279
      %p285 = scmp.eq.s32.totalorder %s26, 0
      %p286 = por %p284, %p285
      %p287 = scmp.ne.s32.totalorder %s276, %s279
      %p288 = scmp.eq.s32.totalorder %s31, 5
      %p289 = por %p287, %p288
      %p290 = scmp.ne.s32.totalorder %s279, %s280
      %p291 = scmp.eq.s32.totalorder %s31, 0
      %p292 = por %p290, %p291
      %p293 = scmp.ne.s32.totalorder %s279, %s280
      %p294 = scmp.eq.s32.totalorder %s32, 5
      %p295 = por %p293, %p294
      %p297 = scmp.ne.s32.totalorder %s280, %s296
      %p298 = scmp.eq.s32.totalorder %s32, 0
      %p299 = por %p297, %p298
      %p300 = scmp.le.s32.totalorder 1, %s26
      %p301 = scmp.lt.s32.totalorder %s26, 7
      %p302 = pnand %p300, %p301
      %p303 = pneg %p302
      // Predicated region
      $region9: #{tpu_custom_call.1} parent=5 // pred_check
        _
      $region10: #{tpu_custom_call.1} parent=5 // pred_check_branch
        %305 = sbr.rel (%p302) target = $region12
      $region11: #{tpu_custom_call.1} parent=5 // pred_region
        %s306 = ssub.s32 %s26, 1
        // Predicated region
        $region13: #{tpu_custom_call.1} parent=11 // pred_check
          %p307 = pneg %p159
        $region14: #{tpu_custom_call.1} parent=11 // pred_check_branch
          %309 = sbr.rel (%p307) target = $region16
        $region15: #{tpu_custom_call.1} parent=11 // pred_region
          %311 = vsyncadd [#allocation10], 0
          %s312 = sshll.u32 %s3, 4
          %s313 = int_to_ptr.hbm [resolvable:$true] %s312
          %s314 = sshll.u32 [#allocation9], 4
          %s315 = int_to_ptr.vmem [resolvable:$true] %s314
          %320 = dma.hbm_to_vmem [thread:$0]  %s313, 896, %s315, [#allocation10], 128, 128, 8
        $region16: #{tpu_custom_call.1} parent=11 // pred_fallthru
          _
        // Predicated region
        $region17: #{tpu_custom_call.1} parent=11 // pred_check
          %p321 = pneg %p180
        $region18: #{tpu_custom_call.1} parent=11 // pred_check_branch
          %323 = sbr.rel (%p321) target = $region20
        $region19: #{tpu_custom_call.1} parent=11 // pred_region
          _
        $region20: #{tpu_custom_call.1} parent=11 // pred_fallthru
          _
        // Predicated region
        $region21: #{tpu_custom_call.1} parent=11 // pred_check
          %p324 = pneg %p201
        $region22: #{tpu_custom_call.1} parent=11 // pred_check_branch
          %326 = sbr.rel (%p324) target = $region24
        $region23: #{tpu_custom_call.1} parent=11 // pred_region
          %328 = vsyncadd [#allocation10], 0
          %s329 = sshll.u32 %s5, 4
          %s330 = int_to_ptr.hbm [resolvable:$true] %s329
          %s331 = sshll.u32 [#allocation11], 4
          %s332 = int_to_ptr.vmem [resolvable:$true] %s331
          %337 = dma.hbm_to_vmem [thread:$0]  %s330, 2048, %s332, [#allocation10], 128, 128, 8
        $region24: #{tpu_custom_call.1} parent=11 // pred_fallthru
          _
        // Predicated region
        $region25: #{tpu_custom_call.1} parent=11 // pred_check
          %p338 = pneg %p222
        $region26: #{tpu_custom_call.1} parent=11 // pred_check_branch
          %340 = sbr.rel (%p338) target = $region28
        $region27: #{tpu_custom_call.1} parent=11 // pred_region
          _
        $region28: #{tpu_custom_call.1} parent=11 // pred_fallthru
          _
        // Predicated region
        $region29: #{tpu_custom_call.1} parent=11 // pred_check
          %p341 = pneg %p243
        $region30: #{tpu_custom_call.1} parent=11 // pred_check_branch
          %343 = sbr.rel (%p341) target = $region32
        $region31: #{tpu_custom_call.1} parent=11 // pred_region
          %345 = vsyncadd [#allocation13], 0
          %s346 = sshll.u32 %s7, 4
          %s347 = int_to_ptr.hbm [resolvable:$true] %s346
          %s348 = sshll.u32 [#allocation12], 4
          %s349 = int_to_ptr.vmem [resolvable:$true] %s348
          %354 = dma.hbm_to_vmem [thread:$0]  %s347, 2048, %s349, [#allocation13], 128, 128, 8
        $region32: #{tpu_custom_call.1} parent=11 // pred_fallthru
          _
        // Predicated region
        $region33: #{tpu_custom_call.1} parent=11 // pred_check
          %p355 = pneg %p264
        $region34: #{tpu_custom_call.1} parent=11 // pred_check_branch
          %357 = sbr.rel (%p355) target = $region36
        $region35: #{tpu_custom_call.1} parent=11 // pred_region
          _
        $region36: #{tpu_custom_call.1} parent=11 // pred_fallthru
          _
      $region12: #{tpu_custom_call.1} parent=5 // pred_fallthru
        _
      %p358 = scmp.lt.s32.totalorder %s26, 6
      // Predicated region
      $region37: #{tpu_custom_call.1} parent=5 // pred_check
        %p359 = pneg %p358
      $region38: #{tpu_custom_call.1} parent=5 // pred_check_branch
        %361 = sbr.rel (%p359) target = $region40
      $region39: #{tpu_custom_call.1} parent=5 // pred_region
        // Predicated region
        $region41: #{tpu_custom_call.1} parent=39 // pred_check
          %p362 = pneg %p60
        $region42: #{tpu_custom_call.1} parent=39 // pred_check_branch
          %364 = sbr.rel (%p362) target = $region44
        $region43: #{tpu_custom_call.1} parent=39 // pred_region
          %s365 = sand.u32 %s50, 1
          %s366 = scalar_lea.sflag [#allocation4], %s365
          %s367 = sand.u32 %s50, 1
          %s368 = smul.addr %s367, 96
          %s369 = scalar_lea.vmem [#allocation3], %s368
          %s370 = smul.u32 6, %s34
          %372 = vsyncadd %s366, 0
          %s373 = smul.addr %s370, 2
          %s374 = smul.addr %s33, 36
          %s375 = sadd.s32 %s373, %s374
          %s376 = smul.addr %s375, 8
          %s377 = scalar_lea.hbm %s0, %s376
          %s378 = sshll.u32 %s377, 4
          %s379 = int_to_ptr.hbm [resolvable:$true] %s378
          %s380 = sshll.u32 %s369, 4
          %s381 = int_to_ptr.vmem [resolvable:$true] %s380
          %386 = dma.hbm_to_vmem [thread:$0]  %s379, 1536, %s381, %s366, 128, 128, 8
        $region44: #{tpu_custom_call.1} parent=39 // pred_fallthru
          _
        // Predicated region
        $region45: #{tpu_custom_call.1} parent=39 // pred_check
          %p387 = pneg %p96
        $region46: #{tpu_custom_call.1} parent=39 // pred_check_branch
          %389 = sbr.rel (%p387) target = $region48
        $region47: #{tpu_custom_call.1} parent=39 // pred_region
          %s390 = sand.u32 %s26, 1
          %s391 = scalar_lea.sflag [#allocation7], %s390
          %s392 = sand.u32 %s86, 1
          %s393 = smul.addr %s392, 48
          %s394 = scalar_lea.vmem [#allocation6], %s393
          %s395 = smul.u32 %s34, 2
          %s396 = ssub.s32 %s395, 1
          %p397 = scmp.gt.s32.totalorder %s396, 0
          %s398 = scalar_select %p397, %s396, 0
          %s399 = smul.u32 3, %s398
          %401 = vsyncadd %s391, 0
          %s402 = smul.addr %s399, 2
          %s403 = smul.addr %s33, 36
          %s404 = sadd.s32 %s402, %s403
          %s405 = smul.addr %s404, 8
          %s406 = scalar_lea.hbm %s1, %s405
          %s407 = sshll.u32 %s406, 4
          %s408 = int_to_ptr.hbm [resolvable:$true] %s407
          %s409 = sshll.u32 %s394, 4
          %s410 = int_to_ptr.vmem [resolvable:$true] %s409
          %415 = dma.hbm_to_vmem [thread:$0]  %s408, 768, %s410, %s391, 128, 128, 8
        $region48: #{tpu_custom_call.1} parent=39 // pred_fallthru
          _
        // Predicated region
        $region49: #{tpu_custom_call.1} parent=39 // pred_check
          %p416 = pneg %p132
        $region50: #{tpu_custom_call.1} parent=39 // pred_check_branch
          %418 = sbr.rel (%p416) target = $region52
        $region51: #{tpu_custom_call.1} parent=39 // pred_region
          %s419 = sand.u32 %s26, 1
          %s420 = scalar_lea.sflag [#allocation7], %s419
          %s421 = sand.u32 %s122, 1
          %s422 = smul.addr %s421, 48
          %s423 = scalar_lea.vmem [#allocation8], %s422
          %s424 = sadd.s32 %s34, 1
          %s425 = smul.u32 %s424, 2
          %p426 = scmp.lt.s32.totalorder %s425, 5
          %s427 = scalar_select %p426, %s425, 5
          %s428 = smul.u32 3, %s427
          %430 = vsyncadd %s420, 0
          %s431 = smul.addr %s428, 2
          %s432 = smul.addr %s33, 36
          %s433 = sadd.s32 %s431, %s432
          %s434 = smul.addr %s433, 8
          %s435 = scalar_lea.hbm %s2, %s434
          %s436 = sshll.u32 %s435, 4
          %s437 = int_to_ptr.hbm [resolvable:$true] %s436
          %s438 = sshll.u32 %s423, 4
          %s439 = int_to_ptr.vmem [resolvable:$true] %s438
          %444 = dma.hbm_to_vmem [thread:$0]  %s437, 768, %s439, %s420, 128, 128, 8
        $region52: #{tpu_custom_call.1} parent=39 // pred_fallthru
          _
      $region40: #{tpu_custom_call.1} parent=5 // pred_fallthru
        _
      %p445 = scmp.le.s32.totalorder 1, %s26
      %p446 = scmp.lt.s32.totalorder %s26, 7
      %p447 = pnand %p445, %p446
      %p448 = pneg %p447
      // Predicated region
      $region53: #{tpu_custom_call.1} parent=5 // pred_check
        _
      $region54: #{tpu_custom_call.1} parent=5 // pred_check_branch
        %450 = sbr.rel (%p447) target = $region56
      $region55: #{tpu_custom_call.1} parent=5 // pred_region
        %s451 = ssub.s32 %s26, 1
        %s452 = sand.u32 %s53, 1
        %s453 = scalar_lea.sflag [#allocation4], %s452
        %s454 = sand.u32 %s53, 1
        %s455 = smul.addr %s454, 96
        %s456 = scalar_lea.vmem [#allocation3], %s455
        // Predicated region
        $region57: #{tpu_custom_call.1} parent=55 // pred_check
          %p457 = pneg %p66
        $region58: #{tpu_custom_call.1} parent=55 // pred_check_branch
          %459 = sbr.rel (%p457) target = $region60
        $region59: #{tpu_custom_call.1} parent=55 // pred_region
          %461 = dma.done %s453, 1536
        $region60: #{tpu_custom_call.1} parent=55 // pred_fallthru
          _
        %s462 = sand.u32 %s31, 1
        %s463 = scalar_lea.sflag [#allocation7], %s462
        %s464 = sand.u32 %s89, 1
        %s465 = smul.addr %s464, 48
        %s466 = scalar_lea.vmem [#allocation6], %s465
        // Predicated region
        $region61: #{tpu_custom_call.1} parent=55 // pred_check
          %p467 = pneg %p102
        $region62: #{tpu_custom_call.1} parent=55 // pred_check_branch
          %469 = sbr.rel (%p467) target = $region64
        $region63: #{tpu_custom_call.1} parent=55 // pred_region
          %471 = dma.done %s463, 768
        $region64: #{tpu_custom_call.1} parent=55 // pred_fallthru
          _
        %s472 = sand.u32 %s31, 1
        %s473 = scalar_lea.sflag [#allocation7], %s472
        %s474 = sand.u32 %s125, 1
        %s475 = smul.addr %s474, 48
        %s476 = scalar_lea.vmem [#allocation8], %s475
        // Predicated region
        $region65: #{tpu_custom_call.1} parent=55 // pred_check
          %p477 = pneg %p138
        $region66: #{tpu_custom_call.1} parent=55 // pred_check_branch
          %479 = sbr.rel (%p477) target = $region68
        $region67: #{tpu_custom_call.1} parent=55 // pred_region
          %481 = dma.done %s473, 768
        $region68: #{tpu_custom_call.1} parent=55 // pred_fallthru
          _
        // Predicated region
        $region69: #{tpu_custom_call.1} parent=55 // pred_check
          %p482 = pneg %p159
        $region70: #{tpu_custom_call.1} parent=55 // pred_check_branch
          %484 = sbr.rel (%p482) target = $region72
        $region71: #{tpu_custom_call.1} parent=55 // pred_region
          %486 = dma.done [#allocation10], 896
        $region72: #{tpu_custom_call.1} parent=55 // pred_fallthru
          _
        // Predicated region
        $region73: #{tpu_custom_call.1} parent=55 // pred_check
          %p487 = pneg %p201
        $region74: #{tpu_custom_call.1} parent=55 // pred_check_branch
          %489 = sbr.rel (%p487) target = $region76
        $region75: #{tpu_custom_call.1} parent=55 // pred_region
          %491 = dma.done [#allocation10], 2048
        $region76: #{tpu_custom_call.1} parent=55 // pred_fallthru
          _
        // Predicated region
        $region77: #{tpu_custom_call.1} parent=55 // pred_check
          %p492 = pneg %p243
        $region78: #{tpu_custom_call.1} parent=55 // pred_check_branch
          %494 = sbr.rel (%p492) target = $region80
        $region79: #{tpu_custom_call.1} parent=55 // pred_region
          %496 = dma.done [#allocation13], 2048
        $region80: #{tpu_custom_call.1} parent=55 // pred_fallthru
          _
        %s497 = sand.u32 %s53, 1
        %s498 = scalar_lea.sflag [#allocation4], %s497
        %s499 = sand.u32 %s53, 1
        %s500 = smul.addr %s499, 96
        %s501 = scalar_lea.vmem [#allocation3], %s500
        %p502 = pneg %p66
        %p503 = pneg %p63
        %s504 = sand.u32 %s31, 1
        %s505 = scalar_lea.sflag [#allocation7], %s504
        %s506 = sand.u32 %s89, 1
        %s507 = smul.addr %s506, 48
        %s508 = scalar_lea.vmem [#allocation6], %s507
        %p509 = pneg %p102
        %p510 = pneg %p99
        %s511 = sand.u32 %s31, 1
        %s512 = scalar_lea.sflag [#allocation7], %s511
        %s513 = sand.u32 %s125, 1
        %s514 = smul.addr %s513, 48
        %s515 = scalar_lea.vmem [#allocation8], %s514
        %p516 = pneg %p138
        %p517 = pneg %p135
        %p518 = pneg %p159
        %p519 = pneg %p156
        %p520 = pneg %p180
        %p521 = pneg %p177
        %p522 = pneg %p201
        %p523 = pneg %p198
        %p524 = pneg %p222
        %p525 = pneg %p219
        %p526 = pneg %p243
        %p527 = pneg %p240
        %p528 = pneg %p264
        %p529 = pneg %p261
        %p530 = pneg %p292
        %p531 = pneg %p289
        %s532 = sand.u32 %s279, 1
        %s533 = scalar_lea.sflag [#allocation5], %s532
        %s534 = sand.u32 %s279, 1
        %s535 = smul.addr %s534, 96
        %s536 = scalar_lea.vmem [#allocation14], %s535
        %s537 = smul.u32 6, %s36
        %s538 = smul.u32 %s36, 2
        %s539 = ssub.s32 %s538, 1
        %p540 = scmp.gt.s32.totalorder %s539, 0
        %s541 = scalar_select %p540, %s539, 0
        %s542 = smul.u32 3, %s541
        %s543 = sadd.s32 %s36, 1
        %s544 = smul.u32 %s543, 2
        %p545 = scmp.lt.s32.totalorder %s544, 5
        %s546 = scalar_select %p545, %s544, 5
        %s547 = smul.u32 3, %s546
        %s548 = smul.u32 6, %s36
        %549 = vst [vmem:[#allocation2 + $0xd] sm:$0x7] 0.0
        %550 = vst [vmem:[#allocation2 + $0x35] sm:$0x7] 0.0
        %551 = vst [vmem:[#allocation2 + $0x5d] sm:$0x7] 0.0
        %552 = vst [vmem:[#allocation2 + $0x85] sm:$0x7] 0.0
        %553 = vst [vmem:[#allocation2 + $0xad] sm:$0x7] 0.0
        %554 = vst [vmem:[#allocation2 + $0xd5] sm:$0x7] 0.0
        %555 = vst [vmem:[#allocation2 + $0xfd] sm:$0x7] 0.0
        %556 = vst [vmem:[#allocation2 + $0x125] sm:$0x7] 0.0
        %557 = vst [vmem:[#allocation2 + $0x14d] sm:$0x7] 0.0
        %558 = vst [vmem:[#allocation2 + $0x175] sm:$0x7] 0.0
        %559 = vst [vmem:[#allocation2 + $0x19d] sm:$0x7] 0.0
        %560 = vst [vmem:[#allocation2 + $0x1c5] sm:$0x7] 0.0
        %561 = vst [vmem:[#allocation2 + $0x20] sm:$0x7] 0.0
        %562 = vst [vmem:[#allocation2 + $0x48] sm:$0x7] 0.0
        %563 = vst [vmem:[#allocation2 + $0x70] sm:$0x7] 0.0
        %564 = vst [vmem:[#allocation2 + $0x98] sm:$0x7] 0.0
        %565 = vst [vmem:[#allocation2 + $0xc0] sm:$0x7] 0.0
        %566 = vst [vmem:[#allocation2 + $0xe8] sm:$0x7] 0.0
        %567 = vst [vmem:[#allocation2 + $0x110] sm:$0x7] 0.0
        %568 = vst [vmem:[#allocation2 + $0x138] sm:$0x7] 0.0
        %569 = vst [vmem:[#allocation2 + $0x160] sm:$0x7] 0.0
        %570 = vst [vmem:[#allocation2 + $0x188] sm:$0x7] 0.0
        %571 = vst [vmem:[#allocation2 + $0x1b0] sm:$0x7] 0.0
        %572 = vst [vmem:[#allocation2 + $0x1d8] sm:$0x7] 0.0
        %v573 = vld [vmem:[%s456] sm:$0xff]
        %v574 = vld [vmem:[%s456 + $0x8] sm:$0xff]
        %v575 = vld [vmem:[%s456 + $0x10] sm:$0xff]
        %v576 = vld [vmem:[%s456 + $0x18] sm:$0xff]
        %v577 = vld [vmem:[%s456 + $0x20] sm:$0xff]
        %v578 = vld [vmem:[%s456 + $0x28] sm:$0xff]
        %v579 = vld [vmem:[%s456 + $0x30] sm:$0xff]
        %v580 = vld [vmem:[%s456 + $0x38] sm:$0xff]
        %v581 = vld [vmem:[%s456 + $0x40] sm:$0xff]
        %v582 = vld [vmem:[%s456 + $0x48] sm:$0xff]
        %v583 = vld [vmem:[%s456 + $0x50] sm:$0xff]
        %v584 = vld [vmem:[%s456 + $0x58] sm:$0xff]
        %s585 = scalar_lea.vmem [#allocation2], 120
        %586 = vst [vmem:[%s585 + $0x10] sm:$0xff] %v573
        %587 = vst [vmem:[%s585 + $0x18] sm:$0xff] %v574
        %588 = vst [vmem:[%s585 + $0x38] sm:$0xff] %v575
        %589 = vst [vmem:[%s585 + $0x40] sm:$0xff] %v576
        %590 = vst [vmem:[%s585 + $0x60] sm:$0xff] %v577
        %591 = vst [vmem:[%s585 + $0x68] sm:$0xff] %v578
        %592 = vst [vmem:[%s585 + $0x88] sm:$0xff] %v579
        %593 = vst [vmem:[%s585 + $0x90] sm:$0xff] %v580
        %594 = vst [vmem:[%s585 + $0xb0] sm:$0xff] %v581
        %595 = vst [vmem:[%s585 + $0xb8] sm:$0xff] %v582
        %596 = vst [vmem:[%s585 + $0xd8] sm:$0xff] %v583
        %597 = vst [vmem:[%s585 + $0xe0] sm:$0xff] %v584
        %p598 = scmp.eq.s32.totalorder %s36, 0
        // Predicated region
        $region81: #{tpu_custom_call.1} parent=55 // pred_check
          %p599 = pneg %p598
        $region82: #{tpu_custom_call.1} parent=55 // pred_check_branch
          %601 = sbr.rel (%p599) target = $region84
        $region83: #{tpu_custom_call.1} parent=55 // pred_region
          %602 = vst [vmem:[#allocation2 + $0x10] sm:$0xff] 0.0
          %603 = vst [vmem:[#allocation2 + $0x18] sm:$0xff] 0.0
          %604 = vst [vmem:[#allocation2 + $0x38] sm:$0xff] 0.0
          %605 = vst [vmem:[#allocation2 + $0x40] sm:$0xff] 0.0
          %606 = vst [vmem:[#allocation2 + $0x60] sm:$0xff] 0.0
          %607 = vst [vmem:[#allocation2 + $0x68] sm:$0xff] 0.0
        $region84: #{tpu_custom_call.1} parent=55 // pred_fallthru
          _
        %p608 = scmp.gt.s32.totalorder %s36, 0
        // Predicated region
        $region85: #{tpu_custom_call.1} parent=55 // pred_check
          %p609 = pneg %p608
        $region86: #{tpu_custom_call.1} parent=55 // pred_check_branch
          %611 = sbr.rel (%p609) target = $region88
        $region87: #{tpu_custom_call.1} parent=55 // pred_region
          %v612 = vld [vmem:[%s466] sm:$0xff]
          %v613 = vld [vmem:[%s466 + $0x8] sm:$0xff]
          %v614 = vld [vmem:[%s466 + $0x10] sm:$0xff]
          %v615 = vld [vmem:[%s466 + $0x18] sm:$0xff]
          %v616 = vld [vmem:[%s466 + $0x20] sm:$0xff]
          %v617 = vld [vmem:[%s466 + $0x28] sm:$0xff]
          %618 = vst [vmem:[#allocation2 + $0x10] sm:$0xff] %v612
          %619 = vst [vmem:[#allocation2 + $0x18] sm:$0xff] %v613
          %620 = vst [vmem:[#allocation2 + $0x38] sm:$0xff] %v614
          %621 = vst [vmem:[#allocation2 + $0x40] sm:$0xff] %v615
          %622 = vst [vmem:[#allocation2 + $0x60] sm:$0xff] %v616
          %623 = vst [vmem:[#allocation2 + $0x68] sm:$0xff] %v617
        $region88: #{tpu_custom_call.1} parent=55 // pred_fallthru
          _
        %s624 = sadd.s32 %s36, 1
        %p625 = scmp.eq.s32.totalorder %s624, 3
        // Predicated region
        $region89: #{tpu_custom_call.1} parent=55 // pred_check
          %p626 = pneg %p625
        $region90: #{tpu_custom_call.1} parent=55 // pred_check_branch
          %628 = sbr.rel (%p626) target = $region92
        $region91: #{tpu_custom_call.1} parent=55 // pred_region
          %s629 = scalar_lea.vmem [#allocation2], 360
          %630 = vst [vmem:[%s629 + $0x10] sm:$0xff] 0.0
          %631 = vst [vmem:[%s629 + $0x18] sm:$0xff] 0.0
          %632 = vst [vmem:[%s629 + $0x38] sm:$0xff] 0.0
          %633 = vst [vmem:[%s629 + $0x40] sm:$0xff] 0.0
          %634 = vst [vmem:[%s629 + $0x60] sm:$0xff] 0.0
          %635 = vst [vmem:[%s629 + $0x68] sm:$0xff] 0.0
        $region92: #{tpu_custom_call.1} parent=55 // pred_fallthru
          _
        %p636 = scmp.lt.s32.totalorder %s624, 3
        // Predicated region
        $region93: #{tpu_custom_call.1} parent=55 // pred_check
          %p637 = pneg %p636
        $region94: #{tpu_custom_call.1} parent=55 // pred_check_branch
          %639 = sbr.rel (%p637) target = $region96
        $region95: #{tpu_custom_call.1} parent=55 // pred_region
          %v640 = vld [vmem:[%s476] sm:$0xff]
          %v641 = vld [vmem:[%s476 + $0x8] sm:$0xff]
          %v642 = vld [vmem:[%s476 + $0x10] sm:$0xff]
          %v643 = vld [vmem:[%s476 + $0x18] sm:$0xff]
          %v644 = vld [vmem:[%s476 + $0x20] sm:$0xff]
          %v645 = vld [vmem:[%s476 + $0x28] sm:$0xff]
          %s646 = scalar_lea.vmem [#allocation2], 360
          %647 = vst [vmem:[%s646 + $0x10] sm:$0xff] %v640
          %648 = vst [vmem:[%s646 + $0x18] sm:$0xff] %v641
          %649 = vst [vmem:[%s646 + $0x38] sm:$0xff] %v642
          %650 = vst [vmem:[%s646 + $0x40] sm:$0xff] %v643
          %651 = vst [vmem:[%s646 + $0x60] sm:$0xff] %v644
          %652 = vst [vmem:[%s646 + $0x68] sm:$0xff] %v645
        $region96: #{tpu_custom_call.1} parent=55 // pred_fallthru
          _
        %v653 = vld [vmem:[#allocation9] sm:$0x7f]
        %v654 = vld [vmem:[#allocation9 + $0x8] sm:$0x7f]
        %v655 = vld [vmem:[#allocation9 + $0x10] sm:$0x7f]
        %v656 = vld [vmem:[#allocation9 + $0x18] sm:$0x7f]
        %v657 = vld [vmem:[#allocation9 + $0x20] sm:$0x7f]
        %v658 = vld [vmem:[#allocation9 + $0x28] sm:$0x7f]
        %v659 = vld [vmem:[#allocation9 + $0x30] sm:$0x7f]
        %v660 = vld [vmem:[#allocation2 + $0xd] sm:$0xff]
        %v661 = vld [vmem:[#allocation2 + $0x15] sm:$0xff]
        %v662 = vld [vmem:[#allocation2 + $0x35] sm:$0xff]
        %v663 = vld [vmem:[#allocation2 + $0x3d] sm:$0xff]
        %v664 = vld [vmem:[#allocation2 + $0x5d] sm:$0xff]
        %v665 = vld [vmem:[#allocation2 + $0x65] sm:$0xff]
        %v666 = vld [vmem:[#allocation2 + $0x85] sm:$0xff]
        %v667 = vld [vmem:[#allocation2 + $0x8d] sm:$0xff]
        %v668 = vld [vmem:[#allocation2 + $0xad] sm:$0xff]
        %v669 = vld [vmem:[#allocation2 + $0xb5] sm:$0xff]
        %v670 = vld [vmem:[#allocation2 + $0xd5] sm:$0xff]
        %v671 = vld [vmem:[#allocation2 + $0xdd] sm:$0xff]
        %v672 = vld [vmem:[#allocation2 + $0xfd] sm:$0xff]
        %v673 = vld [vmem:[#allocation2 + $0x105] sm:$0xff]
        %v674 = vld [vmem:[#allocation2 + $0x125] sm:$0xff]
        %v675 = vld [vmem:[#allocation2 + $0x12d] sm:$0xff]
        %v676 = vld [vmem:[#allocation2 + $0x14d] sm:$0xff]
        %v677 = vld [vmem:[#allocation2 + $0x155] sm:$0xff]
        %v678 = vld [vmem:[#allocation2 + $0x175] sm:$0xff]
        %v679 = vld [vmem:[#allocation2 + $0x17d] sm:$0xff]
        %v680 = vld [vmem:[#allocation2 + $0x19d] sm:$0xff]
        %v681 = vld [vmem:[#allocation2 + $0x1a5] sm:$0xff]
        %v682 = vld [vmem:[#allocation2 + $0x1c5] sm:$0xff]
        %v683 = vld [vmem:[#allocation2 + $0x1cd] sm:$0xff]
        %v684 = vperm.slane %v653, 0
        %v685 = vmul.f32 %v660, %v684
        %v686 = vmul.f32 %v661, %v684
        %v687 = vmul.f32 %v662, %v684
        %v688 = vmul.f32 %v663, %v684
        %v689 = vmul.f32 %v664, %v684
        %v690 = vmul.f32 %v665, %v684
        %v691 = vmul.f32 %v666, %v684
        %v692 = vmul.f32 %v667, %v684
        %v693 = vmul.f32 %v668, %v684
        %v694 = vmul.f32 %v669, %v684
        %v695 = vmul.f32 %v670, %v684
        %v696 = vmul.f32 %v671, %v684
        %v697 = vperm.slane %v654, 0
        %v698 = vmul.f32 %v662, %v697
        %v699 = vmul.f32 %v663, %v697
        %v700 = vmul.f32 %v664, %v697
        %v701 = vmul.f32 %v665, %v697
        %v702 = vmul.f32 %v666, %v697
        %v703 = vmul.f32 %v667, %v697
        %v704 = vmul.f32 %v668, %v697
        %v705 = vmul.f32 %v669, %v697
        %v706 = vmul.f32 %v670, %v697
        %v707 = vmul.f32 %v671, %v697
        %v708 = vmul.f32 %v672, %v697
        %v709 = vmul.f32 %v673, %v697
        %v710 = vadd.f32 %v685, %v698
        %v711 = vadd.f32 %v686, %v699
        %v712 = vadd.f32 %v687, %v700
        %v713 = vadd.f32 %v688, %v701
        %v714 = vadd.f32 %v689, %v702
        %v715 = vadd.f32 %v690, %v703
        %v716 = vadd.f32 %v691, %v704
        %v717 = vadd.f32 %v692, %v705
        %v718 = vadd.f32 %v693, %v706
        %v719 = vadd.f32 %v694, %v707
        %v720 = vadd.f32 %v695, %v708
        %v721 = vadd.f32 %v696, %v709
        %v722 = vperm.slane %v655, 0
        %v723 = vmul.f32 %v664, %v722
        %v724 = vmul.f32 %v665, %v722
        %v725 = vmul.f32 %v666, %v722
        %v726 = vmul.f32 %v667, %v722
        %v727 = vmul.f32 %v668, %v722
        %v728 = vmul.f32 %v669, %v722
        %v729 = vmul.f32 %v670, %v722
        %v730 = vmul.f32 %v671, %v722
        %v731 = vmul.f32 %v672, %v722
        %v732 = vmul.f32 %v673, %v722
        %v733 = vmul.f32 %v674, %v722
        %v734 = vmul.f32 %v675, %v722
        %v735 = vadd.f32 %v710, %v723
        %v736 = vadd.f32 %v711, %v724
        %v737 = vadd.f32 %v712, %v725
        %v738 = vadd.f32 %v713, %v726
        %v739 = vadd.f32 %v714, %v727
        %v740 = vadd.f32 %v715, %v728
        %v741 = vadd.f32 %v716, %v729
        %v742 = vadd.f32 %v717, %v730
        %v743 = vadd.f32 %v718, %v731
        %v744 = vadd.f32 %v719, %v732
        %v745 = vadd.f32 %v720, %v733
        %v746 = vadd.f32 %v721, %v734
        %v747 = vperm.slane %v656, 0
        %v748 = vmul.f32 %v666, %v747
        %v749 = vmul.f32 %v667, %v747
        %v750 = vmul.f32 %v668, %v747
        %v751 = vmul.f32 %v669, %v747
        %v752 = vmul.f32 %v670, %v747
        %v753 = vmul.f32 %v671, %v747
        %v754 = vmul.f32 %v672, %v747
        %v755 = vmul.f32 %v673, %v747
        %v756 = vmul.f32 %v674, %v747
        %v757 = vmul.f32 %v675, %v747
        %v758 = vmul.f32 %v676, %v747
        %v759 = vmul.f32 %v677, %v747
        %v760 = vadd.f32 %v735, %v748
        %v761 = vadd.f32 %v736, %v749
        %v762 = vadd.f32 %v737, %v750
        %v763 = vadd.f32 %v738, %v751
        %v764 = vadd.f32 %v739, %v752
        %v765 = vadd.f32 %v740, %v753
        %v766 = vadd.f32 %v741, %v754
        %v767 = vadd.f32 %v742, %v755
        %v768 = vadd.f32 %v743, %v756
        %v769 = vadd.f32 %v744, %v757
        %v770 = vadd.f32 %v745, %v758
        %v771 = vadd.f32 %v746, %v759
        %v772 = vperm.slane %v657, 0
        %v773 = vmul.f32 %v668, %v772
        %v774 = vmul.f32 %v669, %v772
        %v775 = vmul.f32 %v670, %v772
        %v776 = vmul.f32 %v671, %v772
        %v777 = vmul.f32 %v672, %v772
        %v778 = vmul.f32 %v673, %v772
        %v779 = vmul.f32 %v674, %v772
        %v780 = vmul.f32 %v675, %v772
        %v781 = vmul.f32 %v676, %v772
        %v782 = vmul.f32 %v677, %v772
        %v783 = vmul.f32 %v678, %v772
        %v784 = vmul.f32 %v679, %v772
        %v785 = vadd.f32 %v760, %v773
        %v786 = vadd.f32 %v761, %v774
        %v787 = vadd.f32 %v762, %v775
        %v788 = vadd.f32 %v763, %v776
        %v789 = vadd.f32 %v764, %v777
        %v790 = vadd.f32 %v765, %v778
        %v791 = vadd.f32 %v766, %v779
        %v792 = vadd.f32 %v767, %v780
        %v793 = vadd.f32 %v768, %v781
        %v794 = vadd.f32 %v769, %v782
        %v795 = vadd.f32 %v770, %v783
        %v796 = vadd.f32 %v771, %v784
        %v797 = vperm.slane %v658, 0
        %v798 = vmul.f32 %v670, %v797
        %v799 = vmul.f32 %v671, %v797
        %v800 = vmul.f32 %v672, %v797
        %v801 = vmul.f32 %v673, %v797
        %v802 = vmul.f32 %v674, %v797
        %v803 = vmul.f32 %v675, %v797
        %v804 = vmul.f32 %v676, %v797
        %v805 = vmul.f32 %v677, %v797
        %v806 = vmul.f32 %v678, %v797
        %v807 = vmul.f32 %v679, %v797
        %v808 = vmul.f32 %v680, %v797
        %v809 = vmul.f32 %v681, %v797
        %v810 = vadd.f32 %v785, %v798
        %v811 = vadd.f32 %v786, %v799
        %v812 = vadd.f32 %v787, %v800
        %v813 = vadd.f32 %v788, %v801
        %v814 = vadd.f32 %v789, %v802
        %v815 = vadd.f32 %v790, %v803
        %v816 = vadd.f32 %v791, %v804
        %v817 = vadd.f32 %v792, %v805
        %v818 = vadd.f32 %v793, %v806
        %v819 = vadd.f32 %v794, %v807
        %v820 = vadd.f32 %v795, %v808
        %v821 = vadd.f32 %v796, %v809
        %v822 = vperm.slane %v659, 0
        %v823 = vmul.f32 %v672, %v822
        %v824 = vmul.f32 %v673, %v822
        %v825 = vmul.f32 %v674, %v822
        %v826 = vmul.f32 %v675, %v822
        %v827 = vmul.f32 %v676, %v822
        %v828 = vmul.f32 %v677, %v822
        %v829 = vmul.f32 %v678, %v822
        %v830 = vmul.f32 %v679, %v822
        %v831 = vmul.f32 %v680, %v822
        %v832 = vmul.f32 %v681, %v822
        %v833 = vmul.f32 %v682, %v822
        %v834 = vmul.f32 %v683, %v822
        %v835 = vadd.f32 %v810, %v823
        %v836 = vadd.f32 %v811, %v824
        %v837 = vadd.f32 %v812, %v825
        %v838 = vadd.f32 %v813, %v826
        %v839 = vadd.f32 %v814, %v827
        %v840 = vadd.f32 %v815, %v828
        %v841 = vadd.f32 %v816, %v829
        %v842 = vadd.f32 %v817, %v830
        %v843 = vadd.f32 %v818, %v831
        %v844 = vadd.f32 %v819, %v832
        %v845 = vadd.f32 %v820, %v833
        %v846 = vadd.f32 %v821, %v834
        %v847 = vld [vmem:[#allocation2 + $0xe] sm:$0xff]
        %v848 = vld [vmem:[#allocation2 + $0x16] sm:$0xff]
        %v849 = vld [vmem:[#allocation2 + $0x36] sm:$0xff]
        %v850 = vld [vmem:[#allocation2 + $0x3e] sm:$0xff]
        %v851 = vld [vmem:[#allocation2 + $0x5e] sm:$0xff]
        %v852 = vld [vmem:[#allocation2 + $0x66] sm:$0xff]
        %v853 = vld [vmem:[#allocation2 + $0x86] sm:$0xff]
        %v854 = vld [vmem:[#allocation2 + $0x8e] sm:$0xff]
        %v855 = vld [vmem:[#allocation2 + $0xae] sm:$0xff]
        %v856 = vld [vmem:[#allocation2 + $0xb6] sm:$0xff]
        %v857 = vld [vmem:[#allocation2 + $0xd6] sm:$0xff]
        %v858 = vld [vmem:[#allocation2 + $0xde] sm:$0xff]
        %v859 = vld [vmem:[#allocation2 + $0xfe] sm:$0xff]
        %v860 = vld [vmem:[#allocation2 + $0x106] sm:$0xff]
        %v861 = vld [vmem:[#allocation2 + $0x126] sm:$0xff]
        %v862 = vld [vmem:[#allocation2 + $0x12e] sm:$0xff]
        %v863 = vld [vmem:[#allocation2 + $0x14e] sm:$0xff]
        %v864 = vld [vmem:[#allocation2 + $0x156] sm:$0xff]
        %v865 = vld [vmem:[#allocation2 + $0x176] sm:$0xff]
        %v866 = vld [vmem:[#allocation2 + $0x17e] sm:$0xff]
        %v867 = vld [vmem:[#allocation2 + $0x19e] sm:$0xff]
        %v868 = vld [vmem:[#allocation2 + $0x1a6] sm:$0xff]
        %v869 = vld [vmem:[#allocation2 + $0x1c6] sm:$0xff]
        %v870 = vld [vmem:[#allocation2 + $0x1ce] sm:$0xff]
        %v871 = vperm.slane %v653, 1
        %v872 = vmul.f32 %v847, %v871
        %v873 = vmul.f32 %v848, %v871
        %v874 = vmul.f32 %v849, %v871
        %v875 = vmul.f32 %v850, %v871
        %v876 = vmul.f32 %v851, %v871
        %v877 = vmul.f32 %v852, %v871
        %v878 = vmul.f32 %v853, %v871
        %v879 = vmul.f32 %v854, %v871
        %v880 = vmul.f32 %v855, %v871
        %v881 = vmul.f32 %v856, %v871
        %v882 = vmul.f32 %v857, %v871
        %v883 = vmul.f32 %v858, %v871
        %v884 = vperm.slane %v654, 1
        %v885 = vmul.f32 %v849, %v884
        %v886 = vmul.f32 %v850, %v884
        %v887 = vmul.f32 %v851, %v884
        %v888 = vmul.f32 %v852, %v884
        %v889 = vmul.f32 %v853, %v884
        %v890 = vmul.f32 %v854, %v884
        %v891 = vmul.f32 %v855, %v884
        %v892 = vmul.f32 %v856, %v884
        %v893 = vmul.f32 %v857, %v884
        %v894 = vmul.f32 %v858, %v884
        %v895 = vmul.f32 %v859, %v884
        %v896 = vmul.f32 %v860, %v884
        %v897 = vadd.f32 %v872, %v885
        %v898 = vadd.f32 %v873, %v886
        %v899 = vadd.f32 %v874, %v887
        %v900 = vadd.f32 %v875, %v888
        %v901 = vadd.f32 %v876, %v889
        %v902 = vadd.f32 %v877, %v890
        %v903 = vadd.f32 %v878, %v891
        %v904 = vadd.f32 %v879, %v892
        %v905 = vadd.f32 %v880, %v893
        %v906 = vadd.f32 %v881, %v894
        %v907 = vadd.f32 %v882, %v895
        %v908 = vadd.f32 %v883, %v896
        %v909 = vperm.slane %v655, 1
        %v910 = vmul.f32 %v851, %v909
        %v911 = vmul.f32 %v852, %v909
        %v912 = vmul.f32 %v853, %v909
        %v913 = vmul.f32 %v854, %v909
        %v914 = vmul.f32 %v855, %v909
        %v915 = vmul.f32 %v856, %v909
        %v916 = vmul.f32 %v857, %v909
        %v917 = vmul.f32 %v858, %v909
        %v918 = vmul.f32 %v859, %v909
        %v919 = vmul.f32 %v860, %v909
        %v920 = vmul.f32 %v861, %v909
        %v921 = vmul.f32 %v862, %v909
        %v922 = vadd.f32 %v897, %v910
        %v923 = vadd.f32 %v898, %v911
        %v924 = vadd.f32 %v899, %v912
        %v925 = vadd.f32 %v900, %v913
        %v926 = vadd.f32 %v901, %v914
        %v927 = vadd.f32 %v902, %v915
        %v928 = vadd.f32 %v903, %v916
        %v929 = vadd.f32 %v904, %v917
        %v930 = vadd.f32 %v905, %v918
        %v931 = vadd.f32 %v906, %v919
        %v932 = vadd.f32 %v907, %v920
        %v933 = vadd.f32 %v908, %v921
        %v934 = vperm.slane %v656, 1
        %v935 = vmul.f32 %v853, %v934
        %v936 = vmul.f32 %v854, %v934
        %v937 = vmul.f32 %v855, %v934
        %v938 = vmul.f32 %v856, %v934
        %v939 = vmul.f32 %v857, %v934
        %v940 = vmul.f32 %v858, %v934
        %v941 = vmul.f32 %v859, %v934
        %v942 = vmul.f32 %v860, %v934
        %v943 = vmul.f32 %v861, %v934
        %v944 = vmul.f32 %v862, %v934
        %v945 = vmul.f32 %v863, %v934
        %v946 = vmul.f32 %v864, %v934
        %v947 = vadd.f32 %v922, %v935
        %v948 = vadd.f32 %v923, %v936
        %v949 = vadd.f32 %v924, %v937
        %v950 = vadd.f32 %v925, %v938
        %v951 = vadd.f32 %v926, %v939
        %v952 = vadd.f32 %v927, %v940
        %v953 = vadd.f32 %v928, %v941
        %v954 = vadd.f32 %v929, %v942
        %v955 = vadd.f32 %v930, %v943
        %v956 = vadd.f32 %v931, %v944
        %v957 = vadd.f32 %v932, %v945
        %v958 = vadd.f32 %v933, %v946
        %v959 = vperm.slane %v657, 1
        %v960 = vmul.f32 %v855, %v959
        %v961 = vmul.f32 %v856, %v959
        %v962 = vmul.f32 %v857, %v959
        %v963 = vmul.f32 %v858, %v959
        %v964 = vmul.f32 %v859, %v959
        %v965 = vmul.f32 %v860, %v959
        %v966 = vmul.f32 %v861, %v959
        %v967 = vmul.f32 %v862, %v959
        %v968 = vmul.f32 %v863, %v959
        %v969 = vmul.f32 %v864, %v959
        %v970 = vmul.f32 %v865, %v959
        %v971 = vmul.f32 %v866, %v959
        %v972 = vadd.f32 %v947, %v960
        %v973 = vadd.f32 %v948, %v961
        %v974 = vadd.f32 %v949, %v962
        %v975 = vadd.f32 %v950, %v963
        %v976 = vadd.f32 %v951, %v964
        %v977 = vadd.f32 %v952, %v965
        %v978 = vadd.f32 %v953, %v966
        %v979 = vadd.f32 %v954, %v967
        %v980 = vadd.f32 %v955, %v968
        %v981 = vadd.f32 %v956, %v969
        %v982 = vadd.f32 %v957, %v970
        %v983 = vadd.f32 %v958, %v971
        %v984 = vperm.slane %v658, 1
        %v985 = vmul.f32 %v857, %v984
        %v986 = vmul.f32 %v858, %v984
        %v987 = vmul.f32 %v859, %v984
        %v988 = vmul.f32 %v860, %v984
        %v989 = vmul.f32 %v861, %v984
        %v990 = vmul.f32 %v862, %v984
        %v991 = vmul.f32 %v863, %v984
        %v992 = vmul.f32 %v864, %v984
        %v993 = vmul.f32 %v865, %v984
        %v994 = vmul.f32 %v866, %v984
        %v995 = vmul.f32 %v867, %v984
        %v996 = vmul.f32 %v868, %v984
        %v997 = vadd.f32 %v972, %v985
        %v998 = vadd.f32 %v973, %v986
        %v999 = vadd.f32 %v974, %v987
        %v1000 = vadd.f32 %v975, %v988
        %v1001 = vadd.f32 %v976, %v989
        %v1002 = vadd.f32 %v977, %v990
        %v1003 = vadd.f32 %v978, %v991
        %v1004 = vadd.f32 %v979, %v992
        %v1005 = vadd.f32 %v980, %v993
        %v1006 = vadd.f32 %v981, %v994
        %v1007 = vadd.f32 %v982, %v995
        %v1008 = vadd.f32 %v983, %v996
        %v1009 = vperm.slane %v659, 1
        %v1010 = vmul.f32 %v859, %v1009
        %v1011 = vmul.f32 %v860, %v1009
        %v1012 = vmul.f32 %v861, %v1009
        %v1013 = vmul.f32 %v862, %v1009
        %v1014 = vmul.f32 %v863, %v1009
        %v1015 = vmul.f32 %v864, %v1009
        %v1016 = vmul.f32 %v865, %v1009
        %v1017 = vmul.f32 %v866, %v1009
        %v1018 = vmul.f32 %v867, %v1009
        %v1019 = vmul.f32 %v868, %v1009
        %v1020 = vmul.f32 %v869, %v1009
        %v1021 = vmul.f32 %v870, %v1009
        %v1022 = vadd.f32 %v997, %v1010
        %v1023 = vadd.f32 %v998, %v1011
        %v1024 = vadd.f32 %v999, %v1012
        %v1025 = vadd.f32 %v1000, %v1013
        %v1026 = vadd.f32 %v1001, %v1014
        %v1027 = vadd.f32 %v1002, %v1015
        %v1028 = vadd.f32 %v1003, %v1016
        %v1029 = vadd.f32 %v1004, %v1017
        %v1030 = vadd.f32 %v1005, %v1018
        %v1031 = vadd.f32 %v1006, %v1019
        %v1032 = vadd.f32 %v1007, %v1020
        %v1033 = vadd.f32 %v1008, %v1021
        %v1034 = vld [vmem:[#allocation2 + $0xf] sm:$0xff]
        %v1035 = vld [vmem:[#allocation2 + $0x17] sm:$0xff]
        %v1036 = vld [vmem:[#allocation2 + $0x37] sm:$0xff]
        %v1037 = vld [vmem:[#allocation2 + $0x3f] sm:$0xff]
        %v1038 = vld [vmem:[#allocation2 + $0x5f] sm:$0xff]
        %v1039 = vld [vmem:[#allocation2 + $0x67] sm:$0xff]
        %v1040 = vld [vmem:[#allocation2 + $0x87] sm:$0xff]
        %v1041 = vld [vmem:[#allocation2 + $0x8f] sm:$0xff]
        %v1042 = vld [vmem:[#allocation2 + $0xaf] sm:$0xff]
        %v1043 = vld [vmem:[#allocation2 + $0xb7] sm:$0xff]
        %v1044 = vld [vmem:[#allocation2 + $0xd7] sm:$0xff]
        %v1045 = vld [vmem:[#allocation2 + $0xdf] sm:$0xff]
        %v1046 = vld [vmem:[#allocation2 + $0xff] sm:$0xff]
        %v1047 = vld [vmem:[#allocation2 + $0x107] sm:$0xff]
        %v1048 = vld [vmem:[#allocation2 + $0x127] sm:$0xff]
        %v1049 = vld [vmem:[#allocation2 + $0x12f] sm:$0xff]
        %v1050 = vld [vmem:[#allocation2 + $0x14f] sm:$0xff]
        %v1051 = vld [vmem:[#allocation2 + $0x157] sm:$0xff]
        %v1052 = vld [vmem:[#allocation2 + $0x177] sm:$0xff]
        %v1053 = vld [vmem:[#allocation2 + $0x17f] sm:$0xff]
        %v1054 = vld [vmem:[#allocation2 + $0x19f] sm:$0xff]
        %v1055 = vld [vmem:[#allocation2 + $0x1a7] sm:$0xff]
        %v1056 = vld [vmem:[#allocation2 + $0x1c7] sm:$0xff]
        %v1057 = vld [vmem:[#allocation2 + $0x1cf] sm:$0xff]
        %v1058 = vperm.slane %v653, 2
        %v1059 = vmul.f32 %v1034, %v1058
        %v1060 = vmul.f32 %v1035, %v1058
        %v1061 = vmul.f32 %v1036, %v1058
        %v1062 = vmul.f32 %v1037, %v1058
        %v1063 = vmul.f32 %v1038, %v1058
        %v1064 = vmul.f32 %v1039, %v1058
        %v1065 = vmul.f32 %v1040, %v1058
        %v1066 = vmul.f32 %v1041, %v1058
        %v1067 = vmul.f32 %v1042, %v1058
        %v1068 = vmul.f32 %v1043, %v1058
        %v1069 = vmul.f32 %v1044, %v1058
        %v1070 = vmul.f32 %v1045, %v1058
        %v1071 = vperm.slane %v654, 2
        %v1072 = vmul.f32 %v1036, %v1071
        %v1073 = vmul.f32 %v1037, %v1071
        %v1074 = vmul.f32 %v1038, %v1071
        %v1075 = vmul.f32 %v1039, %v1071
        %v1076 = vmul.f32 %v1040, %v1071
        %v1077 = vmul.f32 %v1041, %v1071
        %v1078 = vmul.f32 %v1042, %v1071
        %v1079 = vmul.f32 %v1043, %v1071
        %v1080 = vmul.f32 %v1044, %v1071
        %v1081 = vmul.f32 %v1045, %v1071
        %v1082 = vmul.f32 %v1046, %v1071
        %v1083 = vmul.f32 %v1047, %v1071
        %v1084 = vadd.f32 %v1059, %v1072
        %v1085 = vadd.f32 %v1060, %v1073
        %v1086 = vadd.f32 %v1061, %v1074
        %v1087 = vadd.f32 %v1062, %v1075
        %v1088 = vadd.f32 %v1063, %v1076
        %v1089 = vadd.f32 %v1064, %v1077
        %v1090 = vadd.f32 %v1065, %v1078
        %v1091 = vadd.f32 %v1066, %v1079
        %v1092 = vadd.f32 %v1067, %v1080
        %v1093 = vadd.f32 %v1068, %v1081
        %v1094 = vadd.f32 %v1069, %v1082
        %v1095 = vadd.f32 %v1070, %v1083
        %v1096 = vperm.slane %v655, 2
        %v1097 = vmul.f32 %v1038, %v1096
        %v1098 = vmul.f32 %v1039, %v1096
        %v1099 = vmul.f32 %v1040, %v1096
        %v1100 = vmul.f32 %v1041, %v1096
        %v1101 = vmul.f32 %v1042, %v1096
        %v1102 = vmul.f32 %v1043, %v1096
        %v1103 = vmul.f32 %v1044, %v1096
        %v1104 = vmul.f32 %v1045, %v1096
        %v1105 = vmul.f32 %v1046, %v1096
        %v1106 = vmul.f32 %v1047, %v1096
        %v1107 = vmul.f32 %v1048, %v1096
        %v1108 = vmul.f32 %v1049, %v1096
        %v1109 = vadd.f32 %v1084, %v1097
        %v1110 = vadd.f32 %v1085, %v1098
        %v1111 = vadd.f32 %v1086, %v1099
        %v1112 = vadd.f32 %v1087, %v1100
        %v1113 = vadd.f32 %v1088, %v1101
        %v1114 = vadd.f32 %v1089, %v1102
        %v1115 = vadd.f32 %v1090, %v1103
        %v1116 = vadd.f32 %v1091, %v1104
        %v1117 = vadd.f32 %v1092, %v1105
        %v1118 = vadd.f32 %v1093, %v1106
        %v1119 = vadd.f32 %v1094, %v1107
        %v1120 = vadd.f32 %v1095, %v1108
        %v1121 = vperm.slane %v656, 2
        %v1122 = vmul.f32 %v1040, %v1121
        %v1123 = vmul.f32 %v1041, %v1121
        %v1124 = vmul.f32 %v1042, %v1121
        %v1125 = vmul.f32 %v1043, %v1121
        %v1126 = vmul.f32 %v1044, %v1121
        %v1127 = vmul.f32 %v1045, %v1121
        %v1128 = vmul.f32 %v1046, %v1121
        %v1129 = vmul.f32 %v1047, %v1121
        %v1130 = vmul.f32 %v1048, %v1121
        %v1131 = vmul.f32 %v1049, %v1121
        %v1132 = vmul.f32 %v1050, %v1121
        %v1133 = vmul.f32 %v1051, %v1121
        %v1134 = vadd.f32 %v1109, %v1122
        %v1135 = vadd.f32 %v1110, %v1123
        %v1136 = vadd.f32 %v1111, %v1124
        %v1137 = vadd.f32 %v1112, %v1125
        %v1138 = vadd.f32 %v1113, %v1126
        %v1139 = vadd.f32 %v1114, %v1127
        %v1140 = vadd.f32 %v1115, %v1128
        %v1141 = vadd.f32 %v1116, %v1129
        %v1142 = vadd.f32 %v1117, %v1130
        %v1143 = vadd.f32 %v1118, %v1131
        %v1144 = vadd.f32 %v1119, %v1132
        %v1145 = vadd.f32 %v1120, %v1133
        %v1146 = vperm.slane %v657, 2
        %v1147 = vmul.f32 %v1042, %v1146
        %v1148 = vmul.f32 %v1043, %v1146
        %v1149 = vmul.f32 %v1044, %v1146
        %v1150 = vmul.f32 %v1045, %v1146
        %v1151 = vmul.f32 %v1046, %v1146
        %v1152 = vmul.f32 %v1047, %v1146
        %v1153 = vmul.f32 %v1048, %v1146
        %v1154 = vmul.f32 %v1049, %v1146
        %v1155 = vmul.f32 %v1050, %v1146
        %v1156 = vmul.f32 %v1051, %v1146
        %v1157 = vmul.f32 %v1052, %v1146
        %v1158 = vmul.f32 %v1053, %v1146
        %v1159 = vadd.f32 %v1134, %v1147
        %v1160 = vadd.f32 %v1135, %v1148
        %v1161 = vadd.f32 %v1136, %v1149
        %v1162 = vadd.f32 %v1137, %v1150
        %v1163 = vadd.f32 %v1138, %v1151
        %v1164 = vadd.f32 %v1139, %v1152
        %v1165 = vadd.f32 %v1140, %v1153
        %v1166 = vadd.f32 %v1141, %v1154
        %v1167 = vadd.f32 %v1142, %v1155
        %v1168 = vadd.f32 %v1143, %v1156
        %v1169 = vadd.f32 %v1144, %v1157
        %v1170 = vadd.f32 %v1145, %v1158
        %v1171 = vperm.slane %v658, 2
        %v1172 = vmul.f32 %v1044, %v1171
        %v1173 = vmul.f32 %v1045, %v1171
        %v1174 = vmul.f32 %v1046, %v1171
        %v1175 = vmul.f32 %v1047, %v1171
        %v1176 = vmul.f32 %v1048, %v1171
        %v1177 = vmul.f32 %v1049, %v1171
        %v1178 = vmul.f32 %v1050, %v1171
        %v1179 = vmul.f32 %v1051, %v1171
        %v1180 = vmul.f32 %v1052, %v1171
        %v1181 = vmul.f32 %v1053, %v1171
        %v1182 = vmul.f32 %v1054, %v1171
        %v1183 = vmul.f32 %v1055, %v1171
        %v1184 = vadd.f32 %v1159, %v1172
        %v1185 = vadd.f32 %v1160, %v1173
        %v1186 = vadd.f32 %v1161, %v1174
        %v1187 = vadd.f32 %v1162, %v1175
        %v1188 = vadd.f32 %v1163, %v1176
        %v1189 = vadd.f32 %v1164, %v1177
        %v1190 = vadd.f32 %v1165, %v1178
        %v1191 = vadd.f32 %v1166, %v1179
        %v1192 = vadd.f32 %v1167, %v1180
        %v1193 = vadd.f32 %v1168, %v1181
        %v1194 = vadd.f32 %v1169, %v1182
        %v1195 = vadd.f32 %v1170, %v1183
        %v1196 = vperm.slane %v659, 2
        %v1197 = vmul.f32 %v1046, %v1196
        %v1198 = vmul.f32 %v1047, %v1196
        %v1199 = vmul.f32 %v1048, %v1196
        %v1200 = vmul.f32 %v1049, %v1196
        %v1201 = vmul.f32 %v1050, %v1196
        %v1202 = vmul.f32 %v1051, %v1196
        %v1203 = vmul.f32 %v1052, %v1196
        %v1204 = vmul.f32 %v1053, %v1196
        %v1205 = vmul.f32 %v1054, %v1196
        %v1206 = vmul.f32 %v1055, %v1196
        %v1207 = vmul.f32 %v1056, %v1196
        %v1208 = vmul.f32 %v1057, %v1196
        %v1209 = vadd.f32 %v1184, %v1197
        %v1210 = vadd.f32 %v1185, %v1198
        %v1211 = vadd.f32 %v1186, %v1199
        %v1212 = vadd.f32 %v1187, %v1200
        %v1213 = vadd.f32 %v1188, %v1201
        %v1214 = vadd.f32 %v1189, %v1202
        %v1215 = vadd.f32 %v1190, %v1203
        %v1216 = vadd.f32 %v1191, %v1204
        %v1217 = vadd.f32 %v1192, %v1205
        %v1218 = vadd.f32 %v1193, %v1206
        %v1219 = vadd.f32 %v1194, %v1207
        %v1220 = vadd.f32 %v1195, %v1208
        %v1221 = vadd.f32 %v835, %v1209
        %v1222 = vadd.f32 %v836, %v1210
        %v1223 = vadd.f32 %v837, %v1211
        %v1224 = vadd.f32 %v838, %v1212
        %v1225 = vadd.f32 %v839, %v1213
        %v1226 = vadd.f32 %v840, %v1214
        %v1227 = vadd.f32 %v841, %v1215
        %v1228 = vadd.f32 %v842, %v1216
        %v1229 = vadd.f32 %v843, %v1217
        %v1230 = vadd.f32 %v844, %v1218
        %v1231 = vadd.f32 %v845, %v1219
        %v1232 = vadd.f32 %v846, %v1220
        %v1233 = vld [vmem:[#allocation2 + $0x10] sm:$0xff]
        %v1234 = vld [vmem:[#allocation2 + $0x18] sm:$0xff]
        %v1235 = vld [vmem:[#allocation2 + $0x38] sm:$0xff]
        %v1236 = vld [vmem:[#allocation2 + $0x40] sm:$0xff]
        %v1237 = vld [vmem:[#allocation2 + $0x60] sm:$0xff]
        %v1238 = vld [vmem:[#allocation2 + $0x68] sm:$0xff]
        %v1239 = vld [vmem:[#allocation2 + $0x88] sm:$0xff]
        %v1240 = vld [vmem:[#allocation2 + $0x90] sm:$0xff]
        %v1241 = vld [vmem:[#allocation2 + $0xb0] sm:$0xff]
        %v1242 = vld [vmem:[#allocation2 + $0xb8] sm:$0xff]
        %v1243 = vld [vmem:[#allocation2 + $0xd8] sm:$0xff]
        %v1244 = vld [vmem:[#allocation2 + $0xe0] sm:$0xff]
        %v1245 = vld [vmem:[#allocation2 + $0x100] sm:$0xff]
        %v1246 = vld [vmem:[#allocation2 + $0x108] sm:$0xff]
        %v1247 = vld [vmem:[#allocation2 + $0x128] sm:$0xff]
        %v1248 = vld [vmem:[#allocation2 + $0x130] sm:$0xff]
        %v1249 = vld [vmem:[#allocation2 + $0x150] sm:$0xff]
        %v1250 = vld [vmem:[#allocation2 + $0x158] sm:$0xff]
        %v1251 = vld [vmem:[#allocation2 + $0x178] sm:$0xff]
        %v1252 = vld [vmem:[#allocation2 + $0x180] sm:$0xff]
        %v1253 = vld [vmem:[#allocation2 + $0x1a0] sm:$0xff]
        %v1254 = vld [vmem:[#allocation2 + $0x1a8] sm:$0xff]
        %v1255 = vld [vmem:[#allocation2 + $0x1c8] sm:$0xff]
        %v1256 = vld [vmem:[#allocation2 + $0x1d0] sm:$0xff]
        %v1257 = vperm.slane %v653, 3
        %v1258 = vmul.f32 %v1233, %v1257
        %v1259 = vmul.f32 %v1234, %v1257
        %v1260 = vmul.f32 %v1235, %v1257
        %v1261 = vmul.f32 %v1236, %v1257
        %v1262 = vmul.f32 %v1237, %v1257
        %v1263 = vmul.f32 %v1238, %v1257
        %v1264 = vmul.f32 %v1239, %v1257
        %v1265 = vmul.f32 %v1240, %v1257
        %v1266 = vmul.f32 %v1241, %v1257
        %v1267 = vmul.f32 %v1242, %v1257
        %v1268 = vmul.f32 %v1243, %v1257
        %v1269 = vmul.f32 %v1244, %v1257
        %v1270 = vperm.slane %v654, 3
        %v1271 = vmul.f32 %v1235, %v1270
        %v1272 = vmul.f32 %v1236, %v1270
        %v1273 = vmul.f32 %v1237, %v1270
        %v1274 = vmul.f32 %v1238, %v1270
        %v1275 = vmul.f32 %v1239, %v1270
        %v1276 = vmul.f32 %v1240, %v1270
        %v1277 = vmul.f32 %v1241, %v1270
        %v1278 = vmul.f32 %v1242, %v1270
        %v1279 = vmul.f32 %v1243, %v1270
        %v1280 = vmul.f32 %v1244, %v1270
        %v1281 = vmul.f32 %v1245, %v1270
        %v1282 = vmul.f32 %v1246, %v1270
        %v1283 = vadd.f32 %v1258, %v1271
        %v1284 = vadd.f32 %v1259, %v1272
        %v1285 = vadd.f32 %v1260, %v1273
        %v1286 = vadd.f32 %v1261, %v1274
        %v1287 = vadd.f32 %v1262, %v1275
        %v1288 = vadd.f32 %v1263, %v1276
        %v1289 = vadd.f32 %v1264, %v1277
        %v1290 = vadd.f32 %v1265, %v1278
        %v1291 = vadd.f32 %v1266, %v1279
        %v1292 = vadd.f32 %v1267, %v1280
        %v1293 = vadd.f32 %v1268, %v1281
        %v1294 = vadd.f32 %v1269, %v1282
        %v1295 = vperm.slane %v655, 3
        %v1296 = vmul.f32 %v1237, %v1295
        %v1297 = vmul.f32 %v1238, %v1295
        %v1298 = vmul.f32 %v1239, %v1295
        %v1299 = vmul.f32 %v1240, %v1295
        %v1300 = vmul.f32 %v1241, %v1295
        %v1301 = vmul.f32 %v1242, %v1295
        %v1302 = vmul.f32 %v1243, %v1295
        %v1303 = vmul.f32 %v1244, %v1295
        %v1304 = vmul.f32 %v1245, %v1295
        %v1305 = vmul.f32 %v1246, %v1295
        %v1306 = vmul.f32 %v1247, %v1295
        %v1307 = vmul.f32 %v1248, %v1295
        %v1308 = vadd.f32 %v1283, %v1296
        %v1309 = vadd.f32 %v1284, %v1297
        %v1310 = vadd.f32 %v1285, %v1298
        %v1311 = vadd.f32 %v1286, %v1299
        %v1312 = vadd.f32 %v1287, %v1300
        %v1313 = vadd.f32 %v1288, %v1301
        %v1314 = vadd.f32 %v1289, %v1302
        %v1315 = vadd.f32 %v1290, %v1303
        %v1316 = vadd.f32 %v1291, %v1304
        %v1317 = vadd.f32 %v1292, %v1305
        %v1318 = vadd.f32 %v1293, %v1306
        %v1319 = vadd.f32 %v1294, %v1307
        %v1320 = vperm.slane %v656, 3
        %v1321 = vmul.f32 %v1239, %v1320
        %v1322 = vmul.f32 %v1240, %v1320
        %v1323 = vmul.f32 %v1241, %v1320
        %v1324 = vmul.f32 %v1242, %v1320
        %v1325 = vmul.f32 %v1243, %v1320
        %v1326 = vmul.f32 %v1244, %v1320
        %v1327 = vmul.f32 %v1245, %v1320
        %v1328 = vmul.f32 %v1246, %v1320
        %v1329 = vmul.f32 %v1247, %v1320
        %v1330 = vmul.f32 %v1248, %v1320
        %v1331 = vmul.f32 %v1249, %v1320
        %v1332 = vmul.f32 %v1250, %v1320
        %v1333 = vadd.f32 %v1308, %v1321
        %v1334 = vadd.f32 %v1309, %v1322
        %v1335 = vadd.f32 %v1310, %v1323
        %v1336 = vadd.f32 %v1311, %v1324
        %v1337 = vadd.f32 %v1312, %v1325
        %v1338 = vadd.f32 %v1313, %v1326
        %v1339 = vadd.f32 %v1314, %v1327
        %v1340 = vadd.f32 %v1315, %v1328
        %v1341 = vadd.f32 %v1316, %v1329
        %v1342 = vadd.f32 %v1317, %v1330
        %v1343 = vadd.f32 %v1318, %v1331
        %v1344 = vadd.f32 %v1319, %v1332
        %v1345 = vperm.slane %v657, 3
        %v1346 = vmul.f32 %v1241, %v1345
        %v1347 = vmul.f32 %v1242, %v1345
        %v1348 = vmul.f32 %v1243, %v1345
        %v1349 = vmul.f32 %v1244, %v1345
        %v1350 = vmul.f32 %v1245, %v1345
        %v1351 = vmul.f32 %v1246, %v1345
        %v1352 = vmul.f32 %v1247, %v1345
        %v1353 = vmul.f32 %v1248, %v1345
        %v1354 = vmul.f32 %v1249, %v1345
        %v1355 = vmul.f32 %v1250, %v1345
        %v1356 = vmul.f32 %v1251, %v1345
        %v1357 = vmul.f32 %v1252, %v1345
        %v1358 = vadd.f32 %v1333, %v1346
        %v1359 = vadd.f32 %v1334, %v1347
        %v1360 = vadd.f32 %v1335, %v1348
        %v1361 = vadd.f32 %v1336, %v1349
        %v1362 = vadd.f32 %v1337, %v1350
        %v1363 = vadd.f32 %v1338, %v1351
        %v1364 = vadd.f32 %v1339, %v1352
        %v1365 = vadd.f32 %v1340, %v1353
        %v1366 = vadd.f32 %v1341, %v1354
        %v1367 = vadd.f32 %v1342, %v1355
        %v1368 = vadd.f32 %v1343, %v1356
        %v1369 = vadd.f32 %v1344, %v1357
        %v1370 = vperm.slane %v658, 3
        %v1371 = vmul.f32 %v1243, %v1370
        %v1372 = vmul.f32 %v1244, %v1370
        %v1373 = vmul.f32 %v1245, %v1370
        %v1374 = vmul.f32 %v1246, %v1370
        %v1375 = vmul.f32 %v1247, %v1370
        %v1376 = vmul.f32 %v1248, %v1370
        %v1377 = vmul.f32 %v1249, %v1370
        %v1378 = vmul.f32 %v1250, %v1370
        %v1379 = vmul.f32 %v1251, %v1370
        %v1380 = vmul.f32 %v1252, %v1370
        %v1381 = vmul.f32 %v1253, %v1370
        %v1382 = vmul.f32 %v1254, %v1370
        %v1383 = vadd.f32 %v1358, %v1371
        %v1384 = vadd.f32 %v1359, %v1372
        %v1385 = vadd.f32 %v1360, %v1373
        %v1386 = vadd.f32 %v1361, %v1374
        %v1387 = vadd.f32 %v1362, %v1375
        %v1388 = vadd.f32 %v1363, %v1376
        %v1389 = vadd.f32 %v1364, %v1377
        %v1390 = vadd.f32 %v1365, %v1378
        %v1391 = vadd.f32 %v1366, %v1379
        %v1392 = vadd.f32 %v1367, %v1380
        %v1393 = vadd.f32 %v1368, %v1381
        %v1394 = vadd.f32 %v1369, %v1382
        %v1395 = vperm.slane %v659, 3
        %v1396 = vmul.f32 %v1245, %v1395
        %v1397 = vmul.f32 %v1246, %v1395
        %v1398 = vmul.f32 %v1247, %v1395
        %v1399 = vmul.f32 %v1248, %v1395
        %v1400 = vmul.f32 %v1249, %v1395
        %v1401 = vmul.f32 %v1250, %v1395
        %v1402 = vmul.f32 %v1251, %v1395
        %v1403 = vmul.f32 %v1252, %v1395
        %v1404 = vmul.f32 %v1253, %v1395
        %v1405 = vmul.f32 %v1254, %v1395
        %v1406 = vmul.f32 %v1255, %v1395
        %v1407 = vmul.f32 %v1256, %v1395
        %v1408 = vadd.f32 %v1383, %v1396
        %v1409 = vadd.f32 %v1384, %v1397
        %v1410 = vadd.f32 %v1385, %v1398
        %v1411 = vadd.f32 %v1386, %v1399
        %v1412 = vadd.f32 %v1387, %v1400
        %v1413 = vadd.f32 %v1388, %v1401
        %v1414 = vadd.f32 %v1389, %v1402
        %v1415 = vadd.f32 %v1390, %v1403
        %v1416 = vadd.f32 %v1391, %v1404
        %v1417 = vadd.f32 %v1392, %v1405
        %v1418 = vadd.f32 %v1393, %v1406
        %v1419 = vadd.f32 %v1394, %v1407
        %v1420 = vadd.f32 %v1022, %v1408
        %v1421 = vadd.f32 %v1023, %v1409
        %v1422 = vadd.f32 %v1024, %v1410
        %v1423 = vadd.f32 %v1025, %v1411
        %v1424 = vadd.f32 %v1026, %v1412
        %v1425 = vadd.f32 %v1027, %v1413
        %v1426 = vadd.f32 %v1028, %v1414
        %v1427 = vadd.f32 %v1029, %v1415
        %v1428 = vadd.f32 %v1030, %v1416
        %v1429 = vadd.f32 %v1031, %v1417
        %v1430 = vadd.f32 %v1032, %v1418
        %v1431 = vadd.f32 %v1033, %v1419
        %v1432 = vld [vmem:[#allocation2 + $0x11] sm:$0xff]
        %v1433 = vld [vmem:[#allocation2 + $0x19] sm:$0xff]
        %v1434 = vld [vmem:[#allocation2 + $0x39] sm:$0xff]
        %v1435 = vld [vmem:[#allocation2 + $0x41] sm:$0xff]
        %v1436 = vld [vmem:[#allocation2 + $0x61] sm:$0xff]
        %v1437 = vld [vmem:[#allocation2 + $0x69] sm:$0xff]
        %v1438 = vld [vmem:[#allocation2 + $0x89] sm:$0xff]
        %v1439 = vld [vmem:[#allocation2 + $0x91] sm:$0xff]
        %v1440 = vld [vmem:[#allocation2 + $0xb1] sm:$0xff]
        %v1441 = vld [vmem:[#allocation2 + $0xb9] sm:$0xff]
        %v1442 = vld [vmem:[#allocation2 + $0xd9] sm:$0xff]
        %v1443 = vld [vmem:[#allocation2 + $0xe1] sm:$0xff]
        %v1444 = vld [vmem:[#allocation2 + $0x101] sm:$0xff]
        %v1445 = vld [vmem:[#allocation2 + $0x109] sm:$0xff]
        %v1446 = vld [vmem:[#allocation2 + $0x129] sm:$0xff]
        %v1447 = vld [vmem:[#allocation2 + $0x131] sm:$0xff]
        %v1448 = vld [vmem:[#allocation2 + $0x151] sm:$0xff]
        %v1449 = vld [vmem:[#allocation2 + $0x159] sm:$0xff]
        %v1450 = vld [vmem:[#allocation2 + $0x179] sm:$0xff]
        %v1451 = vld [vmem:[#allocation2 + $0x181] sm:$0xff]
        %v1452 = vld [vmem:[#allocation2 + $0x1a1] sm:$0xff]
        %v1453 = vld [vmem:[#allocation2 + $0x1a9] sm:$0xff]
        %v1454 = vld [vmem:[#allocation2 + $0x1c9] sm:$0xff]
        %v1455 = vld [vmem:[#allocation2 + $0x1d1] sm:$0xff]
        %v1456 = vperm.slane %v653, 4
        %v1457 = vmul.f32 %v1432, %v1456
        %v1458 = vmul.f32 %v1433, %v1456
        %v1459 = vmul.f32 %v1434, %v1456
        %v1460 = vmul.f32 %v1435, %v1456
        %v1461 = vmul.f32 %v1436, %v1456
        %v1462 = vmul.f32 %v1437, %v1456
        %v1463 = vmul.f32 %v1438, %v1456
        %v1464 = vmul.f32 %v1439, %v1456
        %v1465 = vmul.f32 %v1440, %v1456
        %v1466 = vmul.f32 %v1441, %v1456
        %v1467 = vmul.f32 %v1442, %v1456
        %v1468 = vmul.f32 %v1443, %v1456
        %v1469 = vperm.slane %v654, 4
        %v1470 = vmul.f32 %v1434, %v1469
        %v1471 = vmul.f32 %v1435, %v1469
        %v1472 = vmul.f32 %v1436, %v1469
        %v1473 = vmul.f32 %v1437, %v1469
        %v1474 = vmul.f32 %v1438, %v1469
        %v1475 = vmul.f32 %v1439, %v1469
        %v1476 = vmul.f32 %v1440, %v1469
        %v1477 = vmul.f32 %v1441, %v1469
        %v1478 = vmul.f32 %v1442, %v1469
        %v1479 = vmul.f32 %v1443, %v1469
        %v1480 = vmul.f32 %v1444, %v1469
        %v1481 = vmul.f32 %v1445, %v1469
        %v1482 = vadd.f32 %v1457, %v1470
        %v1483 = vadd.f32 %v1458, %v1471
        %v1484 = vadd.f32 %v1459, %v1472
        %v1485 = vadd.f32 %v1460, %v1473
        %v1486 = vadd.f32 %v1461, %v1474
        %v1487 = vadd.f32 %v1462, %v1475
        %v1488 = vadd.f32 %v1463, %v1476
        %v1489 = vadd.f32 %v1464, %v1477
        %v1490 = vadd.f32 %v1465, %v1478
        %v1491 = vadd.f32 %v1466, %v1479
        %v1492 = vadd.f32 %v1467, %v1480
        %v1493 = vadd.f32 %v1468, %v1481
        %v1494 = vperm.slane %v655, 4
        %v1495 = vmul.f32 %v1436, %v1494
        %v1496 = vmul.f32 %v1437, %v1494
        %v1497 = vmul.f32 %v1438, %v1494
        %v1498 = vmul.f32 %v1439, %v1494
        %v1499 = vmul.f32 %v1440, %v1494
        %v1500 = vmul.f32 %v1441, %v1494
        %v1501 = vmul.f32 %v1442, %v1494
        %v1502 = vmul.f32 %v1443, %v1494
        %v1503 = vmul.f32 %v1444, %v1494
        %v1504 = vmul.f32 %v1445, %v1494
        %v1505 = vmul.f32 %v1446, %v1494
        %v1506 = vmul.f32 %v1447, %v1494
        %v1507 = vadd.f32 %v1482, %v1495
        %v1508 = vadd.f32 %v1483, %v1496
        %v1509 = vadd.f32 %v1484, %v1497
        %v1510 = vadd.f32 %v1485, %v1498
        %v1511 = vadd.f32 %v1486, %v1499
        %v1512 = vadd.f32 %v1487, %v1500
        %v1513 = vadd.f32 %v1488, %v1501
        %v1514 = vadd.f32 %v1489, %v1502
        %v1515 = vadd.f32 %v1490, %v1503
        %v1516 = vadd.f32 %v1491, %v1504
        %v1517 = vadd.f32 %v1492, %v1505
        %v1518 = vadd.f32 %v1493, %v1506
        %v1519 = vperm.slane %v656, 4
        %v1520 = vmul.f32 %v1438, %v1519
        %v1521 = vmul.f32 %v1439, %v1519
        %v1522 = vmul.f32 %v1440, %v1519
        %v1523 = vmul.f32 %v1441, %v1519
        %v1524 = vmul.f32 %v1442, %v1519
        %v1525 = vmul.f32 %v1443, %v1519
        %v1526 = vmul.f32 %v1444, %v1519
        %v1527 = vmul.f32 %v1445, %v1519
        %v1528 = vmul.f32 %v1446, %v1519
        %v1529 = vmul.f32 %v1447, %v1519
        %v1530 = vmul.f32 %v1448, %v1519
        %v1531 = vmul.f32 %v1449, %v1519
        %v1532 = vadd.f32 %v1507, %v1520
        %v1533 = vadd.f32 %v1508, %v1521
        %v1534 = vadd.f32 %v1509, %v1522
        %v1535 = vadd.f32 %v1510, %v1523
        %v1536 = vadd.f32 %v1511, %v1524
        %v1537 = vadd.f32 %v1512, %v1525
        %v1538 = vadd.f32 %v1513, %v1526
        %v1539 = vadd.f32 %v1514, %v1527
        %v1540 = vadd.f32 %v1515, %v1528
        %v1541 = vadd.f32 %v1516, %v1529
        %v1542 = vadd.f32 %v1517, %v1530
        %v1543 = vadd.f32 %v1518, %v1531
        %v1544 = vperm.slane %v657, 4
        %v1545 = vmul.f32 %v1440, %v1544
        %v1546 = vmul.f32 %v1441, %v1544
        %v1547 = vmul.f32 %v1442, %v1544
        %v1548 = vmul.f32 %v1443, %v1544
        %v1549 = vmul.f32 %v1444, %v1544
        %v1550 = vmul.f32 %v1445, %v1544
        %v1551 = vmul.f32 %v1446, %v1544
        %v1552 = vmul.f32 %v1447, %v1544
        %v1553 = vmul.f32 %v1448, %v1544
        %v1554 = vmul.f32 %v1449, %v1544
        %v1555 = vmul.f32 %v1450, %v1544
        %v1556 = vmul.f32 %v1451, %v1544
        %v1557 = vadd.f32 %v1532, %v1545
        %v1558 = vadd.f32 %v1533, %v1546
        %v1559 = vadd.f32 %v1534, %v1547
        %v1560 = vadd.f32 %v1535, %v1548
        %v1561 = vadd.f32 %v1536, %v1549
        %v1562 = vadd.f32 %v1537, %v1550
        %v1563 = vadd.f32 %v1538, %v1551
        %v1564 = vadd.f32 %v1539, %v1552
        %v1565 = vadd.f32 %v1540, %v1553
        %v1566 = vadd.f32 %v1541, %v1554
        %v1567 = vadd.f32 %v1542, %v1555
        %v1568 = vadd.f32 %v1543, %v1556
        %v1569 = vperm.slane %v658, 4
        %v1570 = vmul.f32 %v1442, %v1569
        %v1571 = vmul.f32 %v1443, %v1569
        %v1572 = vmul.f32 %v1444, %v1569
        %v1573 = vmul.f32 %v1445, %v1569
        %v1574 = vmul.f32 %v1446, %v1569
        %v1575 = vmul.f32 %v1447, %v1569
        %v1576 = vmul.f32 %v1448, %v1569
        %v1577 = vmul.f32 %v1449, %v1569
        %v1578 = vmul.f32 %v1450, %v1569
        %v1579 = vmul.f32 %v1451, %v1569
        %v1580 = vmul.f32 %v1452, %v1569
        %v1581 = vmul.f32 %v1453, %v1569
        %v1582 = vadd.f32 %v1557, %v1570
        %v1583 = vadd.f32 %v1558, %v1571
        %v1584 = vadd.f32 %v1559, %v1572
        %v1585 = vadd.f32 %v1560, %v1573
        %v1586 = vadd.f32 %v1561, %v1574
        %v1587 = vadd.f32 %v1562, %v1575
        %v1588 = vadd.f32 %v1563, %v1576
        %v1589 = vadd.f32 %v1564, %v1577
        %v1590 = vadd.f32 %v1565, %v1578
        %v1591 = vadd.f32 %v1566, %v1579
        %v1592 = vadd.f32 %v1567, %v1580
        %v1593 = vadd.f32 %v1568, %v1581
        %v1594 = vperm.slane %v659, 4
        %v1595 = vmul.f32 %v1444, %v1594
        %v1596 = vmul.f32 %v1445, %v1594
        %v1597 = vmul.f32 %v1446, %v1594
        %v1598 = vmul.f32 %v1447, %v1594
        %v1599 = vmul.f32 %v1448, %v1594
        %v1600 = vmul.f32 %v1449, %v1594
        %v1601 = vmul.f32 %v1450, %v1594
        %v1602 = vmul.f32 %v1451, %v1594
        %v1603 = vmul.f32 %v1452, %v1594
        %v1604 = vmul.f32 %v1453, %v1594
        %v1605 = vmul.f32 %v1454, %v1594
        %v1606 = vmul.f32 %v1455, %v1594
        %v1607 = vadd.f32 %v1582, %v1595
        %v1608 = vadd.f32 %v1583, %v1596
        %v1609 = vadd.f32 %v1584, %v1597
        %v1610 = vadd.f32 %v1585, %v1598
        %v1611 = vadd.f32 %v1586, %v1599
        %v1612 = vadd.f32 %v1587, %v1600
        %v1613 = vadd.f32 %v1588, %v1601
        %v1614 = vadd.f32 %v1589, %v1602
        %v1615 = vadd.f32 %v1590, %v1603
        %v1616 = vadd.f32 %v1591, %v1604
        %v1617 = vadd.f32 %v1592, %v1605
        %v1618 = vadd.f32 %v1593, %v1606
        %v1619 = vadd.f32 %v1221, %v1607
        %v1620 = vadd.f32 %v1222, %v1608
        %v1621 = vadd.f32 %v1223, %v1609
        %v1622 = vadd.f32 %v1224, %v1610
        %v1623 = vadd.f32 %v1225, %v1611
        %v1624 = vadd.f32 %v1226, %v1612
        %v1625 = vadd.f32 %v1227, %v1613
        %v1626 = vadd.f32 %v1228, %v1614
        %v1627 = vadd.f32 %v1229, %v1615
        %v1628 = vadd.f32 %v1230, %v1616
        %v1629 = vadd.f32 %v1231, %v1617
        %v1630 = vadd.f32 %v1232, %v1618
        %v1631 = vld [vmem:[#allocation2 + $0x12] sm:$0xff]
        %v1632 = vld [vmem:[#allocation2 + $0x1a] sm:$0xff]
        %v1633 = vld [vmem:[#allocation2 + $0x3a] sm:$0xff]
        %v1634 = vld [vmem:[#allocation2 + $0x42] sm:$0xff]
        %v1635 = vld [vmem:[#allocation2 + $0x62] sm:$0xff]
        %v1636 = vld [vmem:[#allocation2 + $0x6a] sm:$0xff]
        %v1637 = vld [vmem:[#allocation2 + $0x8a] sm:$0xff]
        %v1638 = vld [vmem:[#allocation2 + $0x92] sm:$0xff]
        %v1639 = vld [vmem:[#allocation2 + $0xb2] sm:$0xff]
        %v1640 = vld [vmem:[#allocation2 + $0xba] sm:$0xff]
        %v1641 = vld [vmem:[#allocation2 + $0xda] sm:$0xff]
        %v1642 = vld [vmem:[#allocation2 + $0xe2] sm:$0xff]
        %v1643 = vld [vmem:[#allocation2 + $0x102] sm:$0xff]
        %v1644 = vld [vmem:[#allocation2 + $0x10a] sm:$0xff]
        %v1645 = vld [vmem:[#allocation2 + $0x12a] sm:$0xff]
        %v1646 = vld [vmem:[#allocation2 + $0x132] sm:$0xff]
        %v1647 = vld [vmem:[#allocation2 + $0x152] sm:$0xff]
        %v1648 = vld [vmem:[#allocation2 + $0x15a] sm:$0xff]
        %v1649 = vld [vmem:[#allocation2 + $0x17a] sm:$0xff]
        %v1650 = vld [vmem:[#allocation2 + $0x182] sm:$0xff]
        %v1651 = vld [vmem:[#allocation2 + $0x1a2] sm:$0xff]
        %v1652 = vld [vmem:[#allocation2 + $0x1aa] sm:$0xff]
        %v1653 = vld [vmem:[#allocation2 + $0x1ca] sm:$0xff]
        %v1654 = vld [vmem:[#allocation2 + $0x1d2] sm:$0xff]
        %v1655 = vperm.slane %v653, 5
        %v1656 = vmul.f32 %v1631, %v1655
        %v1657 = vmul.f32 %v1632, %v1655
        %v1658 = vmul.f32 %v1633, %v1655
        %v1659 = vmul.f32 %v1634, %v1655
        %v1660 = vmul.f32 %v1635, %v1655
        %v1661 = vmul.f32 %v1636, %v1655
        %v1662 = vmul.f32 %v1637, %v1655
        %v1663 = vmul.f32 %v1638, %v1655
        %v1664 = vmul.f32 %v1639, %v1655
        %v1665 = vmul.f32 %v1640, %v1655
        %v1666 = vmul.f32 %v1641, %v1655
        %v1667 = vmul.f32 %v1642, %v1655
        %v1668 = vperm.slane %v654, 5
        %v1669 = vmul.f32 %v1633, %v1668
        %v1670 = vmul.f32 %v1634, %v1668
        %v1671 = vmul.f32 %v1635, %v1668
        %v1672 = vmul.f32 %v1636, %v1668
        %v1673 = vmul.f32 %v1637, %v1668
        %v1674 = vmul.f32 %v1638, %v1668
        %v1675 = vmul.f32 %v1639, %v1668
        %v1676 = vmul.f32 %v1640, %v1668
        %v1677 = vmul.f32 %v1641, %v1668
        %v1678 = vmul.f32 %v1642, %v1668
        %v1679 = vmul.f32 %v1643, %v1668
        %v1680 = vmul.f32 %v1644, %v1668
        %v1681 = vadd.f32 %v1656, %v1669
        %v1682 = vadd.f32 %v1657, %v1670
        %v1683 = vadd.f32 %v1658, %v1671
        %v1684 = vadd.f32 %v1659, %v1672
        %v1685 = vadd.f32 %v1660, %v1673
        %v1686 = vadd.f32 %v1661, %v1674
        %v1687 = vadd.f32 %v1662, %v1675
        %v1688 = vadd.f32 %v1663, %v1676
        %v1689 = vadd.f32 %v1664, %v1677
        %v1690 = vadd.f32 %v1665, %v1678
        %v1691 = vadd.f32 %v1666, %v1679
        %v1692 = vadd.f32 %v1667, %v1680
        %v1693 = vperm.slane %v655, 5
        %v1694 = vmul.f32 %v1635, %v1693
        %v1695 = vmul.f32 %v1636, %v1693
        %v1696 = vmul.f32 %v1637, %v1693
        %v1697 = vmul.f32 %v1638, %v1693
        %v1698 = vmul.f32 %v1639, %v1693
        %v1699 = vmul.f32 %v1640, %v1693
        %v1700 = vmul.f32 %v1641, %v1693
        %v1701 = vmul.f32 %v1642, %v1693
        %v1702 = vmul.f32 %v1643, %v1693
        %v1703 = vmul.f32 %v1644, %v1693
        %v1704 = vmul.f32 %v1645, %v1693
        %v1705 = vmul.f32 %v1646, %v1693
        %v1706 = vadd.f32 %v1681, %v1694
        %v1707 = vadd.f32 %v1682, %v1695
        %v1708 = vadd.f32 %v1683, %v1696
        %v1709 = vadd.f32 %v1684, %v1697
        %v1710 = vadd.f32 %v1685, %v1698
        %v1711 = vadd.f32 %v1686, %v1699
        %v1712 = vadd.f32 %v1687, %v1700
        %v1713 = vadd.f32 %v1688, %v1701
        %v1714 = vadd.f32 %v1689, %v1702
        %v1715 = vadd.f32 %v1690, %v1703
        %v1716 = vadd.f32 %v1691, %v1704
        %v1717 = vadd.f32 %v1692, %v1705
        %v1718 = vperm.slane %v656, 5
        %v1719 = vmul.f32 %v1637, %v1718
        %v1720 = vmul.f32 %v1638, %v1718
        %v1721 = vmul.f32 %v1639, %v1718
        %v1722 = vmul.f32 %v1640, %v1718
        %v1723 = vmul.f32 %v1641, %v1718
        %v1724 = vmul.f32 %v1642, %v1718
        %v1725 = vmul.f32 %v1643, %v1718
        %v1726 = vmul.f32 %v1644, %v1718
        %v1727 = vmul.f32 %v1645, %v1718
        %v1728 = vmul.f32 %v1646, %v1718
        %v1729 = vmul.f32 %v1647, %v1718
        %v1730 = vmul.f32 %v1648, %v1718
        %v1731 = vadd.f32 %v1706, %v1719
        %v1732 = vadd.f32 %v1707, %v1720
        %v1733 = vadd.f32 %v1708, %v1721
        %v1734 = vadd.f32 %v1709, %v1722
        %v1735 = vadd.f32 %v1710, %v1723
        %v1736 = vadd.f32 %v1711, %v1724
        %v1737 = vadd.f32 %v1712, %v1725
        %v1738 = vadd.f32 %v1713, %v1726
        %v1739 = vadd.f32 %v1714, %v1727
        %v1740 = vadd.f32 %v1715, %v1728
        %v1741 = vadd.f32 %v1716, %v1729
        %v1742 = vadd.f32 %v1717, %v1730
        %v1743 = vperm.slane %v657, 5
        %v1744 = vmul.f32 %v1639, %v1743
        %v1745 = vmul.f32 %v1640, %v1743
        %v1746 = vmul.f32 %v1641, %v1743
        %v1747 = vmul.f32 %v1642, %v1743
        %v1748 = vmul.f32 %v1643, %v1743
        %v1749 = vmul.f32 %v1644, %v1743
        %v1750 = vmul.f32 %v1645, %v1743
        %v1751 = vmul.f32 %v1646, %v1743
        %v1752 = vmul.f32 %v1647, %v1743
        %v1753 = vmul.f32 %v1648, %v1743
        %v1754 = vmul.f32 %v1649, %v1743
        %v1755 = vmul.f32 %v1650, %v1743
        %v1756 = vadd.f32 %v1731, %v1744
        %v1757 = vadd.f32 %v1732, %v1745
        %v1758 = vadd.f32 %v1733, %v1746
        %v1759 = vadd.f32 %v1734, %v1747
        %v1760 = vadd.f32 %v1735, %v1748
        %v1761 = vadd.f32 %v1736, %v1749
        %v1762 = vadd.f32 %v1737, %v1750
        %v1763 = vadd.f32 %v1738, %v1751
        %v1764 = vadd.f32 %v1739, %v1752
        %v1765 = vadd.f32 %v1740, %v1753
        %v1766 = vadd.f32 %v1741, %v1754
        %v1767 = vadd.f32 %v1742, %v1755
        %v1768 = vperm.slane %v658, 5
        %v1769 = vmul.f32 %v1641, %v1768
        %v1770 = vmul.f32 %v1642, %v1768
        %v1771 = vmul.f32 %v1643, %v1768
        %v1772 = vmul.f32 %v1644, %v1768
        %v1773 = vmul.f32 %v1645, %v1768
        %v1774 = vmul.f32 %v1646, %v1768
        %v1775 = vmul.f32 %v1647, %v1768
        %v1776 = vmul.f32 %v1648, %v1768
        %v1777 = vmul.f32 %v1649, %v1768
        %v1778 = vmul.f32 %v1650, %v1768
        %v1779 = vmul.f32 %v1651, %v1768
        %v1780 = vmul.f32 %v1652, %v1768
        %v1781 = vadd.f32 %v1756, %v1769
        %v1782 = vadd.f32 %v1757, %v1770
        %v1783 = vadd.f32 %v1758, %v1771
        %v1784 = vadd.f32 %v1759, %v1772
        %v1785 = vadd.f32 %v1760, %v1773
        %v1786 = vadd.f32 %v1761, %v1774
        %v1787 = vadd.f32 %v1762, %v1775
        %v1788 = vadd.f32 %v1763, %v1776
        %v1789 = vadd.f32 %v1764, %v1777
        %v1790 = vadd.f32 %v1765, %v1778
        %v1791 = vadd.f32 %v1766, %v1779
        %v1792 = vadd.f32 %v1767, %v1780
        %v1793 = vperm.slane %v659, 5
        %v1794 = vmul.f32 %v1643, %v1793
        %v1795 = vmul.f32 %v1644, %v1793
        %v1796 = vmul.f32 %v1645, %v1793
        %v1797 = vmul.f32 %v1646, %v1793
        %v1798 = vmul.f32 %v1647, %v1793
        %v1799 = vmul.f32 %v1648, %v1793
        %v1800 = vmul.f32 %v1649, %v1793
        %v1801 = vmul.f32 %v1650, %v1793
        %v1802 = vmul.f32 %v1651, %v1793
        %v1803 = vmul.f32 %v1652, %v1793
        %v1804 = vmul.f32 %v1653, %v1793
        %v1805 = vmul.f32 %v1654, %v1793
        %v1806 = vadd.f32 %v1781, %v1794
        %v1807 = vadd.f32 %v1782, %v1795
        %v1808 = vadd.f32 %v1783, %v1796
        %v1809 = vadd.f32 %v1784, %v1797
        %v1810 = vadd.f32 %v1785, %v1798
        %v1811 = vadd.f32 %v1786, %v1799
        %v1812 = vadd.f32 %v1787, %v1800
        %v1813 = vadd.f32 %v1788, %v1801
        %v1814 = vadd.f32 %v1789, %v1802
        %v1815 = vadd.f32 %v1790, %v1803
        %v1816 = vadd.f32 %v1791, %v1804
        %v1817 = vadd.f32 %v1792, %v1805
        %v1818 = vadd.f32 %v1420, %v1806
        %v1819 = vadd.f32 %v1421, %v1807
        %v1820 = vadd.f32 %v1422, %v1808
        %v1821 = vadd.f32 %v1423, %v1809
        %v1822 = vadd.f32 %v1424, %v1810
        %v1823 = vadd.f32 %v1425, %v1811
        %v1824 = vadd.f32 %v1426, %v1812
        %v1825 = vadd.f32 %v1427, %v1813
        %v1826 = vadd.f32 %v1428, %v1814
        %v1827 = vadd.f32 %v1429, %v1815
        %v1828 = vadd.f32 %v1430, %v1816
        %v1829 = vadd.f32 %v1431, %v1817
        %v1830 = vld [vmem:[#allocation2 + $0x13] sm:$0xff]
        %v1831 = vld [vmem:[#allocation2 + $0x1b] sm:$0xff]
        %v1832 = vld [vmem:[#allocation2 + $0x3b] sm:$0xff]
        %v1833 = vld [vmem:[#allocation2 + $0x43] sm:$0xff]
        %v1834 = vld [vmem:[#allocation2 + $0x63] sm:$0xff]
        %v1835 = vld [vmem:[#allocation2 + $0x6b] sm:$0xff]
        %v1836 = vld [vmem:[#allocation2 + $0x8b] sm:$0xff]
        %v1837 = vld [vmem:[#allocation2 + $0x93] sm:$0xff]
        %v1838 = vld [vmem:[#allocation2 + $0xb3] sm:$0xff]
        %v1839 = vld [vmem:[#allocation2 + $0xbb] sm:$0xff]
        %v1840 = vld [vmem:[#allocation2 + $0xdb] sm:$0xff]
        %v1841 = vld [vmem:[#allocation2 + $0xe3] sm:$0xff]
        %v1842 = vld [vmem:[#allocation2 + $0x103] sm:$0xff]
        %v1843 = vld [vmem:[#allocation2 + $0x10b] sm:$0xff]
        %v1844 = vld [vmem:[#allocation2 + $0x12b] sm:$0xff]
        %v1845 = vld [vmem:[#allocation2 + $0x133] sm:$0xff]
        %v1846 = vld [vmem:[#allocation2 + $0x153] sm:$0xff]
        %v1847 = vld [vmem:[#allocation2 + $0x15b] sm:$0xff]
        %v1848 = vld [vmem:[#allocation2 + $0x17b] sm:$0xff]
        %v1849 = vld [vmem:[#allocation2 + $0x183] sm:$0xff]
        %v1850 = vld [vmem:[#allocation2 + $0x1a3] sm:$0xff]
        %v1851 = vld [vmem:[#allocation2 + $0x1ab] sm:$0xff]
        %v1852 = vld [vmem:[#allocation2 + $0x1cb] sm:$0xff]
        %v1853 = vld [vmem:[#allocation2 + $0x1d3] sm:$0xff]
        %v1854 = vperm.slane %v653, 6
        %v1855 = vmul.f32 %v1830, %v1854
        %v1856 = vmul.f32 %v1831, %v1854
        %v1857 = vmul.f32 %v1832, %v1854
        %v1858 = vmul.f32 %v1833, %v1854
        %v1859 = vmul.f32 %v1834, %v1854
        %v1860 = vmul.f32 %v1835, %v1854
        %v1861 = vmul.f32 %v1836, %v1854
        %v1862 = vmul.f32 %v1837, %v1854
        %v1863 = vmul.f32 %v1838, %v1854
        %v1864 = vmul.f32 %v1839, %v1854
        %v1865 = vmul.f32 %v1840, %v1854
        %v1866 = vmul.f32 %v1841, %v1854
        %v1867 = vperm.slane %v654, 6
        %v1868 = vmul.f32 %v1832, %v1867
        %v1869 = vmul.f32 %v1833, %v1867
        %v1870 = vmul.f32 %v1834, %v1867
        %v1871 = vmul.f32 %v1835, %v1867
        %v1872 = vmul.f32 %v1836, %v1867
        %v1873 = vmul.f32 %v1837, %v1867
        %v1874 = vmul.f32 %v1838, %v1867
        %v1875 = vmul.f32 %v1839, %v1867
        %v1876 = vmul.f32 %v1840, %v1867
        %v1877 = vmul.f32 %v1841, %v1867
        %v1878 = vmul.f32 %v1842, %v1867
        %v1879 = vmul.f32 %v1843, %v1867
        %v1880 = vadd.f32 %v1855, %v1868
        %v1881 = vadd.f32 %v1856, %v1869
        %v1882 = vadd.f32 %v1857, %v1870
        %v1883 = vadd.f32 %v1858, %v1871
        %v1884 = vadd.f32 %v1859, %v1872
        %v1885 = vadd.f32 %v1860, %v1873
        %v1886 = vadd.f32 %v1861, %v1874
        %v1887 = vadd.f32 %v1862, %v1875
        %v1888 = vadd.f32 %v1863, %v1876
        %v1889 = vadd.f32 %v1864, %v1877
        %v1890 = vadd.f32 %v1865, %v1878
        %v1891 = vadd.f32 %v1866, %v1879
        %v1892 = vperm.slane %v655, 6
        %v1893 = vmul.f32 %v1834, %v1892
        %v1894 = vmul.f32 %v1835, %v1892
        %v1895 = vmul.f32 %v1836, %v1892
        %v1896 = vmul.f32 %v1837, %v1892
        %v1897 = vmul.f32 %v1838, %v1892
        %v1898 = vmul.f32 %v1839, %v1892
        %v1899 = vmul.f32 %v1840, %v1892
        %v1900 = vmul.f32 %v1841, %v1892
        %v1901 = vmul.f32 %v1842, %v1892
        %v1902 = vmul.f32 %v1843, %v1892
        %v1903 = vmul.f32 %v1844, %v1892
        %v1904 = vmul.f32 %v1845, %v1892
        %v1905 = vadd.f32 %v1880, %v1893
        %v1906 = vadd.f32 %v1881, %v1894
        %v1907 = vadd.f32 %v1882, %v1895
        %v1908 = vadd.f32 %v1883, %v1896
        %v1909 = vadd.f32 %v1884, %v1897
        %v1910 = vadd.f32 %v1885, %v1898
        %v1911 = vadd.f32 %v1886, %v1899
        %v1912 = vadd.f32 %v1887, %v1900
        %v1913 = vadd.f32 %v1888, %v1901
        %v1914 = vadd.f32 %v1889, %v1902
        %v1915 = vadd.f32 %v1890, %v1903
        %v1916 = vadd.f32 %v1891, %v1904
        %v1917 = vperm.slane %v656, 6
        %v1918 = vmul.f32 %v1836, %v1917
        %v1919 = vmul.f32 %v1837, %v1917
        %v1920 = vmul.f32 %v1838, %v1917
        %v1921 = vmul.f32 %v1839, %v1917
        %v1922 = vmul.f32 %v1840, %v1917
        %v1923 = vmul.f32 %v1841, %v1917
        %v1924 = vmul.f32 %v1842, %v1917
        %v1925 = vmul.f32 %v1843, %v1917
        %v1926 = vmul.f32 %v1844, %v1917
        %v1927 = vmul.f32 %v1845, %v1917
        %v1928 = vmul.f32 %v1846, %v1917
        %v1929 = vmul.f32 %v1847, %v1917
        %v1930 = vadd.f32 %v1905, %v1918
        %v1931 = vadd.f32 %v1906, %v1919
        %v1932 = vadd.f32 %v1907, %v1920
        %v1933 = vadd.f32 %v1908, %v1921
        %v1934 = vadd.f32 %v1909, %v1922
        %v1935 = vadd.f32 %v1910, %v1923
        %v1936 = vadd.f32 %v1911, %v1924
        %v1937 = vadd.f32 %v1912, %v1925
        %v1938 = vadd.f32 %v1913, %v1926
        %v1939 = vadd.f32 %v1914, %v1927
        %v1940 = vadd.f32 %v1915, %v1928
        %v1941 = vadd.f32 %v1916, %v1929
        %v1942 = vperm.slane %v657, 6
        %v1943 = vmul.f32 %v1838, %v1942
        %v1944 = vmul.f32 %v1839, %v1942
        %v1945 = vmul.f32 %v1840, %v1942
        %v1946 = vmul.f32 %v1841, %v1942
        %v1947 = vmul.f32 %v1842, %v1942
        %v1948 = vmul.f32 %v1843, %v1942
        %v1949 = vmul.f32 %v1844, %v1942
        %v1950 = vmul.f32 %v1845, %v1942
        %v1951 = vmul.f32 %v1846, %v1942
        %v1952 = vmul.f32 %v1847, %v1942
        %v1953 = vmul.f32 %v1848, %v1942
        %v1954 = vmul.f32 %v1849, %v1942
        %v1955 = vadd.f32 %v1930, %v1943
        %v1956 = vadd.f32 %v1931, %v1944
        %v1957 = vadd.f32 %v1932, %v1945
        %v1958 = vadd.f32 %v1933, %v1946
        %v1959 = vadd.f32 %v1934, %v1947
        %v1960 = vadd.f32 %v1935, %v1948
        %v1961 = vadd.f32 %v1936, %v1949
        %v1962 = vadd.f32 %v1937, %v1950
        %v1963 = vadd.f32 %v1938, %v1951
        %v1964 = vadd.f32 %v1939, %v1952
        %v1965 = vadd.f32 %v1940, %v1953
        %v1966 = vadd.f32 %v1941, %v1954
        %v1967 = vperm.slane %v658, 6
        %v1968 = vmul.f32 %v1840, %v1967
        %v1969 = vmul.f32 %v1841, %v1967
        %v1970 = vmul.f32 %v1842, %v1967
        %v1971 = vmul.f32 %v1843, %v1967
        %v1972 = vmul.f32 %v1844, %v1967
        %v1973 = vmul.f32 %v1845, %v1967
        %v1974 = vmul.f32 %v1846, %v1967
        %v1975 = vmul.f32 %v1847, %v1967
        %v1976 = vmul.f32 %v1848, %v1967
        %v1977 = vmul.f32 %v1849, %v1967
        %v1978 = vmul.f32 %v1850, %v1967
        %v1979 = vmul.f32 %v1851, %v1967
        %v1980 = vadd.f32 %v1955, %v1968
        %v1981 = vadd.f32 %v1956, %v1969
        %v1982 = vadd.f32 %v1957, %v1970
        %v1983 = vadd.f32 %v1958, %v1971
        %v1984 = vadd.f32 %v1959, %v1972
        %v1985 = vadd.f32 %v1960, %v1973
        %v1986 = vadd.f32 %v1961, %v1974
        %v1987 = vadd.f32 %v1962, %v1975
        %v1988 = vadd.f32 %v1963, %v1976
        %v1989 = vadd.f32 %v1964, %v1977
        %v1990 = vadd.f32 %v1965, %v1978
        %v1991 = vadd.f32 %v1966, %v1979
        %v1992 = vperm.slane %v659, 6
        %v1993 = vmul.f32 %v1842, %v1992
        %v1994 = vmul.f32 %v1843, %v1992
        %v1995 = vmul.f32 %v1844, %v1992
        %v1996 = vmul.f32 %v1845, %v1992
        %v1997 = vmul.f32 %v1846, %v1992
        %v1998 = vmul.f32 %v1847, %v1992
        %v1999 = vmul.f32 %v1848, %v1992
        %v2000 = vmul.f32 %v1849, %v1992
        %v2001 = vmul.f32 %v1850, %v1992
        %v2002 = vmul.f32 %v1851, %v1992
        %v2003 = vmul.f32 %v1852, %v1992
        %v2004 = vmul.f32 %v1853, %v1992
        %v2005 = vadd.f32 %v1980, %v1993
        %v2006 = vadd.f32 %v1981, %v1994
        %v2007 = vadd.f32 %v1982, %v1995
        %v2008 = vadd.f32 %v1983, %v1996
        %v2009 = vadd.f32 %v1984, %v1997
        %v2010 = vadd.f32 %v1985, %v1998
        %v2011 = vadd.f32 %v1986, %v1999
        %v2012 = vadd.f32 %v1987, %v2000
        %v2013 = vadd.f32 %v1988, %v2001
        %v2014 = vadd.f32 %v1989, %v2002
        %v2015 = vadd.f32 %v1990, %v2003
        %v2016 = vadd.f32 %v1991, %v2004
        %v2017 = vadd.f32 %v1619, %v2005
        %v2018 = vadd.f32 %v1620, %v2006
        %v2019 = vadd.f32 %v1621, %v2007
        %v2020 = vadd.f32 %v1622, %v2008
        %v2021 = vadd.f32 %v1623, %v2009
        %v2022 = vadd.f32 %v1624, %v2010
        %v2023 = vadd.f32 %v1625, %v2011
        %v2024 = vadd.f32 %v1626, %v2012
        %v2025 = vadd.f32 %v1627, %v2013
        %v2026 = vadd.f32 %v1628, %v2014
        %v2027 = vadd.f32 %v1629, %v2015
        %v2028 = vadd.f32 %v1630, %v2016
        %v2029 = vadd.f32 %v2017, %v1818
        %v2030 = vadd.f32 %v2018, %v1819
        %v2031 = vadd.f32 %v2019, %v1820
        %v2032 = vadd.f32 %v2020, %v1821
        %v2033 = vadd.f32 %v2021, %v1822
        %v2034 = vadd.f32 %v2022, %v1823
        %v2035 = vadd.f32 %v2023, %v1824
        %v2036 = vadd.f32 %v2024, %v1825
        %v2037 = vadd.f32 %v2025, %v1826
        %v2038 = vadd.f32 %v2026, %v1827
        %v2039 = vadd.f32 %v2027, %v1828
        %v2040 = vadd.f32 %v2028, %v1829
        %v2041 = vld [vmem:[%s4] sm:$0x1]
        %v2043 = vperm.slane %v2041, 0
        %v2045 = vadd.f32 %v2029, %v2043
        %v2046 = vadd.f32 %v2030, %v2043
        %v2047 = vadd.f32 %v2031, %v2043
        %v2048 = vadd.f32 %v2032, %v2043
        %v2049 = vadd.f32 %v2033, %v2043
        %v2050 = vadd.f32 %v2034, %v2043
        %v2051 = vadd.f32 %v2035, %v2043
        %v2052 = vadd.f32 %v2036, %v2043
        %v2053 = vadd.f32 %v2037, %v2043
        %v2054 = vadd.f32 %v2038, %v2043
        %v2055 = vadd.f32 %v2039, %v2043
        %v2056 = vadd.f32 %v2040, %v2043
        %2057 = vadd.xlane.f32.xlu0 %v2045
        %v2058 = vpop.xlane.xlu0 %2057
        %2059 = vadd.xlane.f32.xlu0 %v2046
        %v2060 = vpop.xlane.xlu0 %2059
        %2061 = vadd.xlane.f32.xlu0 %v2047
        %v2062 = vpop.xlane.xlu0 %2061
        %2063 = vadd.xlane.f32.xlu0 %v2048
        %v2064 = vpop.xlane.xlu0 %2063
        %2065 = vadd.xlane.f32.xlu0 %v2049
        %v2066 = vpop.xlane.xlu0 %2065
        %2067 = vadd.xlane.f32.xlu0 %v2050
        %v2068 = vpop.xlane.xlu0 %2067
        %2069 = vadd.xlane.f32.xlu0 %v2051
        %v2070 = vpop.xlane.xlu0 %2069
        %2071 = vadd.xlane.f32.xlu0 %v2052
        %v2072 = vpop.xlane.xlu0 %2071
        %2073 = vadd.xlane.f32.xlu0 %v2053
        %v2074 = vpop.xlane.xlu0 %2073
        %2075 = vadd.xlane.f32.xlu0 %v2054
        %v2076 = vpop.xlane.xlu0 %2075
        %2077 = vadd.xlane.f32.xlu0 %v2055
        %v2078 = vpop.xlane.xlu0 %2077
        %2079 = vadd.xlane.f32.xlu0 %v2056
        %v2080 = vpop.xlane.xlu0 %2079
        %v2081 = vmul.f32 %v2058, 0.125
        %v2082 = vmul.f32 %v2060, 0.125
        %v2083 = vmul.f32 %v2062, 0.125
        %v2084 = vmul.f32 %v2064, 0.125
        %v2085 = vmul.f32 %v2066, 0.125
        %v2086 = vmul.f32 %v2068, 0.125
        %v2087 = vmul.f32 %v2070, 0.125
        %v2088 = vmul.f32 %v2072, 0.125
        %v2089 = vmul.f32 %v2074, 0.125
        %v2090 = vmul.f32 %v2076, 0.125
        %v2091 = vmul.f32 %v2078, 0.125
        %v2092 = vmul.f32 %v2080, 0.125
        %v2093 = vsub.f32 %v2045, %v2081
        %v2094 = vsub.f32 %v2046, %v2082
        %v2095 = vsub.f32 %v2047, %v2083
        %v2096 = vsub.f32 %v2048, %v2084
        %v2097 = vsub.f32 %v2049, %v2085
        %v2098 = vsub.f32 %v2050, %v2086
        %v2099 = vsub.f32 %v2051, %v2087
        %v2100 = vsub.f32 %v2052, %v2088
        %v2101 = vsub.f32 %v2053, %v2089
        %v2102 = vsub.f32 %v2054, %v2090
        %v2103 = vsub.f32 %v2055, %v2091
        %v2104 = vsub.f32 %v2056, %v2092
        %v2105 = vmul.f32 %v2093, %v2093
        %v2106 = vmul.f32 %v2094, %v2094
        %v2107 = vmul.f32 %v2095, %v2095
        %v2108 = vmul.f32 %v2096, %v2096
        %v2109 = vmul.f32 %v2097, %v2097
        %v2110 = vmul.f32 %v2098, %v2098
        %v2111 = vmul.f32 %v2099, %v2099
        %v2112 = vmul.f32 %v2100, %v2100
        %v2113 = vmul.f32 %v2101, %v2101
        %v2114 = vmul.f32 %v2102, %v2102
        %v2115 = vmul.f32 %v2103, %v2103
        %v2116 = vmul.f32 %v2104, %v2104
        %2117 = vadd.xlane.f32.xlu0 %v2105
        %v2118 = vpop.xlane.xlu0 %2117
        %2119 = vadd.xlane.f32.xlu0 %v2106
        %v2120 = vpop.xlane.xlu0 %2119
        %2121 = vadd.xlane.f32.xlu0 %v2107
        %v2122 = vpop.xlane.xlu0 %2121
        %2123 = vadd.xlane.f32.xlu0 %v2108
        %v2124 = vpop.xlane.xlu0 %2123
        %2125 = vadd.xlane.f32.xlu0 %v2109
        %v2126 = vpop.xlane.xlu0 %2125
        %2127 = vadd.xlane.f32.xlu0 %v2110
        %v2128 = vpop.xlane.xlu0 %2127
        %2129 = vadd.xlane.f32.xlu0 %v2111
        %v2130 = vpop.xlane.xlu0 %2129
        %2131 = vadd.xlane.f32.xlu0 %v2112
        %v2132 = vpop.xlane.xlu0 %2131
        %2133 = vadd.xlane.f32.xlu0 %v2113
        %v2134 = vpop.xlane.xlu0 %2133
        %2135 = vadd.xlane.f32.xlu0 %v2114
        %v2136 = vpop.xlane.xlu0 %2135
        %2137 = vadd.xlane.f32.xlu0 %v2115
        %v2138 = vpop.xlane.xlu0 %2137
        %2139 = vadd.xlane.f32.xlu0 %v2116
        %v2140 = vpop.xlane.xlu0 %2139
        %v2141 = vmul.f32 %v2081, %v2081
        %v2142 = vmul.f32 %v2082, %v2082
        %v2143 = vmul.f32 %v2083, %v2083
        %v2144 = vmul.f32 %v2084, %v2084
        %v2145 = vmul.f32 %v2085, %v2085
        %v2146 = vmul.f32 %v2086, %v2086
        %v2147 = vmul.f32 %v2087, %v2087
        %v2148 = vmul.f32 %v2088, %v2088
        %v2149 = vmul.f32 %v2089, %v2089
        %v2150 = vmul.f32 %v2090, %v2090
        %v2151 = vmul.f32 %v2091, %v2091
        %v2152 = vmul.f32 %v2092, %v2092
        %v2153 = vmul.f32 %v2141, 120.0
        %v2154 = vmul.f32 %v2142, 120.0
        %v2155 = vmul.f32 %v2143, 120.0
        %v2156 = vmul.f32 %v2144, 120.0
        %v2157 = vmul.f32 %v2145, 120.0
        %v2158 = vmul.f32 %v2146, 120.0
        %v2159 = vmul.f32 %v2147, 120.0
        %v2160 = vmul.f32 %v2148, 120.0
        %v2161 = vmul.f32 %v2149, 120.0
        %v2162 = vmul.f32 %v2150, 120.0
        %v2163 = vmul.f32 %v2151, 120.0
        %v2164 = vmul.f32 %v2152, 120.0
        %v2165 = vsub.f32 %v2118, %v2153
        %v2166 = vsub.f32 %v2120, %v2154
        %v2167 = vsub.f32 %v2122, %v2155
        %v2168 = vsub.f32 %v2124, %v2156
        %v2169 = vsub.f32 %v2126, %v2157
        %v2170 = vsub.f32 %v2128, %v2158
        %v2171 = vsub.f32 %v2130, %v2159
        %v2172 = vsub.f32 %v2132, %v2160
        %v2173 = vsub.f32 %v2134, %v2161
        %v2174 = vsub.f32 %v2136, %v2162
        %v2175 = vsub.f32 %v2138, %v2163
        %v2176 = vsub.f32 %v2140, %v2164
        %v2177 = vmul.f32 %v2165, 0.125
        %v2178 = vmul.f32 %v2166, 0.125
        %v2179 = vmul.f32 %v2167, 0.125
        %v2180 = vmul.f32 %v2168, 0.125
        %v2181 = vmul.f32 %v2169, 0.125
        %v2182 = vmul.f32 %v2170, 0.125
        %v2183 = vmul.f32 %v2171, 0.125
        %v2184 = vmul.f32 %v2172, 0.125
        %v2185 = vmul.f32 %v2173, 0.125
        %v2186 = vmul.f32 %v2174, 0.125
        %v2187 = vmul.f32 %v2175, 0.125
        %v2188 = vmul.f32 %v2176, 0.125
        %v2189 = vadd.f32 %v2177, 1e-06
        %v2190 = vadd.f32 %v2178, 1e-06
        %v2191 = vadd.f32 %v2179, 1e-06
        %v2192 = vadd.f32 %v2180, 1e-06
        %v2193 = vadd.f32 %v2181, 1e-06
        %v2194 = vadd.f32 %v2182, 1e-06
        %v2195 = vadd.f32 %v2183, 1e-06
        %v2196 = vadd.f32 %v2184, 1e-06
        %v2197 = vadd.f32 %v2185, 1e-06
        %v2198 = vadd.f32 %v2186, 1e-06
        %v2199 = vadd.f32 %v2187, 1e-06
        %v2200 = vadd.f32 %v2188, 1e-06
        %v2201 = vrsqrt.pop %v2189
        %v2202 = vmul.f32 %v2201, %v2189
        %v2203 = vmul.f32 %v2202, %v2201
        %v2204 = vmul.f32 0.5, %v2203
        %v2205 = vsub.f32 1.5, %v2204
        %v2206 = vmul.f32 %v2201, %v2205
        %vm2207 = vweird.f32 %v2189
        %vm2208 = vweird.f32 %v2201
        %vm2209 = vmor %vm2207, %vm2208
        %v2210 = vsel %vm2209, %v2201, %v2206
        %v2211 = vrsqrt.pop %v2190
        %v2212 = vmul.f32 %v2211, %v2190
        %v2213 = vmul.f32 %v2212, %v2211
        %v2214 = vmul.f32 0.5, %v2213
        %v2215 = vsub.f32 1.5, %v2214
        %v2216 = vmul.f32 %v2211, %v2215
        %vm2217 = vweird.f32 %v2190
        %vm2218 = vweird.f32 %v2211
        %vm2219 = vmor %vm2217, %vm2218
        %v2220 = vsel %vm2219, %v2211, %v2216
        %v2221 = vrsqrt.pop %v2191
        %v2222 = vmul.f32 %v2221, %v2191
        %v2223 = vmul.f32 %v2222, %v2221
        %v2224 = vmul.f32 0.5, %v2223
        %v2225 = vsub.f32 1.5, %v2224
        %v2226 = vmul.f32 %v2221, %v2225
        %vm2227 = vweird.f32 %v2191
        %vm2228 = vweird.f32 %v2221
        %vm2229 = vmor %vm2227, %vm2228
        %v2230 = vsel %vm2229, %v2221, %v2226
        %v2231 = vrsqrt.pop %v2192
        %v2232 = vmul.f32 %v2231, %v2192
        %v2233 = vmul.f32 %v2232, %v2231
        %v2234 = vmul.f32 0.5, %v2233
        %v2235 = vsub.f32 1.5, %v2234
        %v2236 = vmul.f32 %v2231, %v2235
        %vm2237 = vweird.f32 %v2192
        %vm2238 = vweird.f32 %v2231
        %vm2239 = vmor %vm2237, %vm2238
        %v2240 = vsel %vm2239, %v2231, %v2236
        %v2241 = vrsqrt.pop %v2193
        %v2242 = vmul.f32 %v2241, %v2193
        %v2243 = vmul.f32 %v2242, %v2241
        %v2244 = vmul.f32 0.5, %v2243
        %v2245 = vsub.f32 1.5, %v2244
        %v2246 = vmul.f32 %v2241, %v2245
        %vm2247 = vweird.f32 %v2193
        %vm2248 = vweird.f32 %v2241
        %vm2249 = vmor %vm2247, %vm2248
        %v2250 = vsel %vm2249, %v2241, %v2246
        %v2251 = vrsqrt.pop %v2194
        %v2252 = vmul.f32 %v2251, %v2194
        %v2253 = vmul.f32 %v2252, %v2251
        %v2254 = vmul.f32 0.5, %v2253
        %v2255 = vsub.f32 1.5, %v2254
        %v2256 = vmul.f32 %v2251, %v2255
        %vm2257 = vweird.f32 %v2194
        %vm2258 = vweird.f32 %v2251
        %vm2259 = vmor %vm2257, %vm2258
        %v2260 = vsel %vm2259, %v2251, %v2256
        %v2261 = vrsqrt.pop %v2195
        %v2262 = vmul.f32 %v2261, %v2195
        %v2263 = vmul.f32 %v2262, %v2261
        %v2264 = vmul.f32 0.5, %v2263
        %v2265 = vsub.f32 1.5, %v2264
        %v2266 = vmul.f32 %v2261, %v2265
        %vm2267 = vweird.f32 %v2195
        %vm2268 = vweird.f32 %v2261
        %vm2269 = vmor %vm2267, %vm2268
        %v2270 = vsel %vm2269, %v2261, %v2266
        %v2271 = vrsqrt.pop %v2196
        %v2272 = vmul.f32 %v2271, %v2196
        %v2273 = vmul.f32 %v2272, %v2271
        %v2274 = vmul.f32 0.5, %v2273
        %v2275 = vsub.f32 1.5, %v2274
        %v2276 = vmul.f32 %v2271, %v2275
        %vm2277 = vweird.f32 %v2196
        %vm2278 = vweird.f32 %v2271
        %vm2279 = vmor %vm2277, %vm2278
        %v2280 = vsel %vm2279, %v2271, %v2276
        %v2281 = vrsqrt.pop %v2197
        %v2282 = vmul.f32 %v2281, %v2197
        %v2283 = vmul.f32 %v2282, %v2281
        %v2284 = vmul.f32 0.5, %v2283
        %v2285 = vsub.f32 1.5, %v2284
        %v2286 = vmul.f32 %v2281, %v2285
        %vm2287 = vweird.f32 %v2197
        %vm2288 = vweird.f32 %v2281
        %vm2289 = vmor %vm2287, %vm2288
        %v2290 = vsel %vm2289, %v2281, %v2286
        %v2291 = vrsqrt.pop %v2198
        %v2292 = vmul.f32 %v2291, %v2198
        %v2293 = vmul.f32 %v2292, %v2291
        %v2294 = vmul.f32 0.5, %v2293
        %v2295 = vsub.f32 1.5, %v2294
        %v2296 = vmul.f32 %v2291, %v2295
        %vm2297 = vweird.f32 %v2198
        %vm2298 = vweird.f32 %v2291
        %vm2299 = vmor %vm2297, %vm2298
        %v2300 = vsel %vm2299, %v2291, %v2296
        %v2301 = vrsqrt.pop %v2199
        %v2302 = vmul.f32 %v2301, %v2199
        %v2303 = vmul.f32 %v2302, %v2301
        %v2304 = vmul.f32 0.5, %v2303
        %v2305 = vsub.f32 1.5, %v2304
        %v2306 = vmul.f32 %v2301, %v2305
        %vm2307 = vweird.f32 %v2199
        %vm2308 = vweird.f32 %v2301
        %vm2309 = vmor %vm2307, %vm2308
        %v2310 = vsel %vm2309, %v2301, %v2306
        %v2311 = vrsqrt.pop %v2200
        %v2312 = vmul.f32 %v2311, %v2200
        %v2313 = vmul.f32 %v2312, %v2311
        %v2314 = vmul.f32 0.5, %v2313
        %v2315 = vsub.f32 1.5, %v2314
        %v2316 = vmul.f32 %v2311, %v2315
        %vm2317 = vweird.f32 %v2200
        %vm2318 = vweird.f32 %v2311
        %vm2319 = vmor %vm2317, %vm2318
        %v2320 = vsel %vm2319, %v2311, %v2316
        %v2321 = vmul.f32 %v2093, %v2210
        %v2322 = vmul.f32 %v2094, %v2220
        %v2323 = vmul.f32 %v2095, %v2230
        %v2324 = vmul.f32 %v2096, %v2240
        %v2325 = vmul.f32 %v2097, %v2250
        %v2326 = vmul.f32 %v2098, %v2260
        %v2327 = vmul.f32 %v2099, %v2270
        %v2328 = vmul.f32 %v2100, %v2280
        %v2329 = vmul.f32 %v2101, %v2290
        %v2330 = vmul.f32 %v2102, %v2300
        %v2331 = vmul.f32 %v2103, %v2310
        %v2332 = vmul.f32 %v2104, %v2320
        %v2333 = vld [vmem:[#allocation11] sm:$0xff]
        %v2334 = vld [vmem:[#allocation11 + $0x8] sm:$0xff]
        %v2335 = vld [vmem:[#allocation11 + $0x10] sm:$0xff]
        %v2336 = vld [vmem:[#allocation11 + $0x18] sm:$0xff]
        %v2337 = vld [vmem:[#allocation11 + $0x20] sm:$0xff]
        %v2338 = vld [vmem:[#allocation11 + $0x28] sm:$0xff]
        %v2339 = vld [vmem:[#allocation11 + $0x30] sm:$0xff]
        %v2340 = vld [vmem:[#allocation11 + $0x38] sm:$0xff]
        %v2341 = vld [vmem:[#allocation11 + $0x40] sm:$0xff]
        %v2342 = vld [vmem:[#allocation11 + $0x48] sm:$0xff]
        %v2343 = vld [vmem:[#allocation11 + $0x50] sm:$0xff]
        %v2344 = vld [vmem:[#allocation11 + $0x58] sm:$0xff]
        %v2345 = vld [vmem:[#allocation11 + $0x60] sm:$0xff]
        %v2346 = vld [vmem:[#allocation11 + $0x68] sm:$0xff]
        %v2347 = vld [vmem:[#allocation11 + $0x70] sm:$0xff]
        %v2348 = vld [vmem:[#allocation11 + $0x78] sm:$0xff]
        %v2349 = vld [vmem:[%s6] sm:$0x1]
        %v2351 = vperm.slane %v2349, 0
        %2353 = vmatpush.msra.mxu0 %v2348
        %2354 = vmatpush.msra.mxu0 %v2347
        %2355 = vmatpush.msra.mxu0 %v2346
        %2356 = vmatpush.msra.mxu0 %v2345
        %2357 = vmatpush.msra.mxu0 %v2344
        %2358 = vmatpush.msra.mxu0 %v2343
        %2359 = vmatpush.msra.mxu0 %v2342
        %2360 = vmatpush.msra.mxu0 %v2341
        %2361 = vmatpush.msra.mxu0 %v2340
        %2362 = vmatpush.msra.mxu0 %v2339
        %2363 = vmatpush.msra.mxu0 %v2338
        %2364 = vmatpush.msra.mxu0 %v2337
        %2365 = vmatpush.msra.mxu0 %v2336
        %2366 = vmatpush.msra.mxu0 %v2335
        %2367 = vmatpush.msra.mxu0 %v2334
        %2368 = vmatpush.msra.mxu0 %v2333
        %2369 = vmatmul.f32.gmra.mxu0 %v2321
        %v2370 = vpop.f32.mrf.mxu0
        %v2371 = vadd.f32 %v2351, %v2370
        %2372 = vmatmul.f32.gmra.mxu0 %v2322
        %v2373 = vpop.f32.mrf.mxu0
        %v2374 = vadd.f32 %v2351, %v2373
        %2375 = vmatmul.f32.gmra.mxu0 %v2323
        %v2376 = vpop.f32.mrf.mxu0
        %v2377 = vadd.f32 %v2351, %v2376
        %2378 = vmatmul.f32.gmra.mxu0 %v2324
        %v2379 = vpop.f32.mrf.mxu0
        %v2380 = vadd.f32 %v2351, %v2379
        %2381 = vmatmul.f32.gmra.mxu0 %v2325
        %v2382 = vpop.f32.mrf.mxu0
        %v2383 = vadd.f32 %v2351, %v2382
        %2384 = vmatmul.f32.gmra.mxu0 %v2326
        %v2385 = vpop.f32.mrf.mxu0
        %v2386 = vadd.f32 %v2351, %v2385
        %2387 = vmatmul.f32.gmra.mxu0 %v2327
        %v2388 = vpop.f32.mrf.mxu0
        %v2389 = vadd.f32 %v2351, %v2388
        %2390 = vmatmul.f32.gmra.mxu0 %v2328
        %v2391 = vpop.f32.mrf.mxu0
        %v2392 = vadd.f32 %v2351, %v2391
        %2393 = vmatmul.f32.gmra.mxu0 %v2329
        %v2394 = vpop.f32.mrf.mxu0
        %v2395 = vadd.f32 %v2351, %v2394
        %2396 = vmatmul.f32.gmra.mxu0 %v2330
        %v2397 = vpop.f32.mrf.mxu0
        %v2398 = vadd.f32 %v2351, %v2397
        %2399 = vmatmul.f32.gmra.mxu0 %v2331
        %v2400 = vpop.f32.mrf.mxu0
        %v2401 = vadd.f32 %v2351, %v2400
        %2402 = vmatmul.f32.gmra.mxu0 %v2332
        %v2403 = vpop.f32.mrf.mxu0
        %v2404 = vadd.f32 %v2351, %v2403
        %2405 = vdwg.mxu0
        %v2406 = vmul.f32 %v2371, %v2371
        %v2407 = vmul.f32 %v2374, %v2374
        %v2408 = vmul.f32 %v2377, %v2377
        %v2409 = vmul.f32 %v2380, %v2380
        %v2410 = vmul.f32 %v2383, %v2383
        %v2411 = vmul.f32 %v2386, %v2386
        %v2412 = vmul.f32 %v2389, %v2389
        %v2413 = vmul.f32 %v2392, %v2392
        %v2414 = vmul.f32 %v2395, %v2395
        %v2415 = vmul.f32 %v2398, %v2398
        %v2416 = vmul.f32 %v2401, %v2401
        %v2417 = vmul.f32 %v2404, %v2404
        %v2418 = vmul.f32 %v2371, %v2406
        %v2419 = vmul.f32 %v2374, %v2407
        %v2420 = vmul.f32 %v2377, %v2408
        %v2421 = vmul.f32 %v2380, %v2409
        %v2422 = vmul.f32 %v2383, %v2410
        %v2423 = vmul.f32 %v2386, %v2411
        %v2424 = vmul.f32 %v2389, %v2412
        %v2425 = vmul.f32 %v2392, %v2413
        %v2426 = vmul.f32 %v2395, %v2414
        %v2427 = vmul.f32 %v2398, %v2415
        %v2428 = vmul.f32 %v2401, %v2416
        %v2429 = vmul.f32 %v2404, %v2417
        %v2430 = vmul.f32 %v2418, 0.044715
        %v2431 = vmul.f32 %v2419, 0.044715
        %v2432 = vmul.f32 %v2420, 0.044715
        %v2433 = vmul.f32 %v2421, 0.044715
        %v2434 = vmul.f32 %v2422, 0.044715
        %v2435 = vmul.f32 %v2423, 0.044715
        %v2436 = vmul.f32 %v2424, 0.044715
        %v2437 = vmul.f32 %v2425, 0.044715
        %v2438 = vmul.f32 %v2426, 0.044715
        %v2439 = vmul.f32 %v2427, 0.044715
        %v2440 = vmul.f32 %v2428, 0.044715
        %v2441 = vmul.f32 %v2429, 0.044715
        %v2442 = vadd.f32 %v2371, %v2430
        %v2443 = vadd.f32 %v2374, %v2431
        %v2444 = vadd.f32 %v2377, %v2432
        %v2445 = vadd.f32 %v2380, %v2433
        %v2446 = vadd.f32 %v2383, %v2434
        %v2447 = vadd.f32 %v2386, %v2435
        %v2448 = vadd.f32 %v2389, %v2436
        %v2449 = vadd.f32 %v2392, %v2437
        %v2450 = vadd.f32 %v2395, %v2438
        %v2451 = vadd.f32 %v2398, %v2439
        %v2452 = vadd.f32 %v2401, %v2440
        %v2453 = vadd.f32 %v2404, %v2441
        %v2454 = vmul.f32 %v2442, 0.7978846
        %v2455 = vmul.f32 %v2443, 0.7978846
        %v2456 = vmul.f32 %v2444, 0.7978846
        %v2457 = vmul.f32 %v2445, 0.7978846
        %v2458 = vmul.f32 %v2446, 0.7978846
        %v2459 = vmul.f32 %v2447, 0.7978846
        %v2460 = vmul.f32 %v2448, 0.7978846
        %v2461 = vmul.f32 %v2449, 0.7978846
        %v2462 = vmul.f32 %v2450, 0.7978846
        %v2463 = vmul.f32 %v2451, 0.7978846
        %v2464 = vmul.f32 %v2452, 0.7978846
        %v2465 = vmul.f32 %v2453, 0.7978846
        %v2466 = vtanh.pop %v2454
        %v2467 = vtanh.pop %v2455
        %v2468 = vtanh.pop %v2456
        %v2469 = vtanh.pop %v2457
        %v2470 = vtanh.pop %v2458
        %v2471 = vtanh.pop %v2459
        %v2472 = vtanh.pop %v2460
        %v2473 = vtanh.pop %v2461
        %v2474 = vtanh.pop %v2462
        %v2475 = vtanh.pop %v2463
        %v2476 = vtanh.pop %v2464
        %v2477 = vtanh.pop %v2465
        %v2478 = vadd.f32 %v2466, 1.0
        %v2479 = vadd.f32 %v2467, 1.0
        %v2480 = vadd.f32 %v2468, 1.0
        %v2481 = vadd.f32 %v2469, 1.0
        %v2482 = vadd.f32 %v2470, 1.0
        %v2483 = vadd.f32 %v2471, 1.0
        %v2484 = vadd.f32 %v2472, 1.0
        %v2485 = vadd.f32 %v2473, 1.0
        %v2486 = vadd.f32 %v2474, 1.0
        %v2487 = vadd.f32 %v2475, 1.0
        %v2488 = vadd.f32 %v2476, 1.0
        %v2489 = vadd.f32 %v2477, 1.0
        %v2490 = vmul.f32 %v2478, 0.5
        %v2491 = vmul.f32 %v2479, 0.5
        %v2492 = vmul.f32 %v2480, 0.5
        %v2493 = vmul.f32 %v2481, 0.5
        %v2494 = vmul.f32 %v2482, 0.5
        %v2495 = vmul.f32 %v2483, 0.5
        %v2496 = vmul.f32 %v2484, 0.5
        %v2497 = vmul.f32 %v2485, 0.5
        %v2498 = vmul.f32 %v2486, 0.5
        %v2499 = vmul.f32 %v2487, 0.5
        %v2500 = vmul.f32 %v2488, 0.5
        %v2501 = vmul.f32 %v2489, 0.5
        %v2502 = vmul.f32 %v2371, %v2490
        %v2503 = vmul.f32 %v2374, %v2491
        %v2504 = vmul.f32 %v2377, %v2492
        %v2505 = vmul.f32 %v2380, %v2493
        %v2506 = vmul.f32 %v2383, %v2494
        %v2507 = vmul.f32 %v2386, %v2495
        %v2508 = vmul.f32 %v2389, %v2496
        %v2509 = vmul.f32 %v2392, %v2497
        %v2510 = vmul.f32 %v2395, %v2498
        %v2511 = vmul.f32 %v2398, %v2499
        %v2512 = vmul.f32 %v2401, %v2500
        %v2513 = vmul.f32 %v2404, %v2501
        %v2514 = vld [vmem:[#allocation12] sm:$0xff]
        %v2515 = vld [vmem:[#allocation12 + $0x8] sm:$0xff]
        %v2516 = vld [vmem:[#allocation12 + $0x10] sm:$0xff]
        %v2517 = vld [vmem:[#allocation12 + $0x18] sm:$0xff]
        %v2518 = vld [vmem:[#allocation12 + $0x20] sm:$0xff]
        %v2519 = vld [vmem:[#allocation12 + $0x28] sm:$0xff]
        %v2520 = vld [vmem:[#allocation12 + $0x30] sm:$0xff]
        %v2521 = vld [vmem:[#allocation12 + $0x38] sm:$0xff]
        %v2522 = vld [vmem:[#allocation12 + $0x40] sm:$0xff]
        %v2523 = vld [vmem:[#allocation12 + $0x48] sm:$0xff]
        %v2524 = vld [vmem:[#allocation12 + $0x50] sm:$0xff]
        %v2525 = vld [vmem:[#allocation12 + $0x58] sm:$0xff]
        %v2526 = vld [vmem:[#allocation12 + $0x60] sm:$0xff]
        %v2527 = vld [vmem:[#allocation12 + $0x68] sm:$0xff]
        %v2528 = vld [vmem:[#allocation12 + $0x70] sm:$0xff]
        %v2529 = vld [vmem:[#allocation12 + $0x78] sm:$0xff]
        %v2530 = vld [vmem:[%s8] sm:$0x1]
        %v2532 = vperm.slane %v2530, 0
        %2534 = vmatpush.msra.mxu0 %v2529
        %2535 = vmatpush.msra.mxu0 %v2528
        %2536 = vmatpush.msra.mxu0 %v2527
        %2537 = vmatpush.msra.mxu0 %v2526
        %2538 = vmatpush.msra.mxu0 %v2525
        %2539 = vmatpush.msra.mxu0 %v2524
        %2540 = vmatpush.msra.mxu0 %v2523
        %2541 = vmatpush.msra.mxu0 %v2522
        %2542 = vmatpush.msra.mxu0 %v2521
        %2543 = vmatpush.msra.mxu0 %v2520
        %2544 = vmatpush.msra.mxu0 %v2519
        %2545 = vmatpush.msra.mxu0 %v2518
        %2546 = vmatpush.msra.mxu0 %v2517
        %2547 = vmatpush.msra.mxu0 %v2516
        %2548 = vmatpush.msra.mxu0 %v2515
        %2549 = vmatpush.msra.mxu0 %v2514
        %2550 = vmatmul.f32.gmra.mxu0 %v2502
        %v2551 = vpop.f32.mrf.mxu0
        %v2552 = vadd.f32 %v2532, %v2551
        %2553 = vmatmul.f32.gmra.mxu0 %v2503
        %v2554 = vpop.f32.mrf.mxu0
        %v2555 = vadd.f32 %v2532, %v2554
        %2556 = vmatmul.f32.gmra.mxu0 %v2504
        %v2557 = vpop.f32.mrf.mxu0
        %v2558 = vadd.f32 %v2532, %v2557
        %2559 = vmatmul.f32.gmra.mxu0 %v2505
        %v2560 = vpop.f32.mrf.mxu0
        %v2561 = vadd.f32 %v2532, %v2560
        %2562 = vmatmul.f32.gmra.mxu0 %v2506
        %v2563 = vpop.f32.mrf.mxu0
        %v2564 = vadd.f32 %v2532, %v2563
        %2565 = vmatmul.f32.gmra.mxu0 %v2507
        %v2566 = vpop.f32.mrf.mxu0
        %v2567 = vadd.f32 %v2532, %v2566
        %2568 = vmatmul.f32.gmra.mxu0 %v2508
        %v2569 = vpop.f32.mrf.mxu0
        %v2570 = vadd.f32 %v2532, %v2569
        %2571 = vmatmul.f32.gmra.mxu0 %v2509
        %v2572 = vpop.f32.mrf.mxu0
        %v2573 = vadd.f32 %v2532, %v2572
        %2574 = vmatmul.f32.gmra.mxu0 %v2510
        %v2575 = vpop.f32.mrf.mxu0
        %v2576 = vadd.f32 %v2532, %v2575
        %2577 = vmatmul.f32.gmra.mxu0 %v2511
        %v2578 = vpop.f32.mrf.mxu0
        %v2579 = vadd.f32 %v2532, %v2578
        %2580 = vmatmul.f32.gmra.mxu0 %v2512
        %v2581 = vpop.f32.mrf.mxu0
        %v2582 = vadd.f32 %v2532, %v2581
        %2583 = vmatmul.f32.gmra.mxu0 %v2513
        %v2584 = vpop.f32.mrf.mxu0
        %v2585 = vadd.f32 %v2532, %v2584
        %2586 = vdwg.mxu0
        %v2587 = vld [vmem:[%s456] sm:$0xff]
        %v2588 = vld [vmem:[%s456 + $0x8] sm:$0xff]
        %v2589 = vld [vmem:[%s456 + $0x10] sm:$0xff]
        %v2590 = vld [vmem:[%s456 + $0x18] sm:$0xff]
        %v2591 = vld [vmem:[%s456 + $0x20] sm:$0xff]
        %v2592 = vld [vmem:[%s456 + $0x28] sm:$0xff]
        %v2593 = vld [vmem:[%s456 + $0x30] sm:$0xff]
        %v2594 = vld [vmem:[%s456 + $0x38] sm:$0xff]
        %v2595 = vld [vmem:[%s456 + $0x40] sm:$0xff]
        %v2596 = vld [vmem:[%s456 + $0x48] sm:$0xff]
        %v2597 = vld [vmem:[%s456 + $0x50] sm:$0xff]
        %v2598 = vld [vmem:[%s456 + $0x58] sm:$0xff]
        %v2599 = vadd.f32 %v2587, %v2552
        %v2600 = vadd.f32 %v2588, %v2555
        %v2601 = vadd.f32 %v2589, %v2558
        %v2602 = vadd.f32 %v2590, %v2561
        %v2603 = vadd.f32 %v2591, %v2564
        %v2604 = vadd.f32 %v2592, %v2567
        %v2605 = vadd.f32 %v2593, %v2570
        %v2606 = vadd.f32 %v2594, %v2573
        %v2607 = vadd.f32 %v2595, %v2576
        %v2608 = vadd.f32 %v2596, %v2579
        %v2609 = vadd.f32 %v2597, %v2582
        %v2610 = vadd.f32 %v2598, %v2585
        %2611 = vst [vmem:[%s536] sm:$0xff] %v2599
        %2612 = vst [vmem:[%s536 + $0x8] sm:$0xff] %v2600
        %2613 = vst [vmem:[%s536 + $0x10] sm:$0xff] %v2601
        %2614 = vst [vmem:[%s536 + $0x18] sm:$0xff] %v2602
        %2615 = vst [vmem:[%s536 + $0x20] sm:$0xff] %v2603
        %2616 = vst [vmem:[%s536 + $0x28] sm:$0xff] %v2604
        %2617 = vst [vmem:[%s536 + $0x30] sm:$0xff] %v2605
        %2618 = vst [vmem:[%s536 + $0x38] sm:$0xff] %v2606
        %2619 = vst [vmem:[%s536 + $0x40] sm:$0xff] %v2607
        %2620 = vst [vmem:[%s536 + $0x48] sm:$0xff] %v2608
        %2621 = vst [vmem:[%s536 + $0x50] sm:$0xff] %v2609
        %2622 = vst [vmem:[%s536 + $0x58] sm:$0xff] %v2610
        %s2623 = sand.u32 %s279, 1
        %s2624 = scalar_lea.sflag [#allocation5], %s2623
        %s2625 = sand.u32 %s279, 1
        %s2626 = smul.addr %s2625, 96
        %s2627 = scalar_lea.vmem [#allocation14], %s2626
        // Predicated region
        $region97: #{tpu_custom_call.1} parent=55 // pred_check
          %p2628 = pneg %p289
        $region98: #{tpu_custom_call.1} parent=55 // pred_check_branch
          %2630 = sbr.rel (%p2628) target = $region100
        $region99: #{tpu_custom_call.1} parent=55 // pred_region
          %s2631 = smul.u32 6, %s36
          %2633 = vsyncadd %s2624, 0
          %s2634 = smul.addr %s2631, 2
          %s2635 = smul.addr %s35, 36
          %s2636 = sadd.s32 %s2634, %s2635
          %s2637 = smul.addr %s2636, 8
          %s2638 = scalar_lea.hbm %s9, %s2637
          %s2639 = sshll.u32 %s2627, 4
          %s2640 = int_to_ptr.vmem [resolvable:$true] %s2639
          %s2641 = sshll.u32 %s2638, 4
          %s2642 = int_to_ptr.hbm [resolvable:$true] %s2641
          %2647 = dma.vmem_to_hbm [thread:$0]  %s2640, 1536, %s2642, %s2624, 128, 128, 8
        $region100: #{tpu_custom_call.1} parent=55 // pred_fallthru
          _
      $region56: #{tpu_custom_call.1} parent=5 // pred_fallthru
        _
      %p2648 = scmp.le.s32.totalorder 2, %s26
      // Predicated region
      $region101: #{tpu_custom_call.1} parent=5 // pred_check
        %p2649 = pneg %p2648
      $region102: #{tpu_custom_call.1} parent=5 // pred_check_branch
        %2651 = sbr.rel (%p2649) target = $region104
      $region103: #{tpu_custom_call.1} parent=5 // pred_region
        %s2652 = ssub.s32 %s26, 2
        // Predicated region
        $region105: #{tpu_custom_call.1} parent=103 // pred_check
          %p2653 = pneg %p295
        $region106: #{tpu_custom_call.1} parent=103 // pred_check_branch
          %2655 = sbr.rel (%p2653) target = $region108
        $region107: #{tpu_custom_call.1} parent=103 // pred_region
          %s2656 = sand.u32 %s280, 1
          %s2657 = scalar_lea.sflag [#allocation5], %s2656
          %s2658 = sand.u32 %s280, 1
          %s2659 = smul.addr %s2658, 96
          %s2660 = scalar_lea.vmem [#allocation14], %s2659
          %2662 = dma.done %s2657, 1536
        $region108: #{tpu_custom_call.1} parent=103 // pred_fallthru
          _
      $region104: #{tpu_custom_call.1} parent=5 // pred_fallthru
        _
    $region6: #{tpu_custom_call.1} parent=1 // loop_footer
      %s30 = sadd.s32 1, %s26
    $region7: #{tpu_custom_call.1} parent=1 // loop_footer_branch
      %25 = sbr.rel target = $region3
    $region8: #{tpu_custom_call.1} parent=1 // loop_exit
      _
    %2663 = vsyncpa [#allocation4], 1
    %s2664 = scalar_lea.sflag [#allocation4], 1
    %2665 = vsyncpa %s2664, 1
    %2666 = vsyncpa [#allocation7], 1
    %s2667 = scalar_lea.sflag [#allocation7], 1
    %2668 = vsyncpa %s2667, 1
    %2669 = vsyncpa [#allocation10], 1
    %2670 = vsyncpa [#allocation13], 1
    %2671 = vsyncpa [#allocation5], 1
    %s2672 = scalar_lea.sflag [#allocation5], 1
    %2673 = vsyncpa %s2672, 1

</llo_original>
